<compile_context>
chip_gen: v7x
topology: tpu7x:2x2x1
jax: 0.10.0
libtpu: 0.0.40
codegen_flags: <defaults>
</compile_context>

<pallas_src>
import functools

import jax
import jax.numpy as jnp
from jax.experimental import pallas as pl
from jax.experimental.pallas import tpu as pltpu

F32 = jnp.float32
BF16 = jnp.bfloat16

CONV_DIMS = [(3, 64), (64, 64), (64, 128), (128, 256), (256, 512), (512, 1024)]
OUT_DIM = 1024 + 512 + 256 + 128          # 1920, cat order [x1024, x512, x256, x128]
PAD_K = 8                                 # first layer K padded 3 -> 8 (aligned DMA)
H6_CHUNK = 256                            # column chunk of the final 1024-wide layer


# --------------------------------------------------------------------------
# Kernel
# --------------------------------------------------------------------------
def convlayer_kernel(pts_ref,
                     w1, b1, w2, b2, w3, b3, w4, b4, w5, b5, w6, b6,
                     out_ref, *, block_b, block_n, accumulate, out_is_3d):
    def lin(h_bf16, w_ref, b_ref):
        """bf16 x bf16 MXU matmul, f32 accumulate, + bias, ReLU (returns f32)."""
        y = jnp.dot(h_bf16, w_ref[...], preferred_element_type=F32) + b_ref[...]
        return jnp.maximum(y, 0.0)

    def bmax(h_f32):
        """Per-batch max over the point axis (kept in f32)."""
        if block_b == 1:
            return jnp.max(h_f32, axis=0, keepdims=True)                    # (1, C)
        return jnp.max(h_f32.reshape(block_b, block_n, h_f32.shape[-1]), axis=1)

    x = pts_ref[...].astype(BF16)            # (rows, 8); cols 3..7 are zero padding
    h1 = lin(x, w1, b1)                      # (M,   64) f32
    h2 = lin(h1.astype(BF16), w2, b2)        # (M,   64) f32
    h3 = lin(h2.astype(BF16), w3, b3)        # (M,  128) f32  (x_128)
    m3 = bmax(h3)
    h4 = lin(h3.astype(BF16), w4, b4)        # (M,  256) f32  (x_256)
    m4 = bmax(h4)
    h5 = lin(h4.astype(BF16), w5, b5)        # (M,  512) f32  (x_512)
    m5 = bmax(h5)
    h5b = h5.astype(BF16)

    # Final layer (512 -> 1024) column-chunked: h6 is never materialized in full.
    pieces = []
    for c in range(0, 1024, H6_CHUNK):
        y = jnp.dot(h5b, w6[:, c:c + H6_CHUNK],
                    preferred_element_type=F32) + b6[:, c:c + H6_CHUNK]
        pieces.append((c, bmax(jnp.maximum(y, 0.0))))
    pieces += [(1024, m5), (1536, m4), (1792, m3)]   # all offsets 128-aligned

    if out_is_3d:
        def rd(c0, c1):
            return out_ref[:, 0, c0:c1]

        def wr(c0, c1, v):
            out_ref[:, 0, c0:c1] = v
    else:
        def rd(c0, c1):
            return out_ref[:, c0:c1]

        def wr(c0, c1, v):
            out_ref[:, c0:c1] = v

    if not accumulate:
        for c0, v in pieces:
            wr(c0, c0 + v.shape[-1], v)
    else:
        # Output block is revisited across the N-tile ("arbitrary") axis:
        # write on the first tile, max-accumulate in place afterwards.
        nj = pl.program_id(1)

        @pl.when(nj == 0)
        def _init():
            for c0, v in pieces:
                wr(c0, c0 + v.shape[-1], v)

        @pl.when(nj > 0)
        def _acc():
            for c0, v in pieces:
                wr(c0, c0 + v.shape[-1], jnp.maximum(rd(c0, c0 + v.shape[-1]), v))


# --------------------------------------------------------------------------
# Wrapper
# --------------------------------------------------------------------------
def _chip_budget():
    """(row_cap, vmem_limit_bytes) chosen from the chip's VMEM capacity."""
    try:
        info = pltpu.get_tpu_info()
        vmem = int(getattr(info, "vmem_capacity_bytes", 0) or 0)
    except Exception:
        vmem = 0
    if vmem >= 100 * 1024 * 1024:             # v5e / v6e: 128 MiB VMEM
        return 4096, 64 * 1024 * 1024
    return 2048, 32 * 1024 * 1024             # v7x (64 MiB) or unknown: conservative


def _pick_blocks(B, N, row_cap):
    """Choose (block_b, block_n) s.t. rows = block_b*block_n <= row_cap, rows is
    sublane-aligned, and the batch ("parallel") axis has >= 2 blocks when B >= 2."""
    if N > row_cap:
        # Tile the point axis; per-batch max is accumulated across N tiles.
        for d in (4096, 2048, 1024, 512, 256, 128, 64, 32, 16, 8):
            if d <= row_cap and N % d == 0:
                return 1, d
        return (1 if B == 1 else B), N        # ragged fallback (single big tile)
    divisors = [d for d in range(1, B + 1) if B % d == 0]
    feasible = [d for d in divisors if d * N <= row_cap and (d * N) % 8 == 0]
    if not feasible:
        return B, N                           # rows == B*N -> full-array block
    if B >= 2:
        par = [d for d in feasible if B // d >= 2]   # keep >= 2 parallel blocks
        if par:
            return max(par), N
    return max(feasible), N


def prepare_params(layer_params):
    """One-time prep: pad W1's K dim 3->8, cast weights to bf16, biases to (1,cout) f32."""
    prepped = []
    for i, (W, b) in enumerate(layer_params):
        cin, cout = W.shape
        if i == 0 and cin == 3:
            W = jnp.pad(W, ((0, PAD_K - cin), (0, 0)))
        prepped.append((W.astype(BF16), b.reshape(1, cout).astype(F32)))
    return prepped


def convlayer(points, layer_params, *, max_rows=None):
    """points: (B, N, 3) f32; layer_params: 6 x (W, b) with BN folded (prepared or raw)."""
    B, N, C = points.shape
    assert C == 3
    if layer_params[0][0].shape[0] == 3:      # not yet prepared (raw params)
        layer_params = prepare_params(layer_params)

    row_cap, vmem_limit = _chip_budget()
    if max_rows is not None:
        row_cap = min(row_cap, max_rows)
    block_b, block_n = _pick_blocks(B, N, row_cap)
    assert B % block_b == 0 and N % block_n == 0
    n_tiles = N // block_n
    rows = block_b * block_n
    assert rows == B * N or rows % 8 == 0
    accumulate = n_tiles > 1
    # Sublane-dense 2-D output whenever the tiling rule allows it.
    out_is_3d = not (block_b % 8 == 0 or block_b == B)

    flat = jnp.pad(points.reshape(B * N, 3), ((0, 0), (0, PAD_K - 3)))

    in_specs = [pl.BlockSpec((rows, PAD_K), lambda bi, nj: (bi * n_tiles + nj, 0))]
    args = [flat]
    for (W, bias) in layer_params:
        cin, cout = W.shape
        in_specs.append(pl.BlockSpec((cin, cout), lambda bi, nj: (0, 0)))
        in_specs.append(pl.BlockSpec((1, cout), lambda bi, nj: (0, 0)))
        args.append(W)
        args.append(bias)

    if out_is_3d:
        out_shape = jax.ShapeDtypeStruct((B, 1, OUT_DIM), F32)
        out_spec = pl.BlockSpec((block_b, 1, OUT_DIM), lambda bi, nj: (bi, 0, 0))
    else:
        out_shape = jax.ShapeDtypeStruct((B, OUT_DIM), F32)
        out_spec = pl.BlockSpec((block_b, OUT_DIM), lambda bi, nj: (bi, 0))

    total_mac = sum(ci * co for ci, co in CONV_DIMS)
    weight_bytes = sum((PAD_K if ci == 3 else ci) * co * 2 + co * 4
                       for ci, co in CONV_DIMS)
    cost = pl.CostEstimate(
        flops=2 * B * N * total_mac,
        transcendentals=0,
        bytes_accessed=int(B * N * PAD_K * 4 + B * OUT_DIM * 4
                           + weight_bytes * (B // block_b) * n_tiles))

    out = pl.pallas_call(
        functools.partial(convlayer_kernel, block_b=block_b, block_n=block_n,
                          accumulate=accumulate, out_is_3d=out_is_3d),
        out_shape=out_shape,
        grid=(B // block_b, n_tiles),
        in_specs=in_specs,
        out_specs=out_spec,
        compiler_params=pltpu.CompilerParams(
            dimension_semantics=("parallel", "arbitrary"),
            vmem_limit_bytes=vmem_limit),
        cost_estimate=cost,
    )(*args)
    return out.reshape(B, OUT_DIM)


# --------------------------------------------------------------------------
# Deterministic parameters (BN folded, inference mode) + pure-JAX reference
# --------------------------------------------------------------------------
def _randn(key, shape, scale):
    return scale * jax.random.normal(key, shape, dtype=F32)


def _fold_bn(W, b, key, cout, eps=1e-5):
    kg, kb, km, kv = jax.random.split(key, 4)
    gamma = 1.0 + _randn(kg, (cout,), 0.1)
    beta = _randn(kb, (cout,), 0.1)
    mean = _randn(km, (cout,), 0.1)
    var = 1.0 + jnp.abs(_randn(kv, (cout,), 0.1))
    s = gamma / jnp.sqrt(var + eps)
    return W * s[None, :], (b - mean) * s + beta


def init_convlayer_params(key):
    params = []
    for cin, cout in CONV_DIMS:
        key, kw, kb, kbn = jax.random.split(key, 4)
        W = _randn(kw, (cin, cout), 0.1)
        b = _randn(kb, (cout,), 0.05)
        params.append(_fold_bn(W, b, kbn, cout))
    return params


def convlayer_ref(points, layer_params):
    """Pure-JAX reference with the same bf16 weight / activation casts as the kernel."""
    h = points
    feats = []
    for W, b in layer_params:
        y = jnp.dot(h.astype(BF16), W.astype(BF16),
                    preferred_element_type=F32) + b[None, None, :]
        y = jnp.maximum(y, 0.0)          # f32, used for the per-layer max
        feats.append(y)
        h = y.astype(BF16)               # bf16 residency, matching the kernel
    m = lambda t: jnp.max(t, axis=1)
    # cat([x1024, x512, x256, x128], dim=1)
    return jnp.concatenate([m(feats[5]), m(feats[4]), m(feats[3]), m(feats[2])], axis=1)


# --------------------------------------------------------------------------
if __name__ == "__main__":
    key = jax.random.PRNGKey(0)
    kp, kx = jax.random.split(key)

    params = init_convlayer_params(kp)
    prepped = prepare_params(params)                 # hoisted one-time param prep
    conv = jax.jit(convlayer, static_argnames=("max_rows",))

    # (B, point_scales, max_rows): exercise the three tiling paths.
    configs = [
        (2, 128, None),    # batch split across the "parallel" axis (both TCs busy)
        (16, 256, 2048),   # sublane-dense 2-D output path (block_b = 8), grid (2, 1)
        (1, 1024, 256),    # forced N-tiling: in-place max accumulator over 4 tiles
    ]
    for i, (B, point_scales, max_rows) in enumerate(configs):
        kx, kk = jax.random.split(kx)
        x = jax.random.normal(kk, (B, point_scales, 3), dtype=F32)

        out = conv(x, prepped, max_rows=max_rows)
        jax.block_until_ready(out)

        ref = convlayer_ref(x, params)
        assert out.shape == (B, OUT_DIM)
        assert bool(jnp.isfinite(out).all())
        max_err = float(jnp.max(jnp.abs(out - ref)))
        assert max_err < 2e-2, f"config {i}: max abs err vs reference: {max_err}"

    print("KERNEL_OK")
</pallas_src>

<mosaic_0001>
module attributes {stable_mosaic.version = 11 : i64} {
  func.func @convlayer_kernel(%arg0: i32, %arg1: i32, %arg2: memref<128x8xf32, #tpu.memory_space<vmem>>, %arg3: memref<8x64xbf16, #tpu.memory_space<vmem>>, %arg4: memref<1x64xf32, #tpu.memory_space<vmem>>, %arg5: memref<64x64xbf16, #tpu.memory_space<vmem>>, %arg6: memref<1x64xf32, #tpu.memory_space<vmem>>, %arg7: memref<64x128xbf16, #tpu.memory_space<vmem>>, %arg8: memref<1x128xf32, #tpu.memory_space<vmem>>, %arg9: memref<128x256xbf16, #tpu.memory_space<vmem>>, %arg10: memref<1x256xf32, #tpu.memory_space<vmem>>, %arg11: memref<256x512xbf16, #tpu.memory_space<vmem>>, %arg12: memref<1x512xf32, #tpu.memory_space<vmem>>, %arg13: memref<512x1024xbf16, #tpu.memory_space<vmem>>, %arg14: memref<1x1024xf32, #tpu.memory_space<vmem>>, %arg15: memref<1x1x1920xf32, #tpu.memory_space<vmem>>) attributes {dimension_semantics = [#tpu.dimension_semantics<parallel>, #tpu.dimension_semantics<arbitrary>], iteration_bounds = array<i64: 2, 1>, scalar_prefetch = 0 : i64, scratch_operands = 0 : i64, tpu.core_type = #tpu.core_type<tc>, window_params = [{transform_indices = @transform_0, window_bounds = array<i64: 128, 8>}, {pipeline_mode = #tpu.pipeline_mode<synchronous>, transform_indices = @transform_1, window_bounds = array<i64: 8, 64>}, {pipeline_mode = #tpu.pipeline_mode<synchronous>, transform_indices = @transform_2, window_bounds = array<i64: 1, 64>}, {pipeline_mode = #tpu.pipeline_mode<synchronous>, transform_indices = @transform_3, window_bounds = array<i64: 64, 64>}, {pipeline_mode = #tpu.pipeline_mode<synchronous>, transform_indices = @transform_4, window_bounds = array<i64: 1, 64>}, {pipeline_mode = #tpu.pipeline_mode<synchronous>, transform_indices = @transform_5, window_bounds = array<i64: 64, 128>}, {pipeline_mode = #tpu.pipeline_mode<synchronous>, transform_indices = @transform_6, window_bounds = array<i64: 1, 128>}, {pipeline_mode = #tpu.pipeline_mode<synchronous>, transform_indices = @transform_7, window_bounds = array<i64: 128, 256>}, {pipeline_mode = #tpu.pipeline_mode<synchronous>, transform_indices = @transform_8, window_bounds = array<i64: 1, 256>}, {pipeline_mode = #tpu.pipeline_mode<synchronous>, transform_indices = @transform_9, window_bounds = array<i64: 256, 512>}, {pipeline_mode = #tpu.pipeline_mode<synchronous>, transform_indices = @transform_10, window_bounds = array<i64: 1, 512>}, {pipeline_mode = #tpu.pipeline_mode<synchronous>, transform_indices = @transform_11, window_bounds = array<i64: 512, 1024>}, {pipeline_mode = #tpu.pipeline_mode<synchronous>, transform_indices = @transform_12, window_bounds = array<i64: 1, 1024>}, {transform_indices = @transform_13, window_bounds = array<i64: 1, 1, 1920>}]} {
    %c0 = arith.constant 0 : index
    %c0_0 = arith.constant 0 : index
    %0 = vector.load %arg2[%c0, %c0_0] : memref<128x8xf32, #tpu.memory_space<vmem>>, vector<128x8xf32>
    %1 = arith.truncf %0 : vector<128x8xf32> to vector<128x8xbf16>
    %c0_1 = arith.constant 0 : index
    %c0_2 = arith.constant 0 : index
    %2 = vector.load %arg3[%c0_1, %c0_2] : memref<8x64xbf16, #tpu.memory_space<vmem>>, vector<8x64xbf16>
    %cst = arith.constant dense<0.000000e+00> : vector<128x64xf32>
    %3 = tpu.matmul %1, %2, %cst {dimension_numbers = #tpu.dot_dimension_numbers<[1], [0], [0], [1], [0, 0, 1, 1], [], []>} : vector<128x8xbf16>, vector<8x64xbf16>, vector<128x64xf32> -> vector<128x64xf32>
    %c0_3 = arith.constant 0 : index
    %c0_4 = arith.constant 0 : index
    %4 = vector.load %arg4[%c0_3, %c0_4] : memref<1x64xf32, #tpu.memory_space<vmem>>, vector<1x64xf32>
    %5 = vector.broadcast %4 : vector<1x64xf32> to vector<128x64xf32>
    %6 = arith.addf %3, %5 : vector<128x64xf32>
    %cst_5 = arith.constant 0.000000e+00 : f32
    %7 = vector.broadcast %cst_5 : f32 to vector<128x64xf32>
    %8 = arith.maximumf %6, %7 : vector<128x64xf32>
    %9 = arith.truncf %8 : vector<128x64xf32> to vector<128x64xbf16>
    %c0_6 = arith.constant 0 : index
    %c0_7 = arith.constant 0 : index
    %10 = vector.load %arg5[%c0_6, %c0_7] : memref<64x64xbf16, #tpu.memory_space<vmem>>, vector<64x64xbf16>
    %cst_8 = arith.constant dense<0.000000e+00> : vector<128x64xf32>
    %11 = tpu.matmul %9, %10, %cst_8 {dimension_numbers = #tpu.dot_dimension_numbers<[1], [0], [0], [1], [0, 0, 1, 1], [], []>} : vector<128x64xbf16>, vector<64x64xbf16>, vector<128x64xf32> -> vector<128x64xf32>
    %c0_9 = arith.constant 0 : index
    %c0_10 = arith.constant 0 : index
    %12 = vector.load %arg6[%c0_9, %c0_10] : memref<1x64xf32, #tpu.memory_space<vmem>>, vector<1x64xf32>
    %13 = vector.broadcast %12 : vector<1x64xf32> to vector<128x64xf32>
    %14 = arith.addf %11, %13 : vector<128x64xf32>
    %cst_11 = arith.constant 0.000000e+00 : f32
    %15 = vector.broadcast %cst_11 : f32 to vector<128x64xf32>
    %16 = arith.maximumf %14, %15 : vector<128x64xf32>
    %17 = arith.truncf %16 : vector<128x64xf32> to vector<128x64xbf16>
    %c0_12 = arith.constant 0 : index
    %c0_13 = arith.constant 0 : index
    %18 = vector.load %arg7[%c0_12, %c0_13] : memref<64x128xbf16, #tpu.memory_space<vmem>>, vector<64x128xbf16>
    %cst_14 = arith.constant dense<0.000000e+00> : vector<128x128xf32>
    %19 = tpu.matmul %17, %18, %cst_14 {dimension_numbers = #tpu.dot_dimension_numbers<[1], [0], [0], [1], [0, 0, 1, 1], [], []>} : vector<128x64xbf16>, vector<64x128xbf16>, vector<128x128xf32> -> vector<128x128xf32>
    %c0_15 = arith.constant 0 : index
    %c0_16 = arith.constant 0 : index
    %20 = vector.load %arg8[%c0_15, %c0_16] : memref<1x128xf32, #tpu.memory_space<vmem>>, vector<1x128xf32>
    %21 = vector.broadcast %20 : vector<1x128xf32> to vector<128x128xf32>
    %22 = arith.addf %19, %21 : vector<128x128xf32>
    %cst_17 = arith.constant 0.000000e+00 : f32
    %23 = vector.broadcast %cst_17 : f32 to vector<128x128xf32>
    %24 = arith.maximumf %22, %23 : vector<128x128xf32>
    %cst_18 = arith.constant dense<0xFF800000> : vector<128xf32>
    %25 = vector.multi_reduction <maximumf>, %24, %cst_18 [0] : vector<128x128xf32> to vector<128xf32>
    %26 = vector.shape_cast %25 : vector<128xf32> to vector<1x128xf32>
    %27 = arith.truncf %24 : vector<128x128xf32> to vector<128x128xbf16>
    %c0_19 = arith.constant 0 : index
    %c0_20 = arith.constant 0 : index
    %28 = vector.load %arg9[%c0_19, %c0_20] : memref<128x256xbf16, #tpu.memory_space<vmem>>, vector<128x256xbf16>
    %cst_21 = arith.constant dense<0.000000e+00> : vector<128x256xf32>
    %29 = tpu.matmul %27, %28, %cst_21 {dimension_numbers = #tpu.dot_dimension_numbers<[1], [0], [0], [1], [0, 0, 1, 1], [], []>} : vector<128x128xbf16>, vector<128x256xbf16>, vector<128x256xf32> -> vector<128x256xf32>
    %c0_22 = arith.constant 0 : index
    %c0_23 = arith.constant 0 : index
    %30 = vector.load %arg10[%c0_22, %c0_23] : memref<1x256xf32, #tpu.memory_space<vmem>>, vector<1x256xf32>
    %31 = vector.broadcast %30 : vector<1x256xf32> to vector<128x256xf32>
    %32 = arith.addf %29, %31 : vector<128x256xf32>
    %cst_24 = arith.constant 0.000000e+00 : f32
    %33 = vector.broadcast %cst_24 : f32 to vector<128x256xf32>
    %34 = arith.maximumf %32, %33 : vector<128x256xf32>
    %cst_25 = arith.constant dense<0xFF800000> : vector<256xf32>
    %35 = vector.multi_reduction <maximumf>, %34, %cst_25 [0] : vector<128x256xf32> to vector<256xf32>
    %36 = vector.shape_cast %35 : vector<256xf32> to vector<1x256xf32>
    %37 = arith.truncf %34 : vector<128x256xf32> to vector<128x256xbf16>
    %c0_26 = arith.constant 0 : index
    %c0_27 = arith.constant 0 : index
    %38 = vector.load %arg11[%c0_26, %c0_27] : memref<256x512xbf16, #tpu.memory_space<vmem>>, vector<256x512xbf16>
    %cst_28 = arith.constant dense<0.000000e+00> : vector<128x512xf32>
    %39 = tpu.matmul %37, %38, %cst_28 {dimension_numbers = #tpu.dot_dimension_numbers<[1], [0], [0], [1], [0, 0, 1, 1], [], []>} : vector<128x256xbf16>, vector<256x512xbf16>, vector<128x512xf32> -> vector<128x512xf32>
    %c0_29 = arith.constant 0 : index
    %c0_30 = arith.constant 0 : index
    %40 = vector.load %arg12[%c0_29, %c0_30] : memref<1x512xf32, #tpu.memory_space<vmem>>, vector<1x512xf32>
    %41 = vector.broadcast %40 : vector<1x512xf32> to vector<128x512xf32>
    %42 = arith.addf %39, %41 : vector<128x512xf32>
    %cst_31 = arith.constant 0.000000e+00 : f32
    %43 = vector.broadcast %cst_31 : f32 to vector<128x512xf32>
    %44 = arith.maximumf %42, %43 : vector<128x512xf32>
    %cst_32 = arith.constant dense<0xFF800000> : vector<512xf32>
    %45 = vector.multi_reduction <maximumf>, %44, %cst_32 [0] : vector<128x512xf32> to vector<512xf32>
    %46 = vector.shape_cast %45 : vector<512xf32> to vector<1x512xf32>
    %47 = arith.truncf %44 : vector<128x512xf32> to vector<128x512xbf16>
    %c0_33 = arith.constant 0 : index
    %c0_34 = arith.constant 0 : index
    %48 = vector.load %arg13[%c0_33, %c0_34] : memref<512x1024xbf16, #tpu.memory_space<vmem>>, vector<512x256xbf16>
    %cst_35 = arith.constant dense<0.000000e+00> : vector<128x256xf32>
    %49 = tpu.matmul %47, %48, %cst_35 {dimension_numbers = #tpu.dot_dimension_numbers<[1], [0], [0], [1], [0, 0, 1, 1], [], []>} : vector<128x512xbf16>, vector<512x256xbf16>, vector<128x256xf32> -> vector<128x256xf32>
    %c0_36 = arith.constant 0 : index
    %c0_37 = arith.constant 0 : index
    %50 = vector.load %arg14[%c0_36, %c0_37] : memref<1x1024xf32, #tpu.memory_space<vmem>>, vector<1x256xf32>
    %51 = vector.broadcast %50 : vector<1x256xf32> to vector<128x256xf32>
    %52 = arith.addf %49, %51 : vector<128x256xf32>
    %cst_38 = arith.constant 0.000000e+00 : f32
    %53 = vector.broadcast %cst_38 : f32 to vector<128x256xf32>
    %54 = arith.maximumf %52, %53 : vector<128x256xf32>
    %cst_39 = arith.constant dense<0xFF800000> : vector<256xf32>
    %55 = vector.multi_reduction <maximumf>, %54, %cst_39 [0] : vector<128x256xf32> to vector<256xf32>
    %56 = vector.shape_cast %55 : vector<256xf32> to vector<1x256xf32>
    %c0_40 = arith.constant 0 : index
    %c256 = arith.constant 256 : index
    %57 = vector.load %arg13[%c0_40, %c256] : memref<512x1024xbf16, #tpu.memory_space<vmem>>, vector<512x256xbf16>
    %cst_41 = arith.constant dense<0.000000e+00> : vector<128x256xf32>
    %58 = tpu.matmul %47, %57, %cst_41 {dimension_numbers = #tpu.dot_dimension_numbers<[1], [0], [0], [1], [0, 0, 1, 1], [], []>} : vector<128x512xbf16>, vector<512x256xbf16>, vector<128x256xf32> -> vector<128x256xf32>
    %c0_42 = arith.constant 0 : index
    %c256_43 = arith.constant 256 : index
    %59 = vector.load %arg14[%c0_42, %c256_43] : memref<1x1024xf32, #tpu.memory_space<vmem>>, vector<1x256xf32>
    %60 = vector.broadcast %59 : vector<1x256xf32> to vector<128x256xf32>
    %61 = arith.addf %58, %60 : vector<128x256xf32>
    %cst_44 = arith.constant 0.000000e+00 : f32
    %62 = vector.broadcast %cst_44 : f32 to vector<128x256xf32>
    %63 = arith.maximumf %61, %62 : vector<128x256xf32>
    %cst_45 = arith.constant dense<0xFF800000> : vector<256xf32>
    %64 = vector.multi_reduction <maximumf>, %63, %cst_45 [0] : vector<128x256xf32> to vector<256xf32>
    %65 = vector.shape_cast %64 : vector<256xf32> to vector<1x256xf32>
    %c0_46 = arith.constant 0 : index
    %c512 = arith.constant 512 : index
    %66 = vector.load %arg13[%c0_46, %c512] : memref<512x1024xbf16, #tpu.memory_space<vmem>>, vector<512x256xbf16>
    %cst_47 = arith.constant dense<0.000000e+00> : vector<128x256xf32>
    %67 = tpu.matmul %47, %66, %cst_47 {dimension_numbers = #tpu.dot_dimension_numbers<[1], [0], [0], [1], [0, 0, 1, 1], [], []>} : vector<128x512xbf16>, vector<512x256xbf16>, vector<128x256xf32> -> vector<128x256xf32>
    %c0_48 = arith.constant 0 : index
    %c512_49 = arith.constant 512 : index
    %68 = vector.load %arg14[%c0_48, %c512_49] : memref<1x1024xf32, #tpu.memory_space<vmem>>, vector<1x256xf32>
    %69 = vector.broadcast %68 : vector<1x256xf32> to vector<128x256xf32>
    %70 = arith.addf %67, %69 : vector<128x256xf32>
    %cst_50 = arith.constant 0.000000e+00 : f32
    %71 = vector.broadcast %cst_50 : f32 to vector<128x256xf32>
    %72 = arith.maximumf %70, %71 : vector<128x256xf32>
    %cst_51 = arith.constant dense<0xFF800000> : vector<256xf32>
    %73 = vector.multi_reduction <maximumf>, %72, %cst_51 [0] : vector<128x256xf32> to vector<256xf32>
    %74 = vector.shape_cast %73 : vector<256xf32> to vector<1x256xf32>
    %c0_52 = arith.constant 0 : index
    %c768 = arith.constant 768 : index
    %75 = vector.load %arg13[%c0_52, %c768] : memref<512x1024xbf16, #tpu.memory_space<vmem>>, vector<512x256xbf16>
    %cst_53 = arith.constant dense<0.000000e+00> : vector<128x256xf32>
    %76 = tpu.matmul %47, %75, %cst_53 {dimension_numbers = #tpu.dot_dimension_numbers<[1], [0], [0], [1], [0, 0, 1, 1], [], []>} : vector<128x512xbf16>, vector<512x256xbf16>, vector<128x256xf32> -> vector<128x256xf32>
    %c0_54 = arith.constant 0 : index
    %c768_55 = arith.constant 768 : index
    %77 = vector.load %arg14[%c0_54, %c768_55] : memref<1x1024xf32, #tpu.memory_space<vmem>>, vector<1x256xf32>
    %78 = vector.broadcast %77 : vector<1x256xf32> to vector<128x256xf32>
    %79 = arith.addf %76, %78 : vector<128x256xf32>
    %cst_56 = arith.constant 0.000000e+00 : f32
    %80 = vector.broadcast %cst_56 : f32 to vector<128x256xf32>
    %81 = arith.maximumf %79, %80 : vector<128x256xf32>
    %cst_57 = arith.constant dense<0xFF800000> : vector<256xf32>
    %82 = vector.multi_reduction <maximumf>, %81, %cst_57 [0] : vector<128x256xf32> to vector<256xf32>
    %83 = vector.shape_cast %82 : vector<256xf32> to vector<1x256xf32>
    %c0_58 = arith.constant 0 : index
    %c0_59 = arith.constant 0 : index
    %c0_60 = arith.constant 0 : index
    %84 = vector.load %arg15[%c0_58, %c0_59, %c0_60] : memref<1x1x1920xf32, #tpu.memory_space<vmem>>, vector<1x1x256xf32>
    %85 = vector.shape_cast %84 : vector<1x1x256xf32> to vector<1x256xf32>
    %86 = vector.shape_cast %56 : vector<1x256xf32> to vector<1x1x256xf32>
    tpu.vector_store %arg15[%c0_58, %c0_59, %c0_60], %86 {strides = array<i32>} : memref<1x1x1920xf32, #tpu.memory_space<vmem>>, vector<1x1x256xf32>,
    %c0_61 = arith.constant 0 : index
    %c0_62 = arith.constant 0 : index
    %c256_63 = arith.constant 256 : index
    %87 = vector.load %arg15[%c0_61, %c0_62, %c256_63] : memref<1x1x1920xf32, #tpu.memory_space<vmem>>, vector<1x1x256xf32>
    %88 = vector.shape_cast %87 : vector<1x1x256xf32> to vector<1x256xf32>
    %89 = vector.shape_cast %65 : vector<1x256xf32> to vector<1x1x256xf32>
    tpu.vector_store %arg15[%c0_61, %c0_62, %c256_63], %89 {strides = array<i32>} : memref<1x1x1920xf32, #tpu.memory_space<vmem>>, vector<1x1x256xf32>,
    %c0_64 = arith.constant 0 : index
    %c0_65 = arith.constant 0 : index
    %c512_66 = arith.constant 512 : index
    %90 = vector.load %arg15[%c0_64, %c0_65, %c512_66] : memref<1x1x1920xf32, #tpu.memory_space<vmem>>, vector<1x1x256xf32>
    %91 = vector.shape_cast %90 : vector<1x1x256xf32> to vector<1x256xf32>
    %92 = vector.shape_cast %74 : vector<1x256xf32> to vector<1x1x256xf32>
    tpu.vector_store %arg15[%c0_64, %c0_65, %c512_66], %92 {strides = array<i32>} : memref<1x1x1920xf32, #tpu.memory_space<vmem>>, vector<1x1x256xf32>,
    %c0_67 = arith.constant 0 : index
    %c0_68 = arith.constant 0 : index
    %c768_69 = arith.constant 768 : index
    %93 = vector.load %arg15[%c0_67, %c0_68, %c768_69] : memref<1x1x1920xf32, #tpu.memory_space<vmem>>, vector<1x1x256xf32>
    %94 = vector.shape_cast %93 : vector<1x1x256xf32> to vector<1x256xf32>
    %95 = vector.shape_cast %83 : vector<1x256xf32> to vector<1x1x256xf32>
    tpu.vector_store %arg15[%c0_67, %c0_68, %c768_69], %95 {strides = array<i32>} : memref<1x1x1920xf32, #tpu.memory_space<vmem>>, vector<1x1x256xf32>,
    %c0_70 = arith.constant 0 : index
    %c0_71 = arith.constant 0 : index
    %c1024 = arith.constant 1024 : index
    %96 = vector.load %arg15[%c0_70, %c0_71, %c1024] : memref<1x1x1920xf32, #tpu.memory_space<vmem>>, vector<1x1x512xf32>
    %97 = vector.shape_cast %96 : vector<1x1x512xf32> to vector<1x512xf32>
    %98 = vector.shape_cast %46 : vector<1x512xf32> to vector<1x1x512xf32>
    tpu.vector_store %arg15[%c0_70, %c0_71, %c1024], %98 {strides = array<i32>} : memref<1x1x1920xf32, #tpu.memory_space<vmem>>, vector<1x1x512xf32>,
    %c0_72 = arith.constant 0 : index
    %c0_73 = arith.constant 0 : index
    %c1536 = arith.constant 1536 : index
    %99 = vector.load %arg15[%c0_72, %c0_73, %c1536] : memref<1x1x1920xf32, #tpu.memory_space<vmem>>, vector<1x1x256xf32>
    %100 = vector.shape_cast %99 : vector<1x1x256xf32> to vector<1x256xf32>
    %101 = vector.shape_cast %36 : vector<1x256xf32> to vector<1x1x256xf32>
    tpu.vector_store %arg15[%c0_72, %c0_73, %c1536], %101 {strides = array<i32>} : memref<1x1x1920xf32, #tpu.memory_space<vmem>>, vector<1x1x256xf32>,
    %c0_74 = arith.constant 0 : index
    %c0_75 = arith.constant 0 : index
    %c1792 = arith.constant 1792 : index
    %102 = vector.load %arg15[%c0_74, %c0_75, %c1792] : memref<1x1x1920xf32, #tpu.memory_space<vmem>>, vector<1x1x128xf32>
    %103 = vector.shape_cast %102 : vector<1x1x128xf32> to vector<1x128xf32>
    %104 = vector.shape_cast %26 : vector<1x128xf32> to vector<1x1x128xf32>
    tpu.vector_store %arg15[%c0_74, %c0_75, %c1792], %104 {strides = array<i32>} : memref<1x1x1920xf32, #tpu.memory_space<vmem>>, vector<1x1x128xf32>,
    return
  }
  func.func @transform_0(%arg0: i32, %arg1: i32) -> (i32, i32) {
    %c1_i32 = arith.constant 1 : i32
    %0 = arith.muli %arg0, %c1_i32 : i32
    %1 = arith.addi %0, %arg1 : i32
    %c0_i32 = arith.constant 0 : i32
    %c0_i32_0 = arith.constant 0 : i32
    return %1, %c0_i32 : i32, i32
  }
  func.func @transform_1(%arg0: i32, %arg1: i32) -> (i32, i32) {
    %c0_i32 = arith.constant 0 : i32
    %c0_i32_0 = arith.constant 0 : i32
    %c0_i32_1 = arith.constant 0 : i32
    return %c0_i32, %c0_i32_0 : i32, i32
  }
  func.func @transform_2(%arg0: i32, %arg1: i32) -> (i32, i32) {
    %c0_i32 = arith.constant 0 : i32
    %c0_i32_0 = arith.constant 0 : i32
    %c0_i32_1 = arith.constant 0 : i32
    return %c0_i32, %c0_i32_0 : i32, i32
  }
  func.func @transform_3(%arg0: i32, %arg1: i32) -> (i32, i32) {
    %c0_i32 = arith.constant 0 : i32
    %c0_i32_0 = arith.constant 0 : i32
    %c0_i32_1 = arith.constant 0 : i32
    return %c0_i32, %c0_i32_0 : i32, i32
  }
  func.func @transform_4(%arg0: i32, %arg1: i32) -> (i32, i32) {
    %c0_i32 = arith.constant 0 : i32
    %c0_i32_0 = arith.constant 0 : i32
    %c0_i32_1 = arith.constant 0 : i32
    return %c0_i32, %c0_i32_0 : i32, i32
  }
  func.func @transform_5(%arg0: i32, %arg1: i32) -> (i32, i32) {
    %c0_i32 = arith.constant 0 : i32
    %c0_i32_0 = arith.constant 0 : i32
    %c0_i32_1 = arith.constant 0 : i32
    return %c0_i32, %c0_i32_0 : i32, i32
  }
  func.func @transform_6(%arg0: i32, %arg1: i32) -> (i32, i32) {
    %c0_i32 = arith.constant 0 : i32
    %c0_i32_0 = arith.constant 0 : i32
    %c0_i32_1 = arith.constant 0 : i32
    return %c0_i32, %c0_i32_0 : i32, i32
  }
  func.func @transform_7(%arg0: i32, %arg1: i32) -> (i32, i32) {
    %c0_i32 = arith.constant 0 : i32
    %c0_i32_0 = arith.constant 0 : i32
    %c0_i32_1 = arith.constant 0 : i32
    return %c0_i32, %c0_i32_0 : i32, i32
  }
  func.func @transform_8(%arg0: i32, %arg1: i32) -> (i32, i32) {
    %c0_i32 = arith.constant 0 : i32
    %c0_i32_0 = arith.constant 0 : i32
    %c0_i32_1 = arith.constant 0 : i32
    return %c0_i32, %c0_i32_0 : i32, i32
  }
  func.func @transform_9(%arg0: i32, %arg1: i32) -> (i32, i32) {
    %c0_i32 = arith.constant 0 : i32
    %c0_i32_0 = arith.constant 0 : i32
    %c0_i32_1 = arith.constant 0 : i32
    return %c0_i32, %c0_i32_0 : i32, i32
  }
  func.func @transform_10(%arg0: i32, %arg1: i32) -> (i32, i32) {
    %c0_i32 = arith.constant 0 : i32
    %c0_i32_0 = arith.constant 0 : i32
    %c0_i32_1 = arith.constant 0 : i32
    return %c0_i32, %c0_i32_0 : i32, i32
  }
  func.func @transform_11(%arg0: i32, %arg1: i32) -> (i32, i32) {
    %c0_i32 = arith.constant 0 : i32
    %c0_i32_0 = arith.constant 0 : i32
    %c0_i32_1 = arith.constant 0 : i32
    return %c0_i32, %c0_i32_0 : i32, i32
  }
  func.func @transform_12(%arg0: i32, %arg1: i32) -> (i32, i32) {
    %c0_i32 = arith.constant 0 : i32
    %c0_i32_0 = arith.constant 0 : i32
    %c0_i32_1 = arith.constant 0 : i32
    return %c0_i32, %c0_i32_0 : i32, i32
  }
  func.func @transform_13(%arg0: i32, %arg1: i32) -> (i32, i32, i32) {
    %c0_i32 = arith.constant 0 : i32
    %c0_i32_0 = arith.constant 0 : i32
    %c0_i32_1 = arith.constant 0 : i32
    return %arg0, %c0_i32, %c0_i32_0 : i32, i32, i32
  }
}

</mosaic_0001>

<llo_original>
// kernel: convlayer.1
$region0: #{convlayer.1}
  #allocation0 [shape = 'u32[]', space=smem, size = 0x4, offset = 0x4, fixed_abs, tag = 'smem constant byte address 0x4 - core index']
  #allocation1 [shape = 'u32[144,128]{1,0:T(1,128)}', space=vmem, size = 0x12000, scoped, tag = 'internal scratch']
  %s0 = inlined_call_operand.vmem [shape: f32[256,8], index: 0, kind: input, shape index: {}]
  %s1 = inlined_call_operand.vmem [shape: bf16[8,64], index: 1, kind: input, shape index: {}]
  %s2 = inlined_call_operand.vmem [shape: f32[1,64], index: 2, kind: input, shape index: {}]
  %s3 = inlined_call_operand.vmem [shape: bf16[64,64], index: 3, kind: input, shape index: {}]
  %s4 = inlined_call_operand.vmem [shape: f32[1,64], index: 4, kind: input, shape index: {}]
  %s5 = inlined_call_operand.vmem [shape: bf16[64,128], index: 5, kind: input, shape index: {}]
  %s6 = inlined_call_operand.vmem [shape: f32[1,128], index: 6, kind: input, shape index: {}]
  %s7 = inlined_call_operand.vmem [shape: bf16[128,256], index: 7, kind: input, shape index: {}]
  %s8 = inlined_call_operand.vmem [shape: f32[1,256], index: 8, kind: input, shape index: {}]
  %s9 = inlined_call_operand.vmem [shape: bf16[256,512], index: 9, kind: input, shape index: {}]
  %s10 = inlined_call_operand.vmem [shape: f32[1,512], index: 10, kind: input, shape index: {}]
  %s11 = inlined_call_operand.hbm [shape: bf16[512,1024], index: 11, kind: input, shape index: {}]
  %s12 = inlined_call_operand.vmem [shape: f32[1,1024], index: 12, kind: input, shape index: {}]
  %s13 = inlined_call_operand.vmem [shape: f32[2,1,1920], index: 13, kind: output, shape index: {}]
  %s14 = sld [smem:[#allocation0]]
  $region89: #{convlayer.1} parent=0
    _
  %s16 = ssub.s32 1, %s14
  %s17 = scalar_select 0, %s16, %s14
  $region1: #{convlayer.1} parent=0
    #allocation2 [shape = 'u8[1048576]{0}', space=vmem, size = 0x100000, scoped, tag = 'input window, operand 11, single buffered']
    #allocation3 [shape = 's32[2]{0}', space=sflag, size = 0x8, scoped, tag = 'scoped memory for convlayer.1']
    %18 = vsyncpa [#allocation3], 0
    loop: start=0, step=1, limit=4
    $region2: #{convlayer.1} parent=1 // loop_pre_header
      _
    $region3: #{convlayer.1} parent=1 // loop_header
      %s20 = sphi 0, %s24
      %p21 = scmp.ge.s32.totalorder %s20, 4
      %s27 = sphi 0, %s39
      %s28 = sphi 0, %s35
      %s29 = sphi 0, %s27
      %s30 = sphi 0, %s28
      %s31 = sphi 0, %s29
      %s32 = sphi 0, %s30
      %s44 = sphi 0, %s46
      %s47 = sphi 0, %s44
      %s48 = sphi 0, %s47
      %s64 = sphi 0, %s48
      %s68 = sphi 0, %s68
      %s70 = sphi 0, %s68
      %s71 = sphi 0, %s70
      %s85 = sphi 0, %s71
      %s89 = sphi 0, %s89
      %s91 = sphi 0, %s89
      %s92 = sphi 0, %s91
      %s106 = sphi 0, %s92
      %s110 = sphi 0, %s110
      %s112 = sphi 0, %s110
      %s113 = sphi 0, %s112
      %s127 = sphi 0, %s113
      %s131 = sphi 0, %s131
      %s133 = sphi 0, %s131
      %s134 = sphi 0, %s133
      %s148 = sphi 0, %s134
      %s152 = sphi 0, %s152
      %s154 = sphi 0, %s152
      %s155 = sphi 0, %s154
      %s169 = sphi 0, %s155
      %s173 = sphi 0, %s173
      %s175 = sphi 0, %s173
      %s176 = sphi 0, %s175
      %s190 = sphi 0, %s176
      %s194 = sphi 0, %s194
      %s196 = sphi 0, %s194
      %s197 = sphi 0, %s196
      %s211 = sphi 0, %s197
      %s215 = sphi 0, %s215
      %s217 = sphi 0, %s215
      %s218 = sphi 0, %s217
      %s232 = sphi 0, %s218
      %s236 = sphi 0, %s236
      %s238 = sphi 0, %s236
      %s239 = sphi 0, %s238
      %s253 = sphi 0, %s239
      %s257 = sphi 0, %s257
      %s259 = sphi 0, %s257
      %s260 = sphi 0, %s259
      %s274 = sphi 0, %s260
      %s278 = sphi 0, %s278
      %s280 = sphi 0, %s278
      %s281 = sphi 0, %s280
      %s295 = sphi 0, %s281
      %s299 = sphi 0, %s299
      %s301 = sphi 0, %s299
      %s302 = sphi 0, %s301
      %s316 = sphi 0, %s302
      %s322 = sphi 0, %s324
      %s325 = sphi 0, %s322
      %s326 = sphi 0, %s325
      %s342 = sphi 0, %s326
    $region4: #{convlayer.1} parent=1 // loop_header_branch
      %23 = sbr.rel (%p21) target = $region8
    $region5: #{convlayer.1} parent=1 // loop_body
      %s25 = ssub.s32 %s20, 1
      %s26 = ssub.s32 %s20, 2
      %s33 = sadd.s32 1, %s28
      %p34 = scmp.ge.s32.totalorder %s33, 1
      %s35 = scalar_select %p34, 0, %s33
      %s36 = sadd.s32 1, %s27
      %s37 = scalar_select %p34, %s36, %s27
      %p38 = scmp.ge.s32.totalorder %s37, 2
      %s39 = scalar_select %p38, 0, %s37
      %s40 = sadd.s32 %s27, %s28
      %s41 = sadd.s32 %s39, %s35
      %s42 = ssub.s32 %s40, %s41
      %p43 = scmp.eq.s32.totalorder %s42, 0
      %s45 = sadd.s32 %s44, 1
      %s46 = scalar_select %p43, %s44, %s45
      %p49 = pneg %p43
      %p50 = scmp.eq.s32.totalorder %s20, 1
      %p51 = por %p49, %p50
      %p52 = scmp.ne.s32.totalorder %s44, %s47
      %p53 = scmp.eq.s32.totalorder %s20, 0
      %p54 = por %p52, %p53
      %p55 = scmp.ne.s32.totalorder %s44, %s47
      %p56 = scmp.eq.s32.totalorder %s25, 1
      %p57 = por %p55, %p56
      %p58 = scmp.ne.s32.totalorder %s47, %s48
      %p59 = scmp.eq.s32.totalorder %s25, 0
      %p60 = por %p58, %p59
      %p61 = scmp.ne.s32.totalorder %s47, %s48
      %p62 = scmp.eq.s32.totalorder %s26, 1
      %p63 = por %p61, %p62
      %p65 = scmp.ne.s32.totalorder %s48, %s64
      %p66 = scmp.eq.s32.totalorder %s26, 0
      %p67 = por %p65, %p66
      %s69 = sadd.s32 %s68, 1
      %p72 = scmp.eq.s32.totalorder %s20, 1
      %p73 = scmp.ne.s32.totalorder %s68, %s70
      %p74 = scmp.eq.s32.totalorder %s20, 0
      %p75 = por %p73, %p74
      %p76 = scmp.ne.s32.totalorder %s68, %s70
      %p77 = scmp.eq.s32.totalorder %s25, 1
      %p78 = por %p76, %p77
      %p79 = scmp.ne.s32.totalorder %s70, %s71
      %p80 = scmp.eq.s32.totalorder %s25, 0
      %p81 = por %p79, %p80
      %p82 = scmp.ne.s32.totalorder %s70, %s71
      %p83 = scmp.eq.s32.totalorder %s26, 1
      %p84 = por %p82, %p83
      %p86 = scmp.ne.s32.totalorder %s71, %s85
      %p87 = scmp.eq.s32.totalorder %s26, 0
      %p88 = por %p86, %p87
      %s90 = sadd.s32 %s89, 1
      %p93 = scmp.eq.s32.totalorder %s20, 1
      %p94 = scmp.ne.s32.totalorder %s89, %s91
      %p95 = scmp.eq.s32.totalorder %s20, 0
      %p96 = por %p94, %p95
      %p97 = scmp.ne.s32.totalorder %s89, %s91
      %p98 = scmp.eq.s32.totalorder %s25, 1
      %p99 = por %p97, %p98
      %p100 = scmp.ne.s32.totalorder %s91, %s92
      %p101 = scmp.eq.s32.totalorder %s25, 0
      %p102 = por %p100, %p101
      %p103 = scmp.ne.s32.totalorder %s91, %s92
      %p104 = scmp.eq.s32.totalorder %s26, 1
      %p105 = por %p103, %p104
      %p107 = scmp.ne.s32.totalorder %s92, %s106
      %p108 = scmp.eq.s32.totalorder %s26, 0
      %p109 = por %p107, %p108
      %s111 = sadd.s32 %s110, 1
      %p114 = scmp.eq.s32.totalorder %s20, 1
      %p115 = scmp.ne.s32.totalorder %s110, %s112
      %p116 = scmp.eq.s32.totalorder %s20, 0
      %p117 = por %p115, %p116
      %p118 = scmp.ne.s32.totalorder %s110, %s112
      %p119 = scmp.eq.s32.totalorder %s25, 1
      %p120 = por %p118, %p119
      %p121 = scmp.ne.s32.totalorder %s112, %s113
      %p122 = scmp.eq.s32.totalorder %s25, 0
      %p123 = por %p121, %p122
      %p124 = scmp.ne.s32.totalorder %s112, %s113
      %p125 = scmp.eq.s32.totalorder %s26, 1
      %p126 = por %p124, %p125
      %p128 = scmp.ne.s32.totalorder %s113, %s127
      %p129 = scmp.eq.s32.totalorder %s26, 0
      %p130 = por %p128, %p129
      %s132 = sadd.s32 %s131, 1
      %p135 = scmp.eq.s32.totalorder %s20, 1
      %p136 = scmp.ne.s32.totalorder %s131, %s133
      %p137 = scmp.eq.s32.totalorder %s20, 0
      %p138 = por %p136, %p137
      %p139 = scmp.ne.s32.totalorder %s131, %s133
      %p140 = scmp.eq.s32.totalorder %s25, 1
      %p141 = por %p139, %p140
      %p142 = scmp.ne.s32.totalorder %s133, %s134
      %p143 = scmp.eq.s32.totalorder %s25, 0
      %p144 = por %p142, %p143
      %p145 = scmp.ne.s32.totalorder %s133, %s134
      %p146 = scmp.eq.s32.totalorder %s26, 1
      %p147 = por %p145, %p146
      %p149 = scmp.ne.s32.totalorder %s134, %s148
      %p150 = scmp.eq.s32.totalorder %s26, 0
      %p151 = por %p149, %p150
      %s153 = sadd.s32 %s152, 1
      %p156 = scmp.eq.s32.totalorder %s20, 1
      %p157 = scmp.ne.s32.totalorder %s152, %s154
      %p158 = scmp.eq.s32.totalorder %s20, 0
      %p159 = por %p157, %p158
      %p160 = scmp.ne.s32.totalorder %s152, %s154
      %p161 = scmp.eq.s32.totalorder %s25, 1
      %p162 = por %p160, %p161
      %p163 = scmp.ne.s32.totalorder %s154, %s155
      %p164 = scmp.eq.s32.totalorder %s25, 0
      %p165 = por %p163, %p164
      %p166 = scmp.ne.s32.totalorder %s154, %s155
      %p167 = scmp.eq.s32.totalorder %s26, 1
      %p168 = por %p166, %p167
      %p170 = scmp.ne.s32.totalorder %s155, %s169
      %p171 = scmp.eq.s32.totalorder %s26, 0
      %p172 = por %p170, %p171
      %s174 = sadd.s32 %s173, 1
      %p177 = scmp.eq.s32.totalorder %s20, 1
      %p178 = scmp.ne.s32.totalorder %s173, %s175
      %p179 = scmp.eq.s32.totalorder %s20, 0
      %p180 = por %p178, %p179
      %p181 = scmp.ne.s32.totalorder %s173, %s175
      %p182 = scmp.eq.s32.totalorder %s25, 1
      %p183 = por %p181, %p182
      %p184 = scmp.ne.s32.totalorder %s175, %s176
      %p185 = scmp.eq.s32.totalorder %s25, 0
      %p186 = por %p184, %p185
      %p187 = scmp.ne.s32.totalorder %s175, %s176
      %p188 = scmp.eq.s32.totalorder %s26, 1
      %p189 = por %p187, %p188
      %p191 = scmp.ne.s32.totalorder %s176, %s190
      %p192 = scmp.eq.s32.totalorder %s26, 0
      %p193 = por %p191, %p192
      %s195 = sadd.s32 %s194, 1
      %p198 = scmp.eq.s32.totalorder %s20, 1
      %p199 = scmp.ne.s32.totalorder %s194, %s196
      %p200 = scmp.eq.s32.totalorder %s20, 0
      %p201 = por %p199, %p200
      %p202 = scmp.ne.s32.totalorder %s194, %s196
      %p203 = scmp.eq.s32.totalorder %s25, 1
      %p204 = por %p202, %p203
      %p205 = scmp.ne.s32.totalorder %s196, %s197
      %p206 = scmp.eq.s32.totalorder %s25, 0
      %p207 = por %p205, %p206
      %p208 = scmp.ne.s32.totalorder %s196, %s197
      %p209 = scmp.eq.s32.totalorder %s26, 1
      %p210 = por %p208, %p209
      %p212 = scmp.ne.s32.totalorder %s197, %s211
      %p213 = scmp.eq.s32.totalorder %s26, 0
      %p214 = por %p212, %p213
      %s216 = sadd.s32 %s215, 1
      %p219 = scmp.eq.s32.totalorder %s20, 1
      %p220 = scmp.ne.s32.totalorder %s215, %s217
      %p221 = scmp.eq.s32.totalorder %s20, 0
      %p222 = por %p220, %p221
      %p223 = scmp.ne.s32.totalorder %s215, %s217
      %p224 = scmp.eq.s32.totalorder %s25, 1
      %p225 = por %p223, %p224
      %p226 = scmp.ne.s32.totalorder %s217, %s218
      %p227 = scmp.eq.s32.totalorder %s25, 0
      %p228 = por %p226, %p227
      %p229 = scmp.ne.s32.totalorder %s217, %s218
      %p230 = scmp.eq.s32.totalorder %s26, 1
      %p231 = por %p229, %p230
      %p233 = scmp.ne.s32.totalorder %s218, %s232
      %p234 = scmp.eq.s32.totalorder %s26, 0
      %p235 = por %p233, %p234
      %s237 = sadd.s32 %s236, 1
      %p240 = scmp.eq.s32.totalorder %s20, 1
      %p241 = scmp.ne.s32.totalorder %s236, %s238
      %p242 = scmp.eq.s32.totalorder %s20, 0
      %p243 = por %p241, %p242
      %p244 = scmp.ne.s32.totalorder %s236, %s238
      %p245 = scmp.eq.s32.totalorder %s25, 1
      %p246 = por %p244, %p245
      %p247 = scmp.ne.s32.totalorder %s238, %s239
      %p248 = scmp.eq.s32.totalorder %s25, 0
      %p249 = por %p247, %p248
      %p250 = scmp.ne.s32.totalorder %s238, %s239
      %p251 = scmp.eq.s32.totalorder %s26, 1
      %p252 = por %p250, %p251
      %p254 = scmp.ne.s32.totalorder %s239, %s253
      %p255 = scmp.eq.s32.totalorder %s26, 0
      %p256 = por %p254, %p255
      %s258 = sadd.s32 %s257, 1
      %p261 = scmp.eq.s32.totalorder %s20, 1
      %p262 = scmp.ne.s32.totalorder %s257, %s259
      %p263 = scmp.eq.s32.totalorder %s20, 0
      %p264 = por %p262, %p263
      %p265 = scmp.ne.s32.totalorder %s257, %s259
      %p266 = scmp.eq.s32.totalorder %s25, 1
      %p267 = por %p265, %p266
      %p268 = scmp.ne.s32.totalorder %s259, %s260
      %p269 = scmp.eq.s32.totalorder %s25, 0
      %p270 = por %p268, %p269
      %p271 = scmp.ne.s32.totalorder %s259, %s260
      %p272 = scmp.eq.s32.totalorder %s26, 1
      %p273 = por %p271, %p272
      %p275 = scmp.ne.s32.totalorder %s260, %s274
      %p276 = scmp.eq.s32.totalorder %s26, 0
      %p277 = por %p275, %p276
      %s279 = sadd.s32 %s278, 1
      %p282 = scmp.eq.s32.totalorder %s20, 1
      %p283 = scmp.ne.s32.totalorder %s278, %s280
      %p284 = scmp.eq.s32.totalorder %s20, 0
      %p285 = por %p283, %p284
      %p286 = scmp.ne.s32.totalorder %s278, %s280
      %p287 = scmp.eq.s32.totalorder %s25, 1
      %p288 = por %p286, %p287
      %p289 = scmp.ne.s32.totalorder %s280, %s281
      %p290 = scmp.eq.s32.totalorder %s25, 0
      %p291 = por %p289, %p290
      %p292 = scmp.ne.s32.totalorder %s280, %s281
      %p293 = scmp.eq.s32.totalorder %s26, 1
      %p294 = por %p292, %p293
      %p296 = scmp.ne.s32.totalorder %s281, %s295
      %p297 = scmp.eq.s32.totalorder %s26, 0
      %p298 = por %p296, %p297
      %s300 = sadd.s32 %s299, 1
      %p303 = scmp.eq.s32.totalorder %s20, 1
      %p304 = scmp.ne.s32.totalorder %s299, %s301
      %p305 = scmp.eq.s32.totalorder %s20, 0
      %p306 = por %p304, %p305
      %p307 = scmp.ne.s32.totalorder %s299, %s301
      %p308 = scmp.eq.s32.totalorder %s25, 1
      %p309 = por %p307, %p308
      %p310 = scmp.ne.s32.totalorder %s301, %s302
      %p311 = scmp.eq.s32.totalorder %s25, 0
      %p312 = por %p310, %p311
      %p313 = scmp.ne.s32.totalorder %s301, %s302
      %p314 = scmp.eq.s32.totalorder %s26, 1
      %p315 = por %p313, %p314
      %p317 = scmp.ne.s32.totalorder %s302, %s316
      %p318 = scmp.eq.s32.totalorder %s26, 0
      %p319 = por %p317, %p318
      %s320 = ssub.s32 %s27, %s39
      %p321 = scmp.eq.s32.totalorder %s320, 0
      %s323 = sadd.s32 %s322, 1
      %s324 = scalar_select %p321, %s322, %s323
      %p327 = pneg %p321
      %p328 = scmp.eq.s32.totalorder %s20, 1
      %p329 = por %p327, %p328
      %p330 = scmp.ne.s32.totalorder %s322, %s325
      %p331 = scmp.eq.s32.totalorder %s20, 0
      %p332 = por %p330, %p331
      %p333 = scmp.ne.s32.totalorder %s322, %s325
      %p334 = scmp.eq.s32.totalorder %s25, 1
      %p335 = por %p333, %p334
      %p336 = scmp.ne.s32.totalorder %s325, %s326
      %p337 = scmp.eq.s32.totalorder %s25, 0
      %p338 = por %p336, %p337
      %p339 = scmp.ne.s32.totalorder %s325, %s326
      %p340 = scmp.eq.s32.totalorder %s26, 1
      %p341 = por %p339, %p340
      %p343 = scmp.ne.s32.totalorder %s326, %s342
      %p344 = scmp.eq.s32.totalorder %s26, 0
      %p345 = por %p343, %p344
      %p346 = scmp.le.s32.totalorder 1, %s20
      %p347 = scmp.lt.s32.totalorder %s20, 3
      %p348 = pnand %p346, %p347
      %p349 = pneg %p348
      // Predicated region
      $region9: #{convlayer.1} parent=5 // pred_check
        _
      $region10: #{convlayer.1} parent=5 // pred_check_branch
        %351 = sbr.rel (%p348) target = $region12
      $region11: #{convlayer.1} parent=5 // pred_region
        %s352 = ssub.s32 %s20, 1
        // Predicated region
        $region13: #{convlayer.1} parent=11 // pred_check
          %p353 = pneg %p81
        $region14: #{convlayer.1} parent=11 // pred_check_branch
          %355 = sbr.rel (%p353) target = $region16
        $region15: #{convlayer.1} parent=11 // pred_region
          _
        $region16: #{convlayer.1} parent=11 // pred_fallthru
          _
        // Predicated region
        $region17: #{convlayer.1} parent=11 // pred_check
          %p356 = pneg %p102
        $region18: #{convlayer.1} parent=11 // pred_check_branch
          %358 = sbr.rel (%p356) target = $region20
        $region19: #{convlayer.1} parent=11 // pred_region
          _
        $region20: #{convlayer.1} parent=11 // pred_fallthru
          _
        // Predicated region
        $region21: #{convlayer.1} parent=11 // pred_check
          %p359 = pneg %p123
        $region22: #{convlayer.1} parent=11 // pred_check_branch
          %361 = sbr.rel (%p359) target = $region24
        $region23: #{convlayer.1} parent=11 // pred_region
          _
        $region24: #{convlayer.1} parent=11 // pred_fallthru
          _
        // Predicated region
        $region25: #{convlayer.1} parent=11 // pred_check
          %p362 = pneg %p144
        $region26: #{convlayer.1} parent=11 // pred_check_branch
          %364 = sbr.rel (%p362) target = $region28
        $region27: #{convlayer.1} parent=11 // pred_region
          _
        $region28: #{convlayer.1} parent=11 // pred_fallthru
          _
        // Predicated region
        $region29: #{convlayer.1} parent=11 // pred_check
          %p365 = pneg %p165
        $region30: #{convlayer.1} parent=11 // pred_check_branch
          %367 = sbr.rel (%p365) target = $region32
        $region31: #{convlayer.1} parent=11 // pred_region
          _
        $region32: #{convlayer.1} parent=11 // pred_fallthru
          _
        // Predicated region
        $region33: #{convlayer.1} parent=11 // pred_check
          %p368 = pneg %p186
        $region34: #{convlayer.1} parent=11 // pred_check_branch
          %370 = sbr.rel (%p368) target = $region36
        $region35: #{convlayer.1} parent=11 // pred_region
          _
        $region36: #{convlayer.1} parent=11 // pred_fallthru
          _
        // Predicated region
        $region37: #{convlayer.1} parent=11 // pred_check
          %p371 = pneg %p207
        $region38: #{convlayer.1} parent=11 // pred_check_branch
          %373 = sbr.rel (%p371) target = $region40
        $region39: #{convlayer.1} parent=11 // pred_region
          _
        $region40: #{convlayer.1} parent=11 // pred_fallthru
          _
        // Predicated region
        $region41: #{convlayer.1} parent=11 // pred_check
          %p374 = pneg %p228
        $region42: #{convlayer.1} parent=11 // pred_check_branch
          %376 = sbr.rel (%p374) target = $region44
        $region43: #{convlayer.1} parent=11 // pred_region
          _
        $region44: #{convlayer.1} parent=11 // pred_fallthru
          _
        // Predicated region
        $region45: #{convlayer.1} parent=11 // pred_check
          %p377 = pneg %p249
        $region46: #{convlayer.1} parent=11 // pred_check_branch
          %379 = sbr.rel (%p377) target = $region48
        $region47: #{convlayer.1} parent=11 // pred_region
          _
        $region48: #{convlayer.1} parent=11 // pred_fallthru
          _
        // Predicated region
        $region49: #{convlayer.1} parent=11 // pred_check
          %p380 = pneg %p270
        $region50: #{convlayer.1} parent=11 // pred_check_branch
          %382 = sbr.rel (%p380) target = $region52
        $region51: #{convlayer.1} parent=11 // pred_region
          _
        $region52: #{convlayer.1} parent=11 // pred_fallthru
          _
        // Predicated region
        $region53: #{convlayer.1} parent=11 // pred_check
          %p383 = pneg %p291
        $region54: #{convlayer.1} parent=11 // pred_check_branch
          %385 = sbr.rel (%p383) target = $region56
        $region55: #{convlayer.1} parent=11 // pred_region
          %s387 = ssub.s32 32768, 32768
          %388 = vsyncadd [#allocation3], %s387
          %s389 = sshll.u32 [#allocation2], 4
          %s390 = int_to_ptr.vmem [resolvable:$true] %s389
          %395 = dma.hbm_to_vmem [thread:$0]  %s11, 32768, %s390, [#allocation3], 512, 512, 32
        $region56: #{convlayer.1} parent=11 // pred_fallthru
          _
        // Predicated region
        $region57: #{convlayer.1} parent=11 // pred_check
          %p396 = pneg %p312
        $region58: #{convlayer.1} parent=11 // pred_check_branch
          %398 = sbr.rel (%p396) target = $region60
        $region59: #{convlayer.1} parent=11 // pred_region
          _
        $region60: #{convlayer.1} parent=11 // pred_fallthru
          _
      $region12: #{convlayer.1} parent=5 // pred_fallthru
        _
      %p399 = scmp.lt.s32.totalorder %s20, 2
      // Predicated region
      $region61: #{convlayer.1} parent=5 // pred_check
        %p400 = pneg %p399
      $region62: #{convlayer.1} parent=5 // pred_check_branch
        %402 = sbr.rel (%p400) target = $region64
      $region63: #{convlayer.1} parent=5 // pred_region
        // Predicated region
        $region65: #{convlayer.1} parent=63 // pred_check
          %p403 = pneg %p54
        $region66: #{convlayer.1} parent=63 // pred_check_branch
          %405 = sbr.rel (%p403) target = $region68
        $region67: #{convlayer.1} parent=63 // pred_region
          %s406 = sadd.s32 %s27, %s28
          %s407 = smul.u32 16, %s406
          %p408 = scmp.lt.s32.totalorder %s407, 31
          %s409 = scalar_select %p408, %s407, 31
          %s410 = smul.addr %s409, 8
          %s411 = scalar_lea.vmem %s0, %s410
          %s412 = sadd.s32 %s27, %s28
          %s413 = smul.u32 16, %s412
        $region68: #{convlayer.1} parent=63 // pred_fallthru
          _
      $region64: #{convlayer.1} parent=5 // pred_fallthru
        _
      %p414 = scmp.le.s32.totalorder 1, %s20
      %p415 = scmp.lt.s32.totalorder %s20, 3
      %p416 = pnand %p414, %p415
      %p417 = pneg %p416
      // Predicated region
      $region69: #{convlayer.1} parent=5 // pred_check
        _
      $region70: #{convlayer.1} parent=5 // pred_check_branch
        %419 = sbr.rel (%p416) target = $region72
      $region71: #{convlayer.1} parent=5 // pred_region
        %s420 = ssub.s32 %s20, 1
        // Predicated region
        $region73: #{convlayer.1} parent=71 // pred_check
          %p421 = pneg %p291
        $region74: #{convlayer.1} parent=71 // pred_check_branch
          %423 = sbr.rel (%p421) target = $region76
        $region75: #{convlayer.1} parent=71 // pred_region
          %424 = dma.done [#allocation3], 32768
        $region76: #{convlayer.1} parent=71 // pred_fallthru
          _
        %s425 = sadd.s32 %s29, %s30
        %s426 = smul.u32 16, %s425
        %p427 = scmp.lt.s32.totalorder %s426, 31
        %s428 = scalar_select %p427, %s426, 31
        %s429 = smul.addr %s428, 8
        %s430 = scalar_lea.vmem %s0, %s429
        %p431 = pneg %p60
        %p432 = pneg %p57
        %p433 = pneg %p81
        %p434 = pneg %p78
        %p435 = pneg %p102
        %p436 = pneg %p99
        %p437 = pneg %p123
        %p438 = pneg %p120
        %p439 = pneg %p144
        %p440 = pneg %p141
        %p441 = pneg %p165
        %p442 = pneg %p162
        %p443 = pneg %p186
        %p444 = pneg %p183
        %p445 = pneg %p207
        %p446 = pneg %p204
        %p447 = pneg %p228
        %p448 = pneg %p225
        %p449 = pneg %p249
        %p450 = pneg %p246
        %p451 = pneg %p270
        %p452 = pneg %p267
        %p453 = pneg %p291
        %p454 = pneg %p288
        %p455 = pneg %p312
        %p456 = pneg %p309
        %p457 = pneg %p338
        %p458 = pneg %p335
        %p459 = scmp.lt.s32.totalorder %s29, 1
        %s460 = scalar_select %p459, %s29, 1
        %s461 = smul.addr %s460, 15
        %s462 = scalar_lea.vmem %s13, %s461
        %s463 = sadd.s32 %s29, %s30
        %s464 = smul.u32 16, %s463
        %p465 = scmp.lt.s32.totalorder %s464, 31
        %s466 = scalar_select %p465, %s464, 31
        %s467 = smul.addr %s466, 8
        %s468 = scalar_lea.vmem %s0, %s467
        %s469 = sadd.s32 %s29, %s30
        %s470 = smul.u32 16, %s469
        %p471 = scmp.lt.s32.totalorder %s29, 1
        %s472 = scalar_select %p471, %s29, 1
        %s473 = smul.addr %s472, 15
        %s474 = scalar_lea.vmem %s13, %s473
        %v476 = vld [vmem:[%s468] sm:$0xff]
        %v477 = vld [vmem:[%s468 + $0x8] sm:$0xff]
        %v478 = vld [vmem:[%s468 + $0x10] sm:$0xff]
        %v479 = vld [vmem:[%s468 + $0x18] sm:$0xff]
        %v480 = vld [vmem:[%s468 + $0x20] sm:$0xff]
        %v481 = vld [vmem:[%s468 + $0x28] sm:$0xff]
        %v482 = vld [vmem:[%s468 + $0x30] sm:$0xff]
        %v483 = vld [vmem:[%s468 + $0x38] sm:$0xff]
        %v484 = vld [vmem:[%s468 + $0x40] sm:$0xff]
        %v485 = vld [vmem:[%s468 + $0x48] sm:$0xff]
        %v486 = vld [vmem:[%s468 + $0x50] sm:$0xff]
        %v487 = vld [vmem:[%s468 + $0x58] sm:$0xff]
        %v488 = vld [vmem:[%s468 + $0x60] sm:$0xff]
        %v489 = vld [vmem:[%s468 + $0x68] sm:$0xff]
        %v490 = vld [vmem:[%s468 + $0x70] sm:$0xff]
        %v491 = vld [vmem:[%s468 + $0x78] sm:$0xff]
        %v492 = vpack.c.bf16 %v477, %v476
        %v493 = vpack.c.bf16 %v479, %v478
        %v494 = vpack.c.bf16 %v481, %v480
        %v495 = vpack.c.bf16 %v483, %v482
        %v496 = vpack.c.bf16 %v485, %v484
        %v497 = vpack.c.bf16 %v487, %v486
        %v498 = vpack.c.bf16 %v489, %v488
        %v499 = vpack.c.bf16 %v491, %v490
        %v500 = vld [vmem:[%s1] sm:$0xf]
        %v501 = vld [vmem:[%s2] sm:$0x1]
        %v503 = vlaneseq
        %v504 = vshrl.u32 %v503, 7
        %v505 = vsub.s32 0, %v504
        %v506 = vrot.slane %v501, %v505
        %vm508 = vcmask 64512
        %v510 = vsel %vm508, %v492, 0
        %v513 = vsel %vm508, %v493, 0
        %v516 = vsel %vm508, %v494, 0
        %v519 = vsel %vm508, %v495, 0
        %v522 = vsel %vm508, %v496, 0
        %v525 = vsel %vm508, %v497, 0
        %v528 = vsel %vm508, %v498, 0
        %v531 = vsel %vm508, %v499, 0
        %vm533 = vcmask 1043456
        %v535 = vsel %vm533, %v500, 0
        %537 = vmatprep.subr.bf16.mxu0 0
        %538 = vmatpush1.bf16.msra.mxu0 %v535
        %539 = vmatprep.subr.bf16.mxu0 0
        %540 = vmatpush1.bf16.msra.mxu0 0
        %541 = vmatprep.subr.bf16.mxu0 0
        %542 = vmatpush1.bf16.msra.mxu0 0
        %543 = vmatprep.subr.bf16.mxu0 0
        %544 = vmatpush1.bf16.msra.mxu0 0
        %545 = vmatprep.subr.bf16.mxu0 0
        %546 = vmatpush1.bf16.msra.mxu0 0
        %547 = vmatprep.subr.bf16.mxu0 0
        %548 = vmatpush1.bf16.msra.mxu0 0
        %549 = vmatprep.subr.bf16.mxu0 0
        %550 = vmatpush1.bf16.msra.mxu0 0
        %551 = vmatprep.subr.bf16.mxu0 0
        %552 = vmatpush1.bf16.msra.mxu0 0
        %553 = vmatprep.subr.bf16.mxu0 0
        %554 = vmatpush1.bf16.msra.mxu0 0
        %555 = vmatprep.subr.bf16.mxu0 0
        %556 = vmatpush1.bf16.msra.mxu0 0
        %557 = vmatprep.subr.bf16.mxu0 0
        %558 = vmatpush1.bf16.msra.mxu0 0
        %559 = vmatprep.subr.bf16.mxu0 0
        %560 = vmatpush1.bf16.msra.mxu0 0
        %561 = vmatprep.subr.bf16.mxu0 0
        %562 = vmatpush1.bf16.msra.mxu0 0
        %563 = vmatprep.subr.bf16.mxu0 0
        %564 = vmatpush1.bf16.msra.mxu0 0
        %565 = vmatprep.subr.bf16.mxu0 0
        %566 = vmatpush1.bf16.msra.mxu0 0
        %567 = vmatprep.subr.bf16.mxu0 0
        %568 = vmatpush1.bf16.msra.mxu0 0
        %569 = vmatprep.mubr.bf16.mxu0 0
        %570 = vmatmul.mubr.bf16.gmra.mrb[0].mxu0 %v510
        %v571 = vpop.f32.mrb[0].mxu0
        %v572 = vadd.f32 %v506, %v571
        %v573 = vpop.f32.mrb[0].mxu0
        %v574 = vpop.f32.mrb[0].mxu0
        %v575 = vadd.f32 %v506, %v574
        %v576 = vpop.f32.mrb[0].mxu0
        %577 = vmatprep.mubr.bf16.mxu0 0
        %578 = vmatmul.mubr.bf16.gmra.mrb[0].mxu0 %v513
        %v579 = vpop.f32.mrb[0].mxu0
        %v580 = vadd.f32 %v506, %v579
        %v581 = vpop.f32.mrb[0].mxu0
        %v582 = vpop.f32.mrb[0].mxu0
        %v583 = vadd.f32 %v506, %v582
        %v584 = vpop.f32.mrb[0].mxu0
        %585 = vmatprep.mubr.bf16.mxu0 0
        %586 = vmatmul.mubr.bf16.gmra.mrb[0].mxu0 %v516
        %v587 = vpop.f32.mrb[0].mxu0
        %v588 = vadd.f32 %v506, %v587
        %v589 = vpop.f32.mrb[0].mxu0
        %v590 = vpop.f32.mrb[0].mxu0
        %v591 = vadd.f32 %v506, %v590
        %v592 = vpop.f32.mrb[0].mxu0
        %593 = vmatprep.mubr.bf16.mxu0 0
        %594 = vmatmul.mubr.bf16.gmra.mrb[0].mxu0 %v519
        %v595 = vpop.f32.mrb[0].mxu0
        %v596 = vadd.f32 %v506, %v595
        %v597 = vpop.f32.mrb[0].mxu0
        %v598 = vpop.f32.mrb[0].mxu0
        %v599 = vadd.f32 %v506, %v598
        %v600 = vpop.f32.mrb[0].mxu0
        %601 = vmatprep.mubr.bf16.mxu0 0
        %602 = vmatmul.mubr.bf16.gmra.mrb[0].mxu0 %v522
        %v603 = vpop.f32.mrb[0].mxu0
        %v604 = vadd.f32 %v506, %v603
        %v605 = vpop.f32.mrb[0].mxu0
        %v606 = vpop.f32.mrb[0].mxu0
        %v607 = vadd.f32 %v506, %v606
        %v608 = vpop.f32.mrb[0].mxu0
        %609 = vmatprep.mubr.bf16.mxu0 0
        %610 = vmatmul.mubr.bf16.gmra.mrb[0].mxu0 %v525
        %v611 = vpop.f32.mrb[0].mxu0
        %v612 = vadd.f32 %v506, %v611
        %v613 = vpop.f32.mrb[0].mxu0
        %v614 = vpop.f32.mrb[0].mxu0
        %v615 = vadd.f32 %v506, %v614
        %v616 = vpop.f32.mrb[0].mxu0
        %617 = vmatprep.mubr.bf16.mxu0 0
        %618 = vmatmul.mubr.bf16.gmra.mrb[0].mxu0 %v528
        %v619 = vpop.f32.mrb[0].mxu0
        %v620 = vadd.f32 %v506, %v619
        %v621 = vpop.f32.mrb[0].mxu0
        %v622 = vpop.f32.mrb[0].mxu0
        %v623 = vadd.f32 %v506, %v622
        %v624 = vpop.f32.mrb[0].mxu0
        %625 = vmatprep.mubr.bf16.mxu0 0
        %626 = vmatmul.mubr.bf16.gmra.mrb[0].mxu0 %v531
        %v627 = vpop.f32.mrb[0].mxu0
        %v628 = vadd.f32 %v506, %v627
        %v629 = vpop.f32.mrb[0].mxu0
        %v630 = vpop.f32.mrb[0].mxu0
        %v631 = vadd.f32 %v506, %v630
        %v632 = vpop.f32.mrb[0].mxu0
        %633 = vdwg.mxu0
        %v634 = vmax.f32 %v572, 0.0
        %v635 = vmax.f32 %v575, 0.0
        %v636 = vmax.f32 %v580, 0.0
        %v637 = vmax.f32 %v583, 0.0
        %v638 = vmax.f32 %v588, 0.0
        %v639 = vmax.f32 %v591, 0.0
        %v640 = vmax.f32 %v596, 0.0
        %v641 = vmax.f32 %v599, 0.0
        %v642 = vmax.f32 %v604, 0.0
        %v643 = vmax.f32 %v607, 0.0
        %v644 = vmax.f32 %v612, 0.0
        %v645 = vmax.f32 %v615, 0.0
        %v646 = vmax.f32 %v620, 0.0
        %v647 = vmax.f32 %v623, 0.0
        %v648 = vmax.f32 %v628, 0.0
        %v649 = vmax.f32 %v631, 0.0
        %v650 = vpack.c.bf16 %v635, %v634
        %v651 = vpack.c.bf16 %v637, %v636
        %v652 = vpack.c.bf16 %v639, %v638
        %v653 = vpack.c.bf16 %v641, %v640
        %v654 = vpack.c.bf16 %v643, %v642
        %v655 = vpack.c.bf16 %v645, %v644
        %v656 = vpack.c.bf16 %v647, %v646
        %v657 = vpack.c.bf16 %v649, %v648
        %v658 = vld [vmem:[%s3] sm:$0xf]
        %v659 = vld [vmem:[%s3 + $0x4] sm:$0xf]
        %v660 = vld [vmem:[%s3 + $0x8] sm:$0xf]
        %v661 = vld [vmem:[%s3 + $0xc] sm:$0xf]
        %v662 = vld [vmem:[%s3 + $0x10] sm:$0xf]
        %v663 = vld [vmem:[%s3 + $0x14] sm:$0xf]
        %v664 = vld [vmem:[%s3 + $0x18] sm:$0xf]
        %v665 = vld [vmem:[%s3 + $0x1c] sm:$0xf]
        %v666 = vld [vmem:[%s4] sm:$0x1]
        %v668 = vlaneseq
        %v669 = vshrl.u32 %v668, 7
        %v670 = vsub.s32 0, %v669
        %v671 = vrot.slane %v666, %v670
        %v681 = vunpack.c.l.b16 %v658
        %v682 = vunpack.c.l.b16 %v659
        %v683 = vunpack.c.l.b16 %v660
        %v684 = vunpack.c.l.b16 %v661
        %v685 = vunpack.c.l.b16 %v662
        %v686 = vunpack.c.l.b16 %v663
        %v687 = vunpack.c.l.b16 %v664
        %v688 = vunpack.c.l.b16 %v665
        %v689 = vpack.c.b16 %v682, %v681
        %v690 = vpack.c.b16 %v684, %v683
        %v691 = vpack.c.b16 %v686, %v685
        %v692 = vpack.c.b16 %v688, %v687
        %vm697 = vcmask 523264
        %v699 = vsel %vm697, %v650, 0
        %v702 = vsel %vm697, %v651, 0
        %v705 = vsel %vm697, %v652, 0
        %v708 = vsel %vm697, %v653, 0
        %v711 = vsel %vm697, %v654, 0
        %v714 = vsel %vm697, %v655, 0
        %v717 = vsel %vm697, %v656, 0
        %v720 = vsel %vm697, %v657, 0
        %722 = vmatprep.subr.bf16.mxu0 0
        %723 = vmatpush1.bf16.msra.mxu0 %v689
        %724 = vmatprep.subr.bf16.mxu0 0
        %725 = vmatpush1.bf16.msra.mxu0 %v690
        %726 = vmatprep.subr.bf16.mxu0 0
        %727 = vmatpush1.bf16.msra.mxu0 %v691
        %728 = vmatprep.subr.bf16.mxu0 0
        %729 = vmatpush1.bf16.msra.mxu0 %v692
        %730 = vmatprep.subr.bf16.mxu0 0
        %731 = vmatpush1.bf16.msra.mxu0 0
        %732 = vmatprep.subr.bf16.mxu0 0
        %733 = vmatpush1.bf16.msra.mxu0 0
        %734 = vmatprep.subr.bf16.mxu0 0
        %735 = vmatpush1.bf16.msra.mxu0 0
        %736 = vmatprep.subr.bf16.mxu0 0
        %737 = vmatpush1.bf16.msra.mxu0 0
        %738 = vmatprep.subr.bf16.mxu0 0
        %739 = vmatpush1.bf16.msra.mxu0 0
        %740 = vmatprep.subr.bf16.mxu0 0
        %741 = vmatpush1.bf16.msra.mxu0 0
        %742 = vmatprep.subr.bf16.mxu0 0
        %743 = vmatpush1.bf16.msra.mxu0 0
        %744 = vmatprep.subr.bf16.mxu0 0
        %745 = vmatpush1.bf16.msra.mxu0 0
        %746 = vmatprep.subr.bf16.mxu0 0
        %747 = vmatpush1.bf16.msra.mxu0 0
        %748 = vmatprep.subr.bf16.mxu0 0
        %749 = vmatpush1.bf16.msra.mxu0 0
        %750 = vmatprep.subr.bf16.mxu0 0
        %751 = vmatpush1.bf16.msra.mxu0 0
        %752 = vmatprep.subr.bf16.mxu0 0
        %753 = vmatpush1.bf16.msra.mxu0 0
        %754 = vmatprep.mubr.bf16.mxu0 0
        %755 = vmatmul.mubr.bf16.gmra.mrb[0].mxu0 %v699
        %v756 = vpop.f32.mrb[0].mxu0
        %v757 = vadd.f32 %v671, %v756
        %v758 = vpop.f32.mrb[0].mxu0
        %v759 = vpop.f32.mrb[0].mxu0
        %v760 = vadd.f32 %v671, %v759
        %v761 = vpop.f32.mrb[0].mxu0
        %762 = vmatprep.mubr.bf16.mxu0 0
        %763 = vmatmul.mubr.bf16.gmra.mrb[0].mxu0 %v702
        %v764 = vpop.f32.mrb[0].mxu0
        %v765 = vadd.f32 %v671, %v764
        %v766 = vpop.f32.mrb[0].mxu0
        %v767 = vpop.f32.mrb[0].mxu0
        %v768 = vadd.f32 %v671, %v767
        %v769 = vpop.f32.mrb[0].mxu0
        %770 = vmatprep.mubr.bf16.mxu0 0
        %771 = vmatmul.mubr.bf16.gmra.mrb[0].mxu0 %v705
        %v772 = vpop.f32.mrb[0].mxu0
        %v773 = vadd.f32 %v671, %v772
        %v774 = vpop.f32.mrb[0].mxu0
        %v775 = vpop.f32.mrb[0].mxu0
        %v776 = vadd.f32 %v671, %v775
        %v777 = vpop.f32.mrb[0].mxu0
        %778 = vmatprep.mubr.bf16.mxu0 0
        %779 = vmatmul.mubr.bf16.gmra.mrb[0].mxu0 %v708
        %v780 = vpop.f32.mrb[0].mxu0
        %v781 = vadd.f32 %v671, %v780
        %v782 = vpop.f32.mrb[0].mxu0
        %v783 = vpop.f32.mrb[0].mxu0
        %v784 = vadd.f32 %v671, %v783
        %v785 = vpop.f32.mrb[0].mxu0
        %786 = vmatprep.mubr.bf16.mxu0 0
        %787 = vmatmul.mubr.bf16.gmra.mrb[0].mxu0 %v711
        %v788 = vpop.f32.mrb[0].mxu0
        %v789 = vadd.f32 %v671, %v788
        %v790 = vpop.f32.mrb[0].mxu0
        %v791 = vpop.f32.mrb[0].mxu0
        %v792 = vadd.f32 %v671, %v791
        %v793 = vpop.f32.mrb[0].mxu0
        %794 = vmatprep.mubr.bf16.mxu0 0
        %795 = vmatmul.mubr.bf16.gmra.mrb[0].mxu0 %v714
        %v796 = vpop.f32.mrb[0].mxu0
        %v797 = vadd.f32 %v671, %v796
        %v798 = vpop.f32.mrb[0].mxu0
        %v799 = vpop.f32.mrb[0].mxu0
        %v800 = vadd.f32 %v671, %v799
        %v801 = vpop.f32.mrb[0].mxu0
        %802 = vmatprep.mubr.bf16.mxu0 0
        %803 = vmatmul.mubr.bf16.gmra.mrb[0].mxu0 %v717
        %v804 = vpop.f32.mrb[0].mxu0
        %v805 = vadd.f32 %v671, %v804
        %v806 = vpop.f32.mrb[0].mxu0
        %v807 = vpop.f32.mrb[0].mxu0
        %v808 = vadd.f32 %v671, %v807
        %v809 = vpop.f32.mrb[0].mxu0
        %810 = vmatprep.mubr.bf16.mxu0 0
        %811 = vmatmul.mubr.bf16.gmra.mrb[0].mxu0 %v720
        %v812 = vpop.f32.mrb[0].mxu0
        %v813 = vadd.f32 %v671, %v812
        %v814 = vpop.f32.mrb[0].mxu0
        %v815 = vpop.f32.mrb[0].mxu0
        %v816 = vadd.f32 %v671, %v815
        %v817 = vpop.f32.mrb[0].mxu0
        %818 = vdwg.mxu0
        %v819 = vmax.f32 %v757, 0.0
        %v820 = vmax.f32 %v760, 0.0
        %v821 = vmax.f32 %v765, 0.0
        %v822 = vmax.f32 %v768, 0.0
        %v823 = vmax.f32 %v773, 0.0
        %v824 = vmax.f32 %v776, 0.0
        %v825 = vmax.f32 %v781, 0.0
        %v826 = vmax.f32 %v784, 0.0
        %v827 = vmax.f32 %v789, 0.0
        %v828 = vmax.f32 %v792, 0.0
        %v829 = vmax.f32 %v797, 0.0
        %v830 = vmax.f32 %v800, 0.0
        %v831 = vmax.f32 %v805, 0.0
        %v832 = vmax.f32 %v808, 0.0
        %v833 = vmax.f32 %v813, 0.0
        %v834 = vmax.f32 %v816, 0.0
        %v835 = vpack.c.bf16 %v820, %v819
        %v836 = vpack.c.bf16 %v822, %v821
        %v837 = vpack.c.bf16 %v824, %v823
        %v838 = vpack.c.bf16 %v826, %v825
        %v839 = vpack.c.bf16 %v828, %v827
        %v840 = vpack.c.bf16 %v830, %v829
        %v841 = vpack.c.bf16 %v832, %v831
        %v842 = vpack.c.bf16 %v834, %v833
        %v843 = vld [vmem:[%s5] sm:$0xf]
        %v844 = vld [vmem:[%s5 + $0x4] sm:$0xf]
        %v845 = vld [vmem:[%s5 + $0x8] sm:$0xf]
        %v846 = vld [vmem:[%s5 + $0xc] sm:$0xf]
        %v847 = vld [vmem:[%s5 + $0x10] sm:$0xf]
        %v848 = vld [vmem:[%s5 + $0x14] sm:$0xf]
        %v849 = vld [vmem:[%s5 + $0x18] sm:$0xf]
        %v850 = vld [vmem:[%s5 + $0x1c] sm:$0xf]
        %v851 = vld [vmem:[%s6] sm:$0x1]
        %v853 = vlaneseq
        %v854 = vshrl.u32 %v853, 7
        %v855 = vsub.s32 0, %v854
        %v856 = vrot.slane %v851, %v855
        %v866 = vunpack.c.l.b16 %v843
        %v867 = vunpack.c.l.b16 %v844
        %v868 = vunpack.c.l.b16 %v845
        %v869 = vunpack.c.l.b16 %v846
        %v870 = vunpack.c.l.b16 %v847
        %v871 = vunpack.c.l.b16 %v848
        %v872 = vunpack.c.l.b16 %v849
        %v873 = vunpack.c.l.b16 %v850
        %v874 = vpack.c.b16 %v867, %v866
        %v875 = vpack.c.b16 %v869, %v868
        %v876 = vpack.c.b16 %v871, %v870
        %v877 = vpack.c.b16 %v873, %v872
        %v883 = vsel %vm697, %v835, 0
        %v886 = vsel %vm697, %v836, 0
        %v889 = vsel %vm697, %v837, 0
        %v892 = vsel %vm697, %v838, 0
        %v895 = vsel %vm697, %v839, 0
        %v898 = vsel %vm697, %v840, 0
        %v901 = vsel %vm697, %v841, 0
        %v904 = vsel %vm697, %v842, 0
        %906 = vmatprep.subr.bf16.mxu0 0
        %907 = vmatpush1.bf16.msra.mxu0 %v874
        %908 = vmatprep.subr.bf16.mxu0 0
        %909 = vmatpush1.bf16.msra.mxu0 %v875
        %910 = vmatprep.subr.bf16.mxu0 0
        %911 = vmatpush1.bf16.msra.mxu0 %v876
        %912 = vmatprep.subr.bf16.mxu0 0
        %913 = vmatpush1.bf16.msra.mxu0 %v877
        %914 = vmatprep.subr.bf16.mxu0 0
        %915 = vmatpush1.bf16.msra.mxu0 0
        %916 = vmatprep.subr.bf16.mxu0 0
        %917 = vmatpush1.bf16.msra.mxu0 0
        %918 = vmatprep.subr.bf16.mxu0 0
        %919 = vmatpush1.bf16.msra.mxu0 0
        %920 = vmatprep.subr.bf16.mxu0 0
        %921 = vmatpush1.bf16.msra.mxu0 0
        %922 = vmatprep.subr.bf16.mxu0 0
        %923 = vmatpush1.bf16.msra.mxu0 0
        %924 = vmatprep.subr.bf16.mxu0 0
        %925 = vmatpush1.bf16.msra.mxu0 0
        %926 = vmatprep.subr.bf16.mxu0 0
        %927 = vmatpush1.bf16.msra.mxu0 0
        %928 = vmatprep.subr.bf16.mxu0 0
        %929 = vmatpush1.bf16.msra.mxu0 0
        %930 = vmatprep.subr.bf16.mxu0 0
        %931 = vmatpush1.bf16.msra.mxu0 0
        %932 = vmatprep.subr.bf16.mxu0 0
        %933 = vmatpush1.bf16.msra.mxu0 0
        %934 = vmatprep.subr.bf16.mxu0 0
        %935 = vmatpush1.bf16.msra.mxu0 0
        %936 = vmatprep.subr.bf16.mxu0 0
        %937 = vmatpush1.bf16.msra.mxu0 0
        %938 = vmatprep.mubr.bf16.mxu0 0
        %939 = vmatmul.mubr.bf16.gmra.mrb[0].mxu0 %v883
        %v940 = vpop.f32.mrb[0].mxu0
        %v941 = vadd.f32 %v856, %v940
        %v942 = vpop.f32.mrb[0].mxu0
        %v943 = vpop.f32.mrb[0].mxu0
        %v944 = vadd.f32 %v856, %v943
        %v945 = vpop.f32.mrb[0].mxu0
        %946 = vmatprep.mubr.bf16.mxu0 0
        %947 = vmatmul.mubr.bf16.gmra.mrb[0].mxu0 %v886
        %v948 = vpop.f32.mrb[0].mxu0
        %v949 = vadd.f32 %v856, %v948
        %v950 = vpop.f32.mrb[0].mxu0
        %v951 = vpop.f32.mrb[0].mxu0
        %v952 = vadd.f32 %v856, %v951
        %v953 = vpop.f32.mrb[0].mxu0
        %954 = vmatprep.mubr.bf16.mxu0 0
        %955 = vmatmul.mubr.bf16.gmra.mrb[0].mxu0 %v889
        %v956 = vpop.f32.mrb[0].mxu0
        %v957 = vadd.f32 %v856, %v956
        %v958 = vpop.f32.mrb[0].mxu0
        %v959 = vpop.f32.mrb[0].mxu0
        %v960 = vadd.f32 %v856, %v959
        %v961 = vpop.f32.mrb[0].mxu0
        %962 = vmatprep.mubr.bf16.mxu0 0
        %963 = vmatmul.mubr.bf16.gmra.mrb[0].mxu0 %v892
        %v964 = vpop.f32.mrb[0].mxu0
        %v965 = vadd.f32 %v856, %v964
        %v966 = vpop.f32.mrb[0].mxu0
        %v967 = vpop.f32.mrb[0].mxu0
        %v968 = vadd.f32 %v856, %v967
        %v969 = vpop.f32.mrb[0].mxu0
        %970 = vmatprep.mubr.bf16.mxu0 0
        %971 = vmatmul.mubr.bf16.gmra.mrb[0].mxu0 %v895
        %v972 = vpop.f32.mrb[0].mxu0
        %v973 = vadd.f32 %v856, %v972
        %v974 = vpop.f32.mrb[0].mxu0
        %v975 = vpop.f32.mrb[0].mxu0
        %v976 = vadd.f32 %v856, %v975
        %v977 = vpop.f32.mrb[0].mxu0
        %978 = vmatprep.mubr.bf16.mxu0 0
        %979 = vmatmul.mubr.bf16.gmra.mrb[0].mxu0 %v898
        %v980 = vpop.f32.mrb[0].mxu0
        %v981 = vadd.f32 %v856, %v980
        %v982 = vpop.f32.mrb[0].mxu0
        %v983 = vpop.f32.mrb[0].mxu0
        %v984 = vadd.f32 %v856, %v983
        %v985 = vpop.f32.mrb[0].mxu0
        %986 = vmatprep.mubr.bf16.mxu0 0
        %987 = vmatmul.mubr.bf16.gmra.mrb[0].mxu0 %v901
        %v988 = vpop.f32.mrb[0].mxu0
        %v989 = vadd.f32 %v856, %v988
        %v990 = vpop.f32.mrb[0].mxu0
        %v991 = vpop.f32.mrb[0].mxu0
        %v992 = vadd.f32 %v856, %v991
        %v993 = vpop.f32.mrb[0].mxu0
        %994 = vmatprep.mubr.bf16.mxu0 0
        %995 = vmatmul.mubr.bf16.gmra.mrb[0].mxu0 %v904
        %v996 = vpop.f32.mrb[0].mxu0
        %v997 = vadd.f32 %v856, %v996
        %v998 = vpop.f32.mrb[0].mxu0
        %v999 = vpop.f32.mrb[0].mxu0
        %v1000 = vadd.f32 %v856, %v999
        %v1001 = vpop.f32.mrb[0].mxu0
        %1002 = vdwg.mxu0
        %v1003 = vmax.f32 %v941, 0.0
        %v1004 = vmax.f32 %v944, 0.0
        %v1005 = vmax.f32 %v949, 0.0
        %v1006 = vmax.f32 %v952, 0.0
        %v1007 = vmax.f32 %v957, 0.0
        %v1008 = vmax.f32 %v960, 0.0
        %v1009 = vmax.f32 %v965, 0.0
        %v1010 = vmax.f32 %v968, 0.0
        %v1011 = vmax.f32 %v973, 0.0
        %v1012 = vmax.f32 %v976, 0.0
        %v1013 = vmax.f32 %v981, 0.0
        %v1014 = vmax.f32 %v984, 0.0
        %v1015 = vmax.f32 %v989, 0.0
        %v1016 = vmax.f32 %v992, 0.0
        %v1017 = vmax.f32 %v997, 0.0
        %v1018 = vmax.f32 %v1000, 0.0
        %v1019 = vmax.f32 %v1003, %v1007
        %v1020 = vmax.f32 %v1004, %v1008
        %v1021 = vmax.f32 %v1005, %v1009
        %v1022 = vmax.f32 %v1006, %v1010
        %v1023 = vmax.f32 %v1019, %v1011
        %v1024 = vmax.f32 %v1020, %v1012
        %v1025 = vmax.f32 %v1021, %v1013
        %v1026 = vmax.f32 %v1022, %v1014
        %v1027 = vmax.f32 %v1023, %v1015
        %v1028 = vmax.f32 %v1024, %v1016
        %v1029 = vmax.f32 %v1025, %v1017
        %v1030 = vmax.f32 %v1026, %v1018
        %v1031 = vmax.f32 %v1027, %v1028
        %v1032 = vmax.f32 %v1029, %v1030
        %v1033 = vmax.f32 %v1031, %v1032
        %v1034 = vrot.slane %v1033, 4
        %v1035 = vmax.f32 %v1033, %v1034
        %v1036 = vrot.slane %v1035, 2
        %v1037 = vmax.f32 %v1035, %v1036
        %v1038 = vrot.slane %v1037, 1
        %v1039 = vmax.f32 %v1037, %v1038
        %v1040 = vpack.c.bf16 %v1004, %v1003
        %v1041 = vpack.c.bf16 %v1006, %v1005
        %v1042 = vpack.c.bf16 %v1008, %v1007
        %v1043 = vpack.c.bf16 %v1010, %v1009
        %v1044 = vpack.c.bf16 %v1012, %v1011
        %v1045 = vpack.c.bf16 %v1014, %v1013
        %v1046 = vpack.c.bf16 %v1016, %v1015
        %v1047 = vpack.c.bf16 %v1018, %v1017
        %v1048 = vld [vmem:[%s7] sm:$0xff]
        %v1049 = vld [vmem:[%s7 + $0x8] sm:$0xff]
        %v1050 = vld [vmem:[%s7 + $0x10] sm:$0xff]
        %v1051 = vld [vmem:[%s7 + $0x18] sm:$0xff]
        %v1052 = vld [vmem:[%s7 + $0x20] sm:$0xff]
        %v1053 = vld [vmem:[%s7 + $0x28] sm:$0xff]
        %v1054 = vld [vmem:[%s7 + $0x30] sm:$0xff]
        %v1055 = vld [vmem:[%s7 + $0x38] sm:$0xff]
        %v1056 = vld [vmem:[%s7 + $0x40] sm:$0xff]
        %v1057 = vld [vmem:[%s7 + $0x48] sm:$0xff]
        %v1058 = vld [vmem:[%s7 + $0x50] sm:$0xff]
        %v1059 = vld [vmem:[%s7 + $0x58] sm:$0xff]
        %v1060 = vld [vmem:[%s7 + $0x60] sm:$0xff]
        %v1061 = vld [vmem:[%s7 + $0x68] sm:$0xff]
        %v1062 = vld [vmem:[%s7 + $0x70] sm:$0xff]
        %v1063 = vld [vmem:[%s7 + $0x78] sm:$0xff]
        %v1064 = vld [vmem:[%s8] sm:$0x3]
        %v1066 = vlaneseq
        %v1067 = vshrl.u32 %v1066, 7
        %v1068 = vsub.s32 0, %v1067
        %v1069 = vrot.slane %v1064, %v1068
        %v1070 = vlaneseq
        %v1071 = vshrl.u32 %v1070, 7
        %v1072 = vsub.s32 1, %v1071
        %v1073 = vrot.slane %v1064, %v1072
        %v1092 = vunpack.c.l.b16 %v1048
        %v1093 = vunpack.c.h.b16 %v1048
        %v1094 = vunpack.c.l.b16 %v1049
        %v1095 = vunpack.c.h.b16 %v1049
        %v1096 = vunpack.c.l.b16 %v1050
        %v1097 = vunpack.c.h.b16 %v1050
        %v1098 = vunpack.c.l.b16 %v1051
        %v1099 = vunpack.c.h.b16 %v1051
        %v1100 = vunpack.c.l.b16 %v1052
        %v1101 = vunpack.c.h.b16 %v1052
        %v1102 = vunpack.c.l.b16 %v1053
        %v1103 = vunpack.c.h.b16 %v1053
        %v1104 = vunpack.c.l.b16 %v1054
        %v1105 = vunpack.c.h.b16 %v1054
        %v1106 = vunpack.c.l.b16 %v1055
        %v1107 = vunpack.c.h.b16 %v1055
        %v1108 = vunpack.c.l.b16 %v1056
        %v1109 = vunpack.c.h.b16 %v1056
        %v1110 = vunpack.c.l.b16 %v1057
        %v1111 = vunpack.c.h.b16 %v1057
        %v1112 = vunpack.c.l.b16 %v1058
        %v1113 = vunpack.c.h.b16 %v1058
        %v1114 = vunpack.c.l.b16 %v1059
        %v1115 = vunpack.c.h.b16 %v1059
        %v1116 = vunpack.c.l.b16 %v1060
        %v1117 = vunpack.c.h.b16 %v1060
        %v1118 = vunpack.c.l.b16 %v1061
        %v1119 = vunpack.c.h.b16 %v1061
        %v1120 = vunpack.c.l.b16 %v1062
        %v1121 = vunpack.c.h.b16 %v1062
        %v1122 = vunpack.c.l.b16 %v1063
        %v1123 = vunpack.c.h.b16 %v1063
        %v1124 = vpack.c.b16 %v1094, %v1092
        %v1125 = vpack.c.b16 %v1095, %v1093
        %v1126 = vpack.c.b16 %v1098, %v1096
        %v1127 = vpack.c.b16 %v1099, %v1097
        %v1128 = vpack.c.b16 %v1102, %v1100
        %v1129 = vpack.c.b16 %v1103, %v1101
        %v1130 = vpack.c.b16 %v1106, %v1104
        %v1131 = vpack.c.b16 %v1107, %v1105
        %v1132 = vpack.c.b16 %v1110, %v1108
        %v1133 = vpack.c.b16 %v1111, %v1109
        %v1134 = vpack.c.b16 %v1114, %v1112
        %v1135 = vpack.c.b16 %v1115, %v1113
        %v1136 = vpack.c.b16 %v1118, %v1116
        %v1137 = vpack.c.b16 %v1119, %v1117
        %v1138 = vpack.c.b16 %v1122, %v1120
        %v1139 = vpack.c.b16 %v1123, %v1121
        %1156 = vmatprep.subr.bf16.mxu0 %v1125
        %1157 = vmatpush1.bf16.msra.mxu0 %v1124
        %1158 = vmatprep.subr.bf16.mxu0 %v1127
        %1159 = vmatpush1.bf16.msra.mxu0 %v1126
        %1160 = vmatprep.subr.bf16.mxu0 %v1129
        %1161 = vmatpush1.bf16.msra.mxu0 %v1128
        %1162 = vmatprep.subr.bf16.mxu0 %v1131
        %1163 = vmatpush1.bf16.msra.mxu0 %v1130
        %1164 = vmatprep.subr.bf16.mxu0 %v1133
        %1165 = vmatpush1.bf16.msra.mxu0 %v1132
        %1166 = vmatprep.subr.bf16.mxu0 %v1135
        %1167 = vmatpush1.bf16.msra.mxu0 %v1134
        %1168 = vmatprep.subr.bf16.mxu0 %v1137
        %1169 = vmatpush1.bf16.msra.mxu0 %v1136
        %1170 = vmatprep.subr.bf16.mxu0 %v1139
        %1171 = vmatpush1.bf16.msra.mxu0 %v1138
        %1172 = vmatprep.subr.bf16.mxu0 0
        %1173 = vmatpush1.bf16.msra.mxu0 0
        %1174 = vmatprep.subr.bf16.mxu0 0
        %1175 = vmatpush1.bf16.msra.mxu0 0
        %1176 = vmatprep.subr.bf16.mxu0 0
        %1177 = vmatpush1.bf16.msra.mxu0 0
        %1178 = vmatprep.subr.bf16.mxu0 0
        %1179 = vmatpush1.bf16.msra.mxu0 0
        %1180 = vmatprep.subr.bf16.mxu0 0
        %1181 = vmatpush1.bf16.msra.mxu0 0
        %1182 = vmatprep.subr.bf16.mxu0 0
        %1183 = vmatpush1.bf16.msra.mxu0 0
        %1184 = vmatprep.subr.bf16.mxu0 0
        %1185 = vmatpush1.bf16.msra.mxu0 0
        %1186 = vmatprep.subr.bf16.mxu0 0
        %1187 = vmatpush1.bf16.msra.mxu0 0
        %1188 = vmatprep.mubr.bf16.mxu0 0
        %1189 = vmatmul.mubr.bf16.gmra.mrb[0].mxu0 %v1040
        %v1190 = vpop.f32.mrb[0].mxu0
        %v1191 = vadd.f32 %v1069, %v1190
        %v1192 = vpop.f32.mrb[0].mxu0
        %v1193 = vadd.f32 %v1073, %v1192
        %v1194 = vpop.f32.mrb[0].mxu0
        %v1195 = vadd.f32 %v1069, %v1194
        %v1196 = vpop.f32.mrb[0].mxu0
        %v1197 = vadd.f32 %v1073, %v1196
        %1198 = vmatprep.mubr.bf16.mxu0 0
        %1199 = vmatmul.mubr.bf16.gmra.mrb[0].mxu0 %v1041
        %v1200 = vpop.f32.mrb[0].mxu0
        %v1201 = vadd.f32 %v1069, %v1200
        %v1202 = vpop.f32.mrb[0].mxu0
        %v1203 = vadd.f32 %v1073, %v1202
        %v1204 = vpop.f32.mrb[0].mxu0
        %v1205 = vadd.f32 %v1069, %v1204
        %v1206 = vpop.f32.mrb[0].mxu0
        %v1207 = vadd.f32 %v1073, %v1206
        %1208 = vmatprep.mubr.bf16.mxu0 0
        %1209 = vmatmul.mubr.bf16.gmra.mrb[0].mxu0 %v1042
        %v1210 = vpop.f32.mrb[0].mxu0
        %v1211 = vadd.f32 %v1069, %v1210
        %v1212 = vpop.f32.mrb[0].mxu0
        %v1213 = vadd.f32 %v1073, %v1212
        %v1214 = vpop.f32.mrb[0].mxu0
        %v1215 = vadd.f32 %v1069, %v1214
        %v1216 = vpop.f32.mrb[0].mxu0
        %v1217 = vadd.f32 %v1073, %v1216
        %1218 = vmatprep.mubr.bf16.mxu0 0
        %1219 = vmatmul.mubr.bf16.gmra.mrb[0].mxu0 %v1043
        %v1220 = vpop.f32.mrb[0].mxu0
        %v1221 = vadd.f32 %v1069, %v1220
        %v1222 = vpop.f32.mrb[0].mxu0
        %v1223 = vadd.f32 %v1073, %v1222
        %v1224 = vpop.f32.mrb[0].mxu0
        %v1225 = vadd.f32 %v1069, %v1224
        %v1226 = vpop.f32.mrb[0].mxu0
        %v1227 = vadd.f32 %v1073, %v1226
        %1228 = vmatprep.mubr.bf16.mxu0 0
        %1229 = vmatmul.mubr.bf16.gmra.mrb[0].mxu0 %v1044
        %v1230 = vpop.f32.mrb[0].mxu0
        %v1231 = vadd.f32 %v1069, %v1230
        %v1232 = vpop.f32.mrb[0].mxu0
        %v1233 = vadd.f32 %v1073, %v1232
        %v1234 = vpop.f32.mrb[0].mxu0
        %v1235 = vadd.f32 %v1069, %v1234
        %v1236 = vpop.f32.mrb[0].mxu0
        %v1237 = vadd.f32 %v1073, %v1236
        %1238 = vmatprep.mubr.bf16.mxu0 0
        %1239 = vmatmul.mubr.bf16.gmra.mrb[0].mxu0 %v1045
        %v1240 = vpop.f32.mrb[0].mxu0
        %v1241 = vadd.f32 %v1069, %v1240
        %v1242 = vpop.f32.mrb[0].mxu0
        %v1243 = vadd.f32 %v1073, %v1242
        %v1244 = vpop.f32.mrb[0].mxu0
        %v1245 = vadd.f32 %v1069, %v1244
        %v1246 = vpop.f32.mrb[0].mxu0
        %v1247 = vadd.f32 %v1073, %v1246
        %1248 = vmatprep.mubr.bf16.mxu0 0
        %1249 = vmatmul.mubr.bf16.gmra.mrb[0].mxu0 %v1046
        %v1250 = vpop.f32.mrb[0].mxu0
        %v1251 = vadd.f32 %v1069, %v1250
        %v1252 = vpop.f32.mrb[0].mxu0
        %v1253 = vadd.f32 %v1073, %v1252
        %v1254 = vpop.f32.mrb[0].mxu0
        %v1255 = vadd.f32 %v1069, %v1254
        %v1256 = vpop.f32.mrb[0].mxu0
        %v1257 = vadd.f32 %v1073, %v1256
        %1258 = vmatprep.mubr.bf16.mxu0 0
        %1259 = vmatmul.mubr.bf16.gmra.mrb[0].mxu0 %v1047
        %v1260 = vpop.f32.mrb[0].mxu0
        %v1261 = vadd.f32 %v1069, %v1260
        %v1262 = vpop.f32.mrb[0].mxu0
        %v1263 = vadd.f32 %v1073, %v1262
        %v1264 = vpop.f32.mrb[0].mxu0
        %v1265 = vadd.f32 %v1069, %v1264
        %v1266 = vpop.f32.mrb[0].mxu0
        %v1267 = vadd.f32 %v1073, %v1266
        %1268 = vdwg.mxu0
        %v1269 = vmax.f32 %v1191, 0.0
        %v1270 = vmax.f32 %v1193, 0.0
        %v1271 = vmax.f32 %v1195, 0.0
        %v1272 = vmax.f32 %v1197, 0.0
        %v1273 = vmax.f32 %v1201, 0.0
        %v1274 = vmax.f32 %v1203, 0.0
        %v1275 = vmax.f32 %v1205, 0.0
        %v1276 = vmax.f32 %v1207, 0.0
        %v1277 = vmax.f32 %v1211, 0.0
        %v1278 = vmax.f32 %v1213, 0.0
        %v1279 = vmax.f32 %v1215, 0.0
        %v1280 = vmax.f32 %v1217, 0.0
        %v1281 = vmax.f32 %v1221, 0.0
        %v1282 = vmax.f32 %v1223, 0.0
        %v1283 = vmax.f32 %v1225, 0.0
        %v1284 = vmax.f32 %v1227, 0.0
        %v1285 = vmax.f32 %v1231, 0.0
        %v1286 = vmax.f32 %v1233, 0.0
        %v1287 = vmax.f32 %v1235, 0.0
        %v1288 = vmax.f32 %v1237, 0.0
        %v1289 = vmax.f32 %v1241, 0.0
        %v1290 = vmax.f32 %v1243, 0.0
        %v1291 = vmax.f32 %v1245, 0.0
        %v1292 = vmax.f32 %v1247, 0.0
        %v1293 = vmax.f32 %v1251, 0.0
        %v1294 = vmax.f32 %v1253, 0.0
        %v1295 = vmax.f32 %v1255, 0.0
        %v1296 = vmax.f32 %v1257, 0.0
        %v1297 = vmax.f32 %v1261, 0.0
        %v1298 = vmax.f32 %v1263, 0.0
        %v1299 = vmax.f32 %v1265, 0.0
        %v1300 = vmax.f32 %v1267, 0.0
        %v1301 = vmax.f32 %v1269, %v1273
        %v1302 = vmax.f32 %v1271, %v1275
        %v1303 = vmax.f32 %v1301, %v1277
        %v1304 = vmax.f32 %v1302, %v1279
        %v1305 = vmax.f32 %v1303, %v1281
        %v1306 = vmax.f32 %v1304, %v1283
        %v1307 = vmax.f32 %v1305, %v1285
        %v1308 = vmax.f32 %v1306, %v1287
        %v1309 = vmax.f32 %v1307, %v1289
        %v1310 = vmax.f32 %v1308, %v1291
        %v1311 = vmax.f32 %v1309, %v1293
        %v1312 = vmax.f32 %v1310, %v1295
        %v1313 = vmax.f32 %v1311, %v1297
        %v1314 = vmax.f32 %v1312, %v1299
        %v1315 = vmax.f32 %v1313, %v1314
        %v1316 = vrot.slane %v1315, 4
        %v1317 = vmax.f32 %v1315, %v1316
        %v1318 = vrot.slane %v1317, 2
        %v1319 = vmax.f32 %v1317, %v1318
        %v1320 = vrot.slane %v1319, 1
        %v1321 = vmax.f32 %v1319, %v1320
        %v1322 = vmax.f32 %v1270, %v1274
        %v1323 = vmax.f32 %v1272, %v1276
        %v1324 = vmax.f32 %v1322, %v1278
        %v1325 = vmax.f32 %v1323, %v1280
        %v1326 = vmax.f32 %v1324, %v1282
        %v1327 = vmax.f32 %v1325, %v1284
        %v1328 = vmax.f32 %v1326, %v1286
        %v1329 = vmax.f32 %v1327, %v1288
        %v1330 = vmax.f32 %v1328, %v1290
        %v1331 = vmax.f32 %v1329, %v1292
        %v1332 = vmax.f32 %v1330, %v1294
        %v1333 = vmax.f32 %v1331, %v1296
        %v1334 = vmax.f32 %v1332, %v1298
        %v1335 = vmax.f32 %v1333, %v1300
        %v1336 = vmax.f32 %v1334, %v1335
        %v1337 = vrot.slane %v1336, 4
        %v1338 = vmax.f32 %v1336, %v1337
        %v1339 = vrot.slane %v1338, 2
        %v1340 = vmax.f32 %v1338, %v1339
        %v1341 = vrot.slane %v1340, 1
        %v1342 = vmax.f32 %v1340, %v1341
        %v1343 = vpack.c.bf16 %v1271, %v1269
        %v1344 = vpack.c.bf16 %v1272, %v1270
        %v1345 = vpack.c.bf16 %v1275, %v1273
        %v1346 = vpack.c.bf16 %v1276, %v1274
        %v1347 = vpack.c.bf16 %v1279, %v1277
        %v1348 = vpack.c.bf16 %v1280, %v1278
        %v1349 = vpack.c.bf16 %v1283, %v1281
        %v1350 = vpack.c.bf16 %v1284, %v1282
        %v1351 = vpack.c.bf16 %v1287, %v1285
        %v1352 = vpack.c.bf16 %v1288, %v1286
        %v1353 = vpack.c.bf16 %v1291, %v1289
        %v1354 = vpack.c.bf16 %v1292, %v1290
        %v1355 = vpack.c.bf16 %v1295, %v1293
        %v1356 = vpack.c.bf16 %v1296, %v1294
        %v1357 = vpack.c.bf16 %v1299, %v1297
        %v1358 = vpack.c.bf16 %v1300, %v1298
        %v1359 = vld [vmem:[%s9] sm:$0xff]
        %v1360 = vld [vmem:[%s9 + $0x8] sm:$0xff]
        %v1361 = vld [vmem:[%s9 + $0x10] sm:$0xff]
        %v1362 = vld [vmem:[%s9 + $0x18] sm:$0xff]
        %v1363 = vld [vmem:[%s9 + $0x20] sm:$0xff]
        %v1364 = vld [vmem:[%s9 + $0x28] sm:$0xff]
        %v1365 = vld [vmem:[%s9 + $0x30] sm:$0xff]
        %v1366 = vld [vmem:[%s9 + $0x38] sm:$0xff]
        %v1367 = vld [vmem:[%s9 + $0x40] sm:$0xff]
        %v1368 = vld [vmem:[%s9 + $0x48] sm:$0xff]
        %v1369 = vld [vmem:[%s9 + $0x50] sm:$0xff]
        %v1370 = vld [vmem:[%s9 + $0x58] sm:$0xff]
        %v1371 = vld [vmem:[%s9 + $0x60] sm:$0xff]
        %v1372 = vld [vmem:[%s9 + $0x68] sm:$0xff]
        %v1373 = vld [vmem:[%s9 + $0x70] sm:$0xff]
        %v1374 = vld [vmem:[%s9 + $0x78] sm:$0xff]
        %v1375 = vld [vmem:[%s9 + $0x80] sm:$0xff]
        %v1376 = vld [vmem:[%s9 + $0x88] sm:$0xff]
        %v1377 = vld [vmem:[%s9 + $0x90] sm:$0xff]
        %v1378 = vld [vmem:[%s9 + $0x98] sm:$0xff]
        %v1379 = vld [vmem:[%s9 + $0xa0] sm:$0xff]
        %v1380 = vld [vmem:[%s9 + $0xa8] sm:$0xff]
        %v1381 = vld [vmem:[%s9 + $0xb0] sm:$0xff]
        %v1382 = vld [vmem:[%s9 + $0xb8] sm:$0xff]
        %v1383 = vld [vmem:[%s9 + $0xc0] sm:$0xff]
        %v1384 = vld [vmem:[%s9 + $0xc8] sm:$0xff]
        %v1385 = vld [vmem:[%s9 + $0xd0] sm:$0xff]
        %v1386 = vld [vmem:[%s9 + $0xd8] sm:$0xff]
        %v1387 = vld [vmem:[%s9 + $0xe0] sm:$0xff]
        %v1388 = vld [vmem:[%s9 + $0xe8] sm:$0xff]
        %v1389 = vld [vmem:[%s9 + $0xf0] sm:$0xff]
        %v1390 = vld [vmem:[%s9 + $0xf8] sm:$0xff]
        %v1391 = vld [vmem:[%s9 + $0x100] sm:$0xff]
        %v1392 = vld [vmem:[%s9 + $0x108] sm:$0xff]
        %v1393 = vld [vmem:[%s9 + $0x110] sm:$0xff]
        %v1394 = vld [vmem:[%s9 + $0x118] sm:$0xff]
        %v1395 = vld [vmem:[%s9 + $0x120] sm:$0xff]
        %v1396 = vld [vmem:[%s9 + $0x128] sm:$0xff]
        %v1397 = vld [vmem:[%s9 + $0x130] sm:$0xff]
        %v1398 = vld [vmem:[%s9 + $0x138] sm:$0xff]
        %v1399 = vld [vmem:[%s9 + $0x140] sm:$0xff]
        %v1400 = vld [vmem:[%s9 + $0x148] sm:$0xff]
        %v1401 = vld [vmem:[%s9 + $0x150] sm:$0xff]
        %v1402 = vld [vmem:[%s9 + $0x158] sm:$0xff]
        %v1403 = vld [vmem:[%s9 + $0x160] sm:$0xff]
        %v1404 = vld [vmem:[%s9 + $0x168] sm:$0xff]
        %v1405 = vld [vmem:[%s9 + $0x170] sm:$0xff]
        %v1406 = vld [vmem:[%s9 + $0x178] sm:$0xff]
        %v1407 = vld [vmem:[%s9 + $0x180] sm:$0xff]
        %v1408 = vld [vmem:[%s9 + $0x188] sm:$0xff]
        %v1409 = vld [vmem:[%s9 + $0x190] sm:$0xff]
        %v1410 = vld [vmem:[%s9 + $0x198] sm:$0xff]
        %v1411 = vld [vmem:[%s9 + $0x1a0] sm:$0xff]
        %v1412 = vld [vmem:[%s9 + $0x1a8] sm:$0xff]
        %v1413 = vld [vmem:[%s9 + $0x1b0] sm:$0xff]
        %v1414 = vld [vmem:[%s9 + $0x1b8] sm:$0xff]
        %v1415 = vld [vmem:[%s9 + $0x1c0] sm:$0xff]
        %v1416 = vld [vmem:[%s9 + $0x1c8] sm:$0xff]
        %v1417 = vld [vmem:[%s9 + $0x1d0] sm:$0xff]
        %v1418 = vld [vmem:[%s9 + $0x1d8] sm:$0xff]
        %v1419 = vld [vmem:[%s9 + $0x1e0] sm:$0xff]
        %v1420 = vld [vmem:[%s9 + $0x1e8] sm:$0xff]
        %v1421 = vld [vmem:[%s9 + $0x1f0] sm:$0xff]
        %v1422 = vld [vmem:[%s9 + $0x1f8] sm:$0xff]
        %v1423 = vld [vmem:[%s10] sm:$0xf]
        %v1425 = vlaneseq
        %v1426 = vshrl.u32 %v1425, 7
        %v1427 = vsub.s32 0, %v1426
        %v1428 = vrot.slane %v1423, %v1427
        %v1429 = vlaneseq
        %v1430 = vshrl.u32 %v1429, 7
        %v1431 = vsub.s32 1, %v1430
        %v1432 = vrot.slane %v1423, %v1431
        %v1433 = vlaneseq
        %v1434 = vshrl.u32 %v1433, 7
        %v1435 = vsub.s32 2, %v1434
        %v1436 = vrot.slane %v1423, %v1435
        %v1437 = vlaneseq
        %v1438 = vshrl.u32 %v1437, 7
        %v1439 = vsub.s32 3, %v1438
        %v1440 = vrot.slane %v1423, %v1439
        %v1509 = vunpack.c.l.b16 %v1359
        %v1510 = vunpack.c.h.b16 %v1359
        %v1511 = vunpack.c.l.b16 %v1360
        %v1512 = vunpack.c.h.b16 %v1360
        %v1513 = vunpack.c.l.b16 %v1361
        %v1514 = vunpack.c.h.b16 %v1361
        %v1515 = vunpack.c.l.b16 %v1362
        %v1516 = vunpack.c.h.b16 %v1362
        %v1517 = vunpack.c.l.b16 %v1363
        %v1518 = vunpack.c.h.b16 %v1363
        %v1519 = vunpack.c.l.b16 %v1364
        %v1520 = vunpack.c.h.b16 %v1364
        %v1521 = vunpack.c.l.b16 %v1365
        %v1522 = vunpack.c.h.b16 %v1365
        %v1523 = vunpack.c.l.b16 %v1366
        %v1524 = vunpack.c.h.b16 %v1366
        %v1525 = vunpack.c.l.b16 %v1367
        %v1526 = vunpack.c.h.b16 %v1367
        %v1527 = vunpack.c.l.b16 %v1368
        %v1528 = vunpack.c.h.b16 %v1368
        %v1529 = vunpack.c.l.b16 %v1369
        %v1530 = vunpack.c.h.b16 %v1369
        %v1531 = vunpack.c.l.b16 %v1370
        %v1532 = vunpack.c.h.b16 %v1370
        %v1533 = vunpack.c.l.b16 %v1371
        %v1534 = vunpack.c.h.b16 %v1371
        %v1535 = vunpack.c.l.b16 %v1372
        %v1536 = vunpack.c.h.b16 %v1372
        %v1537 = vunpack.c.l.b16 %v1373
        %v1538 = vunpack.c.h.b16 %v1373
        %v1539 = vunpack.c.l.b16 %v1374
        %v1540 = vunpack.c.h.b16 %v1374
        %v1541 = vunpack.c.l.b16 %v1375
        %v1542 = vunpack.c.h.b16 %v1375
        %v1543 = vunpack.c.l.b16 %v1376
        %v1544 = vunpack.c.h.b16 %v1376
        %v1545 = vunpack.c.l.b16 %v1377
        %v1546 = vunpack.c.h.b16 %v1377
        %v1547 = vunpack.c.l.b16 %v1378
        %v1548 = vunpack.c.h.b16 %v1378
        %v1549 = vunpack.c.l.b16 %v1379
        %v1550 = vunpack.c.h.b16 %v1379
        %v1551 = vunpack.c.l.b16 %v1380
        %v1552 = vunpack.c.h.b16 %v1380
        %v1553 = vunpack.c.l.b16 %v1381
        %v1554 = vunpack.c.h.b16 %v1381
        %v1555 = vunpack.c.l.b16 %v1382
        %v1556 = vunpack.c.h.b16 %v1382
        %v1557 = vunpack.c.l.b16 %v1383
        %v1558 = vunpack.c.h.b16 %v1383
        %v1559 = vunpack.c.l.b16 %v1384
        %v1560 = vunpack.c.h.b16 %v1384
        %v1561 = vunpack.c.l.b16 %v1385
        %v1562 = vunpack.c.h.b16 %v1385
        %v1563 = vunpack.c.l.b16 %v1386
        %v1564 = vunpack.c.h.b16 %v1386
        %v1565 = vunpack.c.l.b16 %v1387
        %v1566 = vunpack.c.h.b16 %v1387
        %v1567 = vunpack.c.l.b16 %v1388
        %v1568 = vunpack.c.h.b16 %v1388
        %v1569 = vunpack.c.l.b16 %v1389
        %v1570 = vunpack.c.h.b16 %v1389
        %v1571 = vunpack.c.l.b16 %v1390
        %v1572 = vunpack.c.h.b16 %v1390
        %v1573 = vunpack.c.l.b16 %v1391
        %v1574 = vunpack.c.h.b16 %v1391
        %v1575 = vunpack.c.l.b16 %v1392
        %v1576 = vunpack.c.h.b16 %v1392
        %v1577 = vunpack.c.l.b16 %v1393
        %v1578 = vunpack.c.h.b16 %v1393
        %v1579 = vunpack.c.l.b16 %v1394
        %v1580 = vunpack.c.h.b16 %v1394
        %v1581 = vunpack.c.l.b16 %v1395
        %v1582 = vunpack.c.h.b16 %v1395
        %v1583 = vunpack.c.l.b16 %v1396
        %v1584 = vunpack.c.h.b16 %v1396
        %v1585 = vunpack.c.l.b16 %v1397
        %v1586 = vunpack.c.h.b16 %v1397
        %v1587 = vunpack.c.l.b16 %v1398
        %v1588 = vunpack.c.h.b16 %v1398
        %v1589 = vunpack.c.l.b16 %v1399
        %v1590 = vunpack.c.h.b16 %v1399
        %v1591 = vunpack.c.l.b16 %v1400
        %v1592 = vunpack.c.h.b16 %v1400
        %v1593 = vunpack.c.l.b16 %v1401
        %v1594 = vunpack.c.h.b16 %v1401
        %v1595 = vunpack.c.l.b16 %v1402
        %v1596 = vunpack.c.h.b16 %v1402
        %v1597 = vunpack.c.l.b16 %v1403
        %v1598 = vunpack.c.h.b16 %v1403
        %v1599 = vunpack.c.l.b16 %v1404
        %v1600 = vunpack.c.h.b16 %v1404
        %v1601 = vunpack.c.l.b16 %v1405
        %v1602 = vunpack.c.h.b16 %v1405
        %v1603 = vunpack.c.l.b16 %v1406
        %v1604 = vunpack.c.h.b16 %v1406
        %v1605 = vunpack.c.l.b16 %v1407
        %v1606 = vunpack.c.h.b16 %v1407
        %v1607 = vunpack.c.l.b16 %v1408
        %v1608 = vunpack.c.h.b16 %v1408
        %v1609 = vunpack.c.l.b16 %v1409
        %v1610 = vunpack.c.h.b16 %v1409
        %v1611 = vunpack.c.l.b16 %v1410
        %v1612 = vunpack.c.h.b16 %v1410
        %v1613 = vunpack.c.l.b16 %v1411
        %v1614 = vunpack.c.h.b16 %v1411
        %v1615 = vunpack.c.l.b16 %v1412
        %v1616 = vunpack.c.h.b16 %v1412
        %v1617 = vunpack.c.l.b16 %v1413
        %v1618 = vunpack.c.h.b16 %v1413
        %v1619 = vunpack.c.l.b16 %v1414
        %v1620 = vunpack.c.h.b16 %v1414
        %v1621 = vunpack.c.l.b16 %v1415
        %v1622 = vunpack.c.h.b16 %v1415
        %v1623 = vunpack.c.l.b16 %v1416
        %v1624 = vunpack.c.h.b16 %v1416
        %v1625 = vunpack.c.l.b16 %v1417
        %v1626 = vunpack.c.h.b16 %v1417
        %v1627 = vunpack.c.l.b16 %v1418
        %v1628 = vunpack.c.h.b16 %v1418
        %v1629 = vunpack.c.l.b16 %v1419
        %v1630 = vunpack.c.h.b16 %v1419
        %v1631 = vunpack.c.l.b16 %v1420
        %v1632 = vunpack.c.h.b16 %v1420
        %v1633 = vunpack.c.l.b16 %v1421
        %v1634 = vunpack.c.h.b16 %v1421
        %v1635 = vunpack.c.l.b16 %v1422
        %v1636 = vunpack.c.h.b16 %v1422
        %v1637 = vpack.c.b16 %v1513, %v1509
        %v1638 = vpack.c.b16 %v1514, %v1510
        %v1639 = vpack.c.b16 %v1515, %v1511
        %v1640 = vpack.c.b16 %v1516, %v1512
        %v1641 = vpack.c.b16 %v1521, %v1517
        %v1642 = vpack.c.b16 %v1522, %v1518
        %v1643 = vpack.c.b16 %v1523, %v1519
        %v1644 = vpack.c.b16 %v1524, %v1520
        %v1645 = vpack.c.b16 %v1529, %v1525
        %v1646 = vpack.c.b16 %v1530, %v1526
        %v1647 = vpack.c.b16 %v1531, %v1527
        %v1648 = vpack.c.b16 %v1532, %v1528
        %v1649 = vpack.c.b16 %v1537, %v1533
        %v1650 = vpack.c.b16 %v1538, %v1534
        %v1651 = vpack.c.b16 %v1539, %v1535
        %v1652 = vpack.c.b16 %v1540, %v1536
        %v1653 = vpack.c.b16 %v1545, %v1541
        %v1654 = vpack.c.b16 %v1546, %v1542
        %v1655 = vpack.c.b16 %v1547, %v1543
        %v1656 = vpack.c.b16 %v1548, %v1544
        %v1657 = vpack.c.b16 %v1553, %v1549
        %v1658 = vpack.c.b16 %v1554, %v1550
        %v1659 = vpack.c.b16 %v1555, %v1551
        %v1660 = vpack.c.b16 %v1556, %v1552
        %v1661 = vpack.c.b16 %v1561, %v1557
        %v1662 = vpack.c.b16 %v1562, %v1558
        %v1663 = vpack.c.b16 %v1563, %v1559
        %v1664 = vpack.c.b16 %v1564, %v1560
        %v1665 = vpack.c.b16 %v1569, %v1565
        %v1666 = vpack.c.b16 %v1570, %v1566
        %v1667 = vpack.c.b16 %v1571, %v1567
        %v1668 = vpack.c.b16 %v1572, %v1568
        %v1669 = vpack.c.b16 %v1577, %v1573
        %v1670 = vpack.c.b16 %v1578, %v1574
        %v1671 = vpack.c.b16 %v1579, %v1575
        %v1672 = vpack.c.b16 %v1580, %v1576
        %v1673 = vpack.c.b16 %v1585, %v1581
        %v1674 = vpack.c.b16 %v1586, %v1582
        %v1675 = vpack.c.b16 %v1587, %v1583
        %v1676 = vpack.c.b16 %v1588, %v1584
        %v1677 = vpack.c.b16 %v1593, %v1589
        %v1678 = vpack.c.b16 %v1594, %v1590
        %v1679 = vpack.c.b16 %v1595, %v1591
        %v1680 = vpack.c.b16 %v1596, %v1592
        %v1681 = vpack.c.b16 %v1601, %v1597
        %v1682 = vpack.c.b16 %v1602, %v1598
        %v1683 = vpack.c.b16 %v1603, %v1599
        %v1684 = vpack.c.b16 %v1604, %v1600
        %v1685 = vpack.c.b16 %v1609, %v1605
        %v1686 = vpack.c.b16 %v1610, %v1606
        %v1687 = vpack.c.b16 %v1611, %v1607
        %v1688 = vpack.c.b16 %v1612, %v1608
        %v1689 = vpack.c.b16 %v1617, %v1613
        %v1690 = vpack.c.b16 %v1618, %v1614
        %v1691 = vpack.c.b16 %v1619, %v1615
        %v1692 = vpack.c.b16 %v1620, %v1616
        %v1693 = vpack.c.b16 %v1625, %v1621
        %v1694 = vpack.c.b16 %v1626, %v1622
        %v1695 = vpack.c.b16 %v1627, %v1623
        %v1696 = vpack.c.b16 %v1628, %v1624
        %v1697 = vpack.c.b16 %v1633, %v1629
        %v1698 = vpack.c.b16 %v1634, %v1630
        %v1699 = vpack.c.b16 %v1635, %v1631
        %v1700 = vpack.c.b16 %v1636, %v1632
        %1765 = vmatprep.subr.bf16.mxu0 %v1638
        %1766 = vmatpush1.bf16.msra.mxu0 %v1637
        %1767 = vmatprep.subr.bf16.mxu0 %v1642
        %1768 = vmatpush1.bf16.msra.mxu0 %v1641
        %1769 = vmatprep.subr.bf16.mxu0 %v1646
        %1770 = vmatpush1.bf16.msra.mxu0 %v1645
        %1771 = vmatprep.subr.bf16.mxu0 %v1650
        %1772 = vmatpush1.bf16.msra.mxu0 %v1649
        %1773 = vmatprep.subr.bf16.mxu0 %v1654
        %1774 = vmatpush1.bf16.msra.mxu0 %v1653
        %1775 = vmatprep.subr.bf16.mxu0 %v1658
        %1776 = vmatpush1.bf16.msra.mxu0 %v1657
        %1777 = vmatprep.subr.bf16.mxu0 %v1662
        %1778 = vmatpush1.bf16.msra.mxu0 %v1661
        %1779 = vmatprep.subr.bf16.mxu0 %v1666
        %1780 = vmatpush1.bf16.msra.mxu0 %v1665
        %1781 = vmatprep.subr.bf16.mxu0 %v1670
        %1782 = vmatpush1.bf16.msra.mxu0 %v1669
        %1783 = vmatprep.subr.bf16.mxu0 %v1674
        %1784 = vmatpush1.bf16.msra.mxu0 %v1673
        %1785 = vmatprep.subr.bf16.mxu0 %v1678
        %1786 = vmatpush1.bf16.msra.mxu0 %v1677
        %1787 = vmatprep.subr.bf16.mxu0 %v1682
        %1788 = vmatpush1.bf16.msra.mxu0 %v1681
        %1789 = vmatprep.subr.bf16.mxu0 %v1686
        %1790 = vmatpush1.bf16.msra.mxu0 %v1685
        %1791 = vmatprep.subr.bf16.mxu0 %v1690
        %1792 = vmatpush1.bf16.msra.mxu0 %v1689
        %1793 = vmatprep.subr.bf16.mxu0 %v1694
        %1794 = vmatpush1.bf16.msra.mxu0 %v1693
        %1795 = vmatprep.subr.bf16.mxu0 %v1698
        %1796 = vmatpush1.bf16.msra.mxu0 %v1697
        %1797 = vmatprep.mubr.bf16.mxu0 %v1344
        %1798 = vmatmul.mubr.bf16.gmra.mrb[0].mxu0 %v1343
        %v1799 = vpop.f32.mrb[0].mxu0
        %v1800 = vadd.f32 %v1428, %v1799
        %v1801 = vpop.f32.mrb[0].mxu0
        %v1802 = vadd.f32 %v1432, %v1801
        %v1803 = vpop.f32.mrb[0].mxu0
        %v1804 = vadd.f32 %v1428, %v1803
        %v1805 = vpop.f32.mrb[0].mxu0
        %v1806 = vadd.f32 %v1432, %v1805
        %1807 = vmatprep.mubr.bf16.mxu0 %v1346
        %1808 = vmatmul.mubr.bf16.gmra.mrb[0].mxu0 %v1345
        %v1809 = vpop.f32.mrb[0].mxu0
        %v1810 = vadd.f32 %v1428, %v1809
        %v1811 = vpop.f32.mrb[0].mxu0
        %v1812 = vadd.f32 %v1432, %v1811
        %v1813 = vpop.f32.mrb[0].mxu0
        %v1814 = vadd.f32 %v1428, %v1813
        %v1815 = vpop.f32.mrb[0].mxu0
        %v1816 = vadd.f32 %v1432, %v1815
        %1817 = vmatprep.mubr.bf16.mxu0 %v1348
        %1818 = vmatmul.mubr.bf16.gmra.mrb[0].mxu0 %v1347
        %v1819 = vpop.f32.mrb[0].mxu0
        %v1820 = vadd.f32 %v1428, %v1819
        %v1821 = vpop.f32.mrb[0].mxu0
        %v1822 = vadd.f32 %v1432, %v1821
        %v1823 = vpop.f32.mrb[0].mxu0
        %v1824 = vadd.f32 %v1428, %v1823
        %v1825 = vpop.f32.mrb[0].mxu0
        %v1826 = vadd.f32 %v1432, %v1825
        %1827 = vmatprep.mubr.bf16.mxu0 %v1350
        %1828 = vmatmul.mubr.bf16.gmra.mrb[0].mxu0 %v1349
        %v1829 = vpop.f32.mrb[0].mxu0
        %v1830 = vadd.f32 %v1428, %v1829
        %v1831 = vpop.f32.mrb[0].mxu0
        %v1832 = vadd.f32 %v1432, %v1831
        %v1833 = vpop.f32.mrb[0].mxu0
        %v1834 = vadd.f32 %v1428, %v1833
        %v1835 = vpop.f32.mrb[0].mxu0
        %v1836 = vadd.f32 %v1432, %v1835
        %1837 = vmatprep.mubr.bf16.mxu0 %v1352
        %1838 = vmatmul.mubr.bf16.gmra.mrb[0].mxu0 %v1351
        %v1839 = vpop.f32.mrb[0].mxu0
        %v1840 = vadd.f32 %v1428, %v1839
        %v1841 = vpop.f32.mrb[0].mxu0
        %v1842 = vadd.f32 %v1432, %v1841
        %v1843 = vpop.f32.mrb[0].mxu0
        %v1844 = vadd.f32 %v1428, %v1843
        %v1845 = vpop.f32.mrb[0].mxu0
        %v1846 = vadd.f32 %v1432, %v1845
        %1847 = vmatprep.mubr.bf16.mxu0 %v1354
        %1848 = vmatmul.mubr.bf16.gmra.mrb[0].mxu0 %v1353
        %v1849 = vpop.f32.mrb[0].mxu0
        %v1850 = vadd.f32 %v1428, %v1849
        %v1851 = vpop.f32.mrb[0].mxu0
        %v1852 = vadd.f32 %v1432, %v1851
        %v1853 = vpop.f32.mrb[0].mxu0
        %v1854 = vadd.f32 %v1428, %v1853
        %v1855 = vpop.f32.mrb[0].mxu0
        %v1856 = vadd.f32 %v1432, %v1855
        %1857 = vmatprep.mubr.bf16.mxu0 %v1356
        %1858 = vmatmul.mubr.bf16.gmra.mrb[0].mxu0 %v1355
        %v1859 = vpop.f32.mrb[0].mxu0
        %v1860 = vadd.f32 %v1428, %v1859
        %v1861 = vpop.f32.mrb[0].mxu0
        %v1862 = vadd.f32 %v1432, %v1861
        %v1863 = vpop.f32.mrb[0].mxu0
        %v1864 = vadd.f32 %v1428, %v1863
        %v1865 = vpop.f32.mrb[0].mxu0
        %v1866 = vadd.f32 %v1432, %v1865
        %1867 = vmatprep.mubr.bf16.mxu0 %v1358
        %1868 = vmatmul.mubr.bf16.gmra.mrb[0].mxu0 %v1357
        %v1869 = vpop.f32.mrb[0].mxu0
        %v1870 = vadd.f32 %v1428, %v1869
        %v1871 = vpop.f32.mrb[0].mxu0
        %v1872 = vadd.f32 %v1432, %v1871
        %v1873 = vpop.f32.mrb[0].mxu0
        %v1874 = vadd.f32 %v1428, %v1873
        %v1875 = vpop.f32.mrb[0].mxu0
        %v1876 = vadd.f32 %v1432, %v1875
        %1877 = vdwg.mxu0
        %1878 = vmatprep.subr.bf16.mxu0 %v1640
        %1879 = vmatpush1.bf16.msra.mxu0 %v1639
        %1880 = vmatprep.subr.bf16.mxu0 %v1644
        %1881 = vmatpush1.bf16.msra.mxu0 %v1643
        %1882 = vmatprep.subr.bf16.mxu0 %v1648
        %1883 = vmatpush1.bf16.msra.mxu0 %v1647
        %1884 = vmatprep.subr.bf16.mxu0 %v1652
        %1885 = vmatpush1.bf16.msra.mxu0 %v1651
        %1886 = vmatprep.subr.bf16.mxu0 %v1656
        %1887 = vmatpush1.bf16.msra.mxu0 %v1655
        %1888 = vmatprep.subr.bf16.mxu0 %v1660
        %1889 = vmatpush1.bf16.msra.mxu0 %v1659
        %1890 = vmatprep.subr.bf16.mxu0 %v1664
        %1891 = vmatpush1.bf16.msra.mxu0 %v1663
        %1892 = vmatprep.subr.bf16.mxu0 %v1668
        %1893 = vmatpush1.bf16.msra.mxu0 %v1667
        %1894 = vmatprep.subr.bf16.mxu0 %v1672
        %1895 = vmatpush1.bf16.msra.mxu0 %v1671
        %1896 = vmatprep.subr.bf16.mxu0 %v1676
        %1897 = vmatpush1.bf16.msra.mxu0 %v1675
        %1898 = vmatprep.subr.bf16.mxu0 %v1680
        %1899 = vmatpush1.bf16.msra.mxu0 %v1679
        %1900 = vmatprep.subr.bf16.mxu0 %v1684
        %1901 = vmatpush1.bf16.msra.mxu0 %v1683
        %1902 = vmatprep.subr.bf16.mxu0 %v1688
        %1903 = vmatpush1.bf16.msra.mxu0 %v1687
        %1904 = vmatprep.subr.bf16.mxu0 %v1692
        %1905 = vmatpush1.bf16.msra.mxu0 %v1691
        %1906 = vmatprep.subr.bf16.mxu0 %v1696
        %1907 = vmatpush1.bf16.msra.mxu0 %v1695
        %1908 = vmatprep.subr.bf16.mxu0 %v1700
        %1909 = vmatpush1.bf16.msra.mxu0 %v1699
        %1910 = vmatprep.mubr.bf16.mxu0 %v1344
        %1911 = vmatmul.mubr.bf16.gmra.mrb[0].mxu0 %v1343
        %v1912 = vpop.f32.mrb[0].mxu0
        %v1913 = vadd.f32 %v1436, %v1912
        %v1914 = vpop.f32.mrb[0].mxu0
        %v1915 = vadd.f32 %v1440, %v1914
        %v1916 = vpop.f32.mrb[0].mxu0
        %v1917 = vadd.f32 %v1436, %v1916
        %v1918 = vpop.f32.mrb[0].mxu0
        %v1919 = vadd.f32 %v1440, %v1918
        %1920 = vmatprep.mubr.bf16.mxu0 %v1346
        %1921 = vmatmul.mubr.bf16.gmra.mrb[0].mxu0 %v1345
        %v1922 = vpop.f32.mrb[0].mxu0
        %v1923 = vadd.f32 %v1436, %v1922
        %v1924 = vpop.f32.mrb[0].mxu0
        %v1925 = vadd.f32 %v1440, %v1924
        %v1926 = vpop.f32.mrb[0].mxu0
        %v1927 = vadd.f32 %v1436, %v1926
        %v1928 = vpop.f32.mrb[0].mxu0
        %v1929 = vadd.f32 %v1440, %v1928
        %1930 = vmatprep.mubr.bf16.mxu0 %v1348
        %1931 = vmatmul.mubr.bf16.gmra.mrb[0].mxu0 %v1347
        %v1932 = vpop.f32.mrb[0].mxu0
        %v1933 = vadd.f32 %v1436, %v1932
        %v1934 = vpop.f32.mrb[0].mxu0
        %v1935 = vadd.f32 %v1440, %v1934
        %v1936 = vpop.f32.mrb[0].mxu0
        %v1937 = vadd.f32 %v1436, %v1936
        %v1938 = vpop.f32.mrb[0].mxu0
        %v1939 = vadd.f32 %v1440, %v1938
        %1940 = vmatprep.mubr.bf16.mxu0 %v1350
        %1941 = vmatmul.mubr.bf16.gmra.mrb[0].mxu0 %v1349
        %v1942 = vpop.f32.mrb[0].mxu0
        %v1943 = vadd.f32 %v1436, %v1942
        %v1944 = vpop.f32.mrb[0].mxu0
        %v1945 = vadd.f32 %v1440, %v1944
        %v1946 = vpop.f32.mrb[0].mxu0
        %v1947 = vadd.f32 %v1436, %v1946
        %v1948 = vpop.f32.mrb[0].mxu0
        %v1949 = vadd.f32 %v1440, %v1948
        %1950 = vmatprep.mubr.bf16.mxu0 %v1352
        %1951 = vmatmul.mubr.bf16.gmra.mrb[0].mxu0 %v1351
        %v1952 = vpop.f32.mrb[0].mxu0
        %v1953 = vadd.f32 %v1436, %v1952
        %v1954 = vpop.f32.mrb[0].mxu0
        %v1955 = vadd.f32 %v1440, %v1954
        %v1956 = vpop.f32.mrb[0].mxu0
        %v1957 = vadd.f32 %v1436, %v1956
        %v1958 = vpop.f32.mrb[0].mxu0
        %v1959 = vadd.f32 %v1440, %v1958
        %1960 = vmatprep.mubr.bf16.mxu0 %v1354
        %1961 = vmatmul.mubr.bf16.gmra.mrb[0].mxu0 %v1353
        %v1962 = vpop.f32.mrb[0].mxu0
        %v1963 = vadd.f32 %v1436, %v1962
        %v1964 = vpop.f32.mrb[0].mxu0
        %v1965 = vadd.f32 %v1440, %v1964
        %v1966 = vpop.f32.mrb[0].mxu0
        %v1967 = vadd.f32 %v1436, %v1966
        %v1968 = vpop.f32.mrb[0].mxu0
        %v1969 = vadd.f32 %v1440, %v1968
        %1970 = vmatprep.mubr.bf16.mxu0 %v1356
        %1971 = vmatmul.mubr.bf16.gmra.mrb[0].mxu0 %v1355
        %v1972 = vpop.f32.mrb[0].mxu0
        %v1973 = vadd.f32 %v1436, %v1972
        %v1974 = vpop.f32.mrb[0].mxu0
        %v1975 = vadd.f32 %v1440, %v1974
        %v1976 = vpop.f32.mrb[0].mxu0
        %v1977 = vadd.f32 %v1436, %v1976
        %v1978 = vpop.f32.mrb[0].mxu0
        %v1979 = vadd.f32 %v1440, %v1978
        %1980 = vmatprep.mubr.bf16.mxu0 %v1358
        %1981 = vmatmul.mubr.bf16.gmra.mrb[0].mxu0 %v1357
        %v1982 = vpop.f32.mrb[0].mxu0
        %v1983 = vadd.f32 %v1436, %v1982
        %v1984 = vpop.f32.mrb[0].mxu0
        %v1985 = vadd.f32 %v1440, %v1984
        %v1986 = vpop.f32.mrb[0].mxu0
        %v1987 = vadd.f32 %v1436, %v1986
        %v1988 = vpop.f32.mrb[0].mxu0
        %v1989 = vadd.f32 %v1440, %v1988
        %1990 = vdwg.mxu0
        %v1991 = vmax.f32 %v1800, 0.0
        %v1992 = vmax.f32 %v1802, 0.0
        %v1993 = vmax.f32 %v1913, 0.0
        %v1994 = vmax.f32 %v1915, 0.0
        %v1995 = vmax.f32 %v1804, 0.0
        %v1996 = vmax.f32 %v1806, 0.0
        %v1997 = vmax.f32 %v1917, 0.0
        %v1998 = vmax.f32 %v1919, 0.0
        %v1999 = vmax.f32 %v1810, 0.0
        %v2000 = vmax.f32 %v1812, 0.0
        %v2001 = vmax.f32 %v1923, 0.0
        %v2002 = vmax.f32 %v1925, 0.0
        %v2003 = vmax.f32 %v1814, 0.0
        %v2004 = vmax.f32 %v1816, 0.0
        %v2005 = vmax.f32 %v1927, 0.0
        %v2006 = vmax.f32 %v1929, 0.0
        %v2007 = vmax.f32 %v1820, 0.0
        %v2008 = vmax.f32 %v1822, 0.0
        %v2009 = vmax.f32 %v1933, 0.0
        %v2010 = vmax.f32 %v1935, 0.0
        %v2011 = vmax.f32 %v1824, 0.0
        %v2012 = vmax.f32 %v1826, 0.0
        %v2013 = vmax.f32 %v1937, 0.0
        %v2014 = vmax.f32 %v1939, 0.0
        %v2015 = vmax.f32 %v1830, 0.0
        %v2016 = vmax.f32 %v1832, 0.0
        %v2017 = vmax.f32 %v1943, 0.0
        %v2018 = vmax.f32 %v1945, 0.0
        %v2019 = vmax.f32 %v1834, 0.0
        %v2020 = vmax.f32 %v1836, 0.0
        %v2021 = vmax.f32 %v1947, 0.0
        %v2022 = vmax.f32 %v1949, 0.0
        %v2023 = vmax.f32 %v1840, 0.0
        %v2024 = vmax.f32 %v1842, 0.0
        %v2025 = vmax.f32 %v1953, 0.0
        %v2026 = vmax.f32 %v1955, 0.0
        %v2027 = vmax.f32 %v1844, 0.0
        %v2028 = vmax.f32 %v1846, 0.0
        %v2029 = vmax.f32 %v1957, 0.0
        %v2030 = vmax.f32 %v1959, 0.0
        %v2031 = vmax.f32 %v1850, 0.0
        %v2032 = vmax.f32 %v1852, 0.0
        %v2033 = vmax.f32 %v1963, 0.0
        %v2034 = vmax.f32 %v1965, 0.0
        %v2035 = vmax.f32 %v1854, 0.0
        %v2036 = vmax.f32 %v1856, 0.0
        %v2037 = vmax.f32 %v1967, 0.0
        %v2038 = vmax.f32 %v1969, 0.0
        %v2039 = vmax.f32 %v1860, 0.0
        %v2040 = vmax.f32 %v1862, 0.0
        %v2041 = vmax.f32 %v1973, 0.0
        %v2042 = vmax.f32 %v1975, 0.0
        %v2043 = vmax.f32 %v1864, 0.0
        %v2044 = vmax.f32 %v1866, 0.0
        %v2045 = vmax.f32 %v1977, 0.0
        %v2046 = vmax.f32 %v1979, 0.0
        %v2047 = vmax.f32 %v1870, 0.0
        %v2048 = vmax.f32 %v1872, 0.0
        %v2049 = vmax.f32 %v1983, 0.0
        %v2050 = vmax.f32 %v1985, 0.0
        %v2051 = vmax.f32 %v1874, 0.0
        %v2052 = vmax.f32 %v1876, 0.0
        %v2053 = vmax.f32 %v1987, 0.0
        %v2054 = vmax.f32 %v1989, 0.0
        %v2055 = vmax.f32 %v1991, %v1995
        %v2056 = vmax.f32 %v2055, %v1999
        %v2057 = vmax.f32 %v2056, %v2003
        %v2058 = vmax.f32 %v2057, %v2007
        %v2059 = vmax.f32 %v2058, %v2011
        %v2060 = vmax.f32 %v2059, %v2015
        %v2061 = vmax.f32 %v2060, %v2019
        %v2062 = vmax.f32 %v2061, %v2023
        %v2063 = vmax.f32 %v2062, %v2027
        %v2064 = vmax.f32 %v2063, %v2031
        %v2065 = vmax.f32 %v2064, %v2035
        %v2066 = vmax.f32 %v2065, %v2039
        %v2067 = vmax.f32 %v2066, %v2043
        %v2068 = vmax.f32 %v2067, %v2047
        %v2069 = vmax.f32 %v2068, %v2051
        %v2070 = vrot.slane %v2069, 4
        %v2071 = vmax.f32 %v2069, %v2070
        %v2072 = vrot.slane %v2071, 2
        %v2073 = vmax.f32 %v2071, %v2072
        %v2074 = vrot.slane %v2073, 1
        %v2075 = vmax.f32 %v2073, %v2074
        %v2076 = vmax.f32 %v1992, %v1996
        %v2077 = vmax.f32 %v2076, %v2000
        %v2078 = vmax.f32 %v2077, %v2004
        %v2079 = vmax.f32 %v2078, %v2008
        %v2080 = vmax.f32 %v2079, %v2012
        %v2081 = vmax.f32 %v2080, %v2016
        %v2082 = vmax.f32 %v2081, %v2020
        %v2083 = vmax.f32 %v2082, %v2024
        %v2084 = vmax.f32 %v2083, %v2028
        %v2085 = vmax.f32 %v2084, %v2032
        %v2086 = vmax.f32 %v2085, %v2036
        %v2087 = vmax.f32 %v2086, %v2040
        %v2088 = vmax.f32 %v2087, %v2044
        %v2089 = vmax.f32 %v2088, %v2048
        %v2090 = vmax.f32 %v2089, %v2052
        %v2091 = vrot.slane %v2090, 4
        %v2092 = vmax.f32 %v2090, %v2091
        %v2093 = vrot.slane %v2092, 2
        %v2094 = vmax.f32 %v2092, %v2093
        %v2095 = vrot.slane %v2094, 1
        %v2096 = vmax.f32 %v2094, %v2095
        %v2097 = vmax.f32 %v1993, %v1997
        %v2098 = vmax.f32 %v2097, %v2001
        %v2099 = vmax.f32 %v2098, %v2005
        %v2100 = vmax.f32 %v2099, %v2009
        %v2101 = vmax.f32 %v2100, %v2013
        %v2102 = vmax.f32 %v2101, %v2017
        %v2103 = vmax.f32 %v2102, %v2021
        %v2104 = vmax.f32 %v2103, %v2025
        %v2105 = vmax.f32 %v2104, %v2029
        %v2106 = vmax.f32 %v2105, %v2033
        %v2107 = vmax.f32 %v2106, %v2037
        %v2108 = vmax.f32 %v2107, %v2041
        %v2109 = vmax.f32 %v2108, %v2045
        %v2110 = vmax.f32 %v2109, %v2049
        %v2111 = vmax.f32 %v2110, %v2053
        %v2112 = vrot.slane %v2111, 4
        %v2113 = vmax.f32 %v2111, %v2112
        %v2114 = vrot.slane %v2113, 2
        %v2115 = vmax.f32 %v2113, %v2114
        %v2116 = vrot.slane %v2115, 1
        %v2117 = vmax.f32 %v2115, %v2116
        %v2118 = vmax.f32 %v1994, %v1998
        %v2119 = vmax.f32 %v2118, %v2002
        %v2120 = vmax.f32 %v2119, %v2006
        %v2121 = vmax.f32 %v2120, %v2010
        %v2122 = vmax.f32 %v2121, %v2014
        %v2123 = vmax.f32 %v2122, %v2018
        %v2124 = vmax.f32 %v2123, %v2022
        %v2125 = vmax.f32 %v2124, %v2026
        %v2126 = vmax.f32 %v2125, %v2030
        %v2127 = vmax.f32 %v2126, %v2034
        %v2128 = vmax.f32 %v2127, %v2038
        %v2129 = vmax.f32 %v2128, %v2042
        %v2130 = vmax.f32 %v2129, %v2046
        %v2131 = vmax.f32 %v2130, %v2050
        %v2132 = vmax.f32 %v2131, %v2054
        %v2133 = vrot.slane %v2132, 4
        %v2134 = vmax.f32 %v2132, %v2133
        %v2135 = vrot.slane %v2134, 2
        %v2136 = vmax.f32 %v2134, %v2135
        %v2137 = vrot.slane %v2136, 1
        %v2138 = vmax.f32 %v2136, %v2137
        %v2139 = vpack.c.bf16 %v1995, %v1991
        %v2140 = vpack.c.bf16 %v1996, %v1992
        %v2141 = vpack.c.bf16 %v1997, %v1993
        %v2142 = vpack.c.bf16 %v1998, %v1994
        %v2143 = vpack.c.bf16 %v2003, %v1999
        %v2144 = vpack.c.bf16 %v2004, %v2000
        %v2145 = vpack.c.bf16 %v2005, %v2001
        %v2146 = vpack.c.bf16 %v2006, %v2002
        %v2147 = vpack.c.bf16 %v2011, %v2007
        %v2148 = vpack.c.bf16 %v2012, %v2008
        %v2149 = vpack.c.bf16 %v2013, %v2009
        %v2150 = vpack.c.bf16 %v2014, %v2010
        %v2151 = vpack.c.bf16 %v2019, %v2015
        %v2152 = vpack.c.bf16 %v2020, %v2016
        %v2153 = vpack.c.bf16 %v2021, %v2017
        %v2154 = vpack.c.bf16 %v2022, %v2018
        %v2155 = vpack.c.bf16 %v2027, %v2023
        %v2156 = vpack.c.bf16 %v2028, %v2024
        %v2157 = vpack.c.bf16 %v2029, %v2025
        %v2158 = vpack.c.bf16 %v2030, %v2026
        %v2159 = vpack.c.bf16 %v2035, %v2031
        %v2160 = vpack.c.bf16 %v2036, %v2032
        %v2161 = vpack.c.bf16 %v2037, %v2033
        %v2162 = vpack.c.bf16 %v2038, %v2034
        %v2163 = vpack.c.bf16 %v2043, %v2039
        %v2164 = vpack.c.bf16 %v2044, %v2040
        %v2165 = vpack.c.bf16 %v2045, %v2041
        %v2166 = vpack.c.bf16 %v2046, %v2042
        %v2167 = vpack.c.bf16 %v2051, %v2047
        %v2168 = vpack.c.bf16 %v2052, %v2048
        %v2169 = vpack.c.bf16 %v2053, %v2049
        %v2170 = vpack.c.bf16 %v2054, %v2050
        %v2171 = vld [vmem:[#allocation2] sm:$0xff]
        %v2172 = vld [vmem:[#allocation2 + $0x20] sm:$0xff]
        %v2173 = vld [vmem:[#allocation2 + $0x40] sm:$0xff]
        %v2174 = vld [vmem:[#allocation2 + $0x60] sm:$0xff]
        %v2175 = vld [vmem:[#allocation2 + $0x80] sm:$0xff]
        %v2176 = vld [vmem:[#allocation2 + $0xa0] sm:$0xff]
        %v2177 = vld [vmem:[#allocation2 + $0xc0] sm:$0xff]
        %v2178 = vld [vmem:[#allocation2 + $0xe0] sm:$0xff]
        %v2179 = vld [vmem:[#allocation2 + $0x100] sm:$0xff]
        %v2180 = vld [vmem:[#allocation2 + $0x120] sm:$0xff]
        %v2181 = vld [vmem:[#allocation2 + $0x140] sm:$0xff]
        %v2182 = vld [vmem:[#allocation2 + $0x160] sm:$0xff]
        %v2183 = vld [vmem:[#allocation2 + $0x180] sm:$0xff]
        %v2184 = vld [vmem:[#allocation2 + $0x1a0] sm:$0xff]
        %v2185 = vld [vmem:[#allocation2 + $0x1c0] sm:$0xff]
        %v2186 = vld [vmem:[#allocation2 + $0x1e0] sm:$0xff]
        %v2187 = vld [vmem:[#allocation2 + $0x200] sm:$0xff]
        %v2188 = vld [vmem:[#allocation2 + $0x220] sm:$0xff]
        %v2189 = vld [vmem:[#allocation2 + $0x240] sm:$0xff]
        %v2190 = vld [vmem:[#allocation2 + $0x260] sm:$0xff]
        %v2191 = vld [vmem:[#allocation2 + $0x280] sm:$0xff]
        %v2192 = vld [vmem:[#allocation2 + $0x2a0] sm:$0xff]
        %v2193 = vld [vmem:[#allocation2 + $0x2c0] sm:$0xff]
        %v2194 = vld [vmem:[#allocation2 + $0x2e0] sm:$0xff]
        %v2195 = vld [vmem:[#allocation2 + $0x300] sm:$0xff]
        %v2196 = vld [vmem:[#allocation2 + $0x320] sm:$0xff]
        %v2197 = vld [vmem:[#allocation2 + $0x340] sm:$0xff]
        %v2198 = vld [vmem:[#allocation2 + $0x360] sm:$0xff]
        %v2199 = vld [vmem:[#allocation2 + $0x380] sm:$0xff]
        %v2200 = vld [vmem:[#allocation2 + $0x3a0] sm:$0xff]
        %v2201 = vld [vmem:[#allocation2 + $0x3c0] sm:$0xff]
        %v2202 = vld [vmem:[#allocation2 + $0x3e0] sm:$0xff]
        %v2203 = vld [vmem:[#allocation2 + $0x400] sm:$0xff]
        %v2204 = vld [vmem:[#allocation2 + $0x420] sm:$0xff]
        %v2205 = vld [vmem:[#allocation2 + $0x440] sm:$0xff]
        %v2206 = vld [vmem:[#allocation2 + $0x460] sm:$0xff]
        %v2207 = vld [vmem:[#allocation2 + $0x480] sm:$0xff]
        %v2208 = vld [vmem:[#allocation2 + $0x4a0] sm:$0xff]
        %v2209 = vld [vmem:[#allocation2 + $0x4c0] sm:$0xff]
        %v2210 = vld [vmem:[#allocation2 + $0x4e0] sm:$0xff]
        %v2211 = vld [vmem:[#allocation2 + $0x500] sm:$0xff]
        %v2212 = vld [vmem:[#allocation2 + $0x520] sm:$0xff]
        %v2213 = vld [vmem:[#allocation2 + $0x540] sm:$0xff]
        %v2214 = vld [vmem:[#allocation2 + $0x560] sm:$0xff]
        %v2215 = vld [vmem:[#allocation2 + $0x580] sm:$0xff]
        %v2216 = vld [vmem:[#allocation2 + $0x5a0] sm:$0xff]
        %v2217 = vld [vmem:[#allocation2 + $0x5c0] sm:$0xff]
        %v2218 = vld [vmem:[#allocation2 + $0x5e0] sm:$0xff]
        %v2219 = vld [vmem:[#allocation2 + $0x600] sm:$0xff]
        %v2220 = vld [vmem:[#allocation2 + $0x620] sm:$0xff]
        %v2221 = vld [vmem:[#allocation2 + $0x640] sm:$0xff]
        %v2222 = vld [vmem:[#allocation2 + $0x660] sm:$0xff]
        %v2223 = vld [vmem:[#allocation2 + $0x680] sm:$0xff]
        %v2224 = vld [vmem:[#allocation2 + $0x6a0] sm:$0xff]
        %v2225 = vld [vmem:[#allocation2 + $0x6c0] sm:$0xff]
        %v2226 = vld [vmem:[#allocation2 + $0x6e0] sm:$0xff]
        %v2227 = vld [vmem:[#allocation2 + $0x700] sm:$0xff]
        %v2228 = vld [vmem:[#allocation2 + $0x720] sm:$0xff]
        %v2229 = vld [vmem:[#allocation2 + $0x740] sm:$0xff]
        %v2230 = vld [vmem:[#allocation2 + $0x760] sm:$0xff]
        %v2231 = vld [vmem:[#allocation2 + $0x780] sm:$0xff]
        %v2232 = vld [vmem:[#allocation2 + $0x7a0] sm:$0xff]
        %v2233 = vld [vmem:[#allocation2 + $0x7c0] sm:$0xff]
        %v2234 = vld [vmem:[#allocation2 + $0x7e0] sm:$0xff]
        %v2235 = vld [vmem:[%s12] sm:$0x3]
        %v2237 = vlaneseq
        %v2238 = vshrl.u32 %v2237, 7
        %v2239 = vsub.s32 0, %v2238
        %v2240 = vrot.slane %v2235, %v2239
        %v2241 = vlaneseq
        %v2242 = vshrl.u32 %v2241, 7
        %v2243 = vsub.s32 1, %v2242
        %v2244 = vrot.slane %v2235, %v2243
        %v2311 = vunpack.c.l.b16 %v2171
        %v2312 = vunpack.c.h.b16 %v2171
        %v2313 = vunpack.c.l.b16 %v2172
        %v2314 = vunpack.c.h.b16 %v2172
        %v2315 = vunpack.c.l.b16 %v2173
        %v2316 = vunpack.c.h.b16 %v2173
        %v2317 = vunpack.c.l.b16 %v2174
        %v2318 = vunpack.c.h.b16 %v2174
        %v2319 = vunpack.c.l.b16 %v2175
        %v2320 = vunpack.c.h.b16 %v2175
        %v2321 = vunpack.c.l.b16 %v2176
        %v2322 = vunpack.c.h.b16 %v2176
        %v2323 = vunpack.c.l.b16 %v2177
        %v2324 = vunpack.c.h.b16 %v2177
        %v2325 = vunpack.c.l.b16 %v2178
        %v2326 = vunpack.c.h.b16 %v2178
        %v2327 = vunpack.c.l.b16 %v2179
        %v2328 = vunpack.c.h.b16 %v2179
        %v2329 = vunpack.c.l.b16 %v2180
        %v2330 = vunpack.c.h.b16 %v2180
        %v2331 = vunpack.c.l.b16 %v2181
        %v2332 = vunpack.c.h.b16 %v2181
        %v2333 = vunpack.c.l.b16 %v2182
        %v2334 = vunpack.c.h.b16 %v2182
        %v2335 = vunpack.c.l.b16 %v2183
        %v2336 = vunpack.c.h.b16 %v2183
        %v2337 = vunpack.c.l.b16 %v2184
        %v2338 = vunpack.c.h.b16 %v2184
        %v2339 = vunpack.c.l.b16 %v2185
        %v2340 = vunpack.c.h.b16 %v2185
        %v2341 = vunpack.c.l.b16 %v2186
        %v2342 = vunpack.c.h.b16 %v2186
        %v2343 = vunpack.c.l.b16 %v2187
        %v2344 = vunpack.c.h.b16 %v2187
        %v2345 = vunpack.c.l.b16 %v2188
        %v2346 = vunpack.c.h.b16 %v2188
        %v2347 = vunpack.c.l.b16 %v2189
        %v2348 = vunpack.c.h.b16 %v2189
        %v2349 = vunpack.c.l.b16 %v2190
        %v2350 = vunpack.c.h.b16 %v2190
        %v2351 = vunpack.c.l.b16 %v2191
        %v2352 = vunpack.c.h.b16 %v2191
        %v2353 = vunpack.c.l.b16 %v2192
        %v2354 = vunpack.c.h.b16 %v2192
        %v2355 = vunpack.c.l.b16 %v2193
        %v2356 = vunpack.c.h.b16 %v2193
        %v2357 = vunpack.c.l.b16 %v2194
        %v2358 = vunpack.c.h.b16 %v2194
        %v2359 = vunpack.c.l.b16 %v2195
        %v2360 = vunpack.c.h.b16 %v2195
        %v2361 = vunpack.c.l.b16 %v2196
        %v2362 = vunpack.c.h.b16 %v2196
        %v2363 = vunpack.c.l.b16 %v2197
        %v2364 = vunpack.c.h.b16 %v2197
        %v2365 = vunpack.c.l.b16 %v2198
        %v2366 = vunpack.c.h.b16 %v2198
        %v2367 = vunpack.c.l.b16 %v2199
        %v2368 = vunpack.c.h.b16 %v2199
        %v2369 = vunpack.c.l.b16 %v2200
        %v2370 = vunpack.c.h.b16 %v2200
        %v2371 = vunpack.c.l.b16 %v2201
        %v2372 = vunpack.c.h.b16 %v2201
        %v2373 = vunpack.c.l.b16 %v2202
        %v2374 = vunpack.c.h.b16 %v2202
        %v2375 = vunpack.c.l.b16 %v2203
        %v2376 = vunpack.c.h.b16 %v2203
        %v2377 = vunpack.c.l.b16 %v2204
        %v2378 = vunpack.c.h.b16 %v2204
        %v2379 = vunpack.c.l.b16 %v2205
        %v2380 = vunpack.c.h.b16 %v2205
        %v2381 = vunpack.c.l.b16 %v2206
        %v2382 = vunpack.c.h.b16 %v2206
        %v2383 = vunpack.c.l.b16 %v2207
        %v2384 = vunpack.c.h.b16 %v2207
        %v2385 = vunpack.c.l.b16 %v2208
        %v2386 = vunpack.c.h.b16 %v2208
        %v2387 = vunpack.c.l.b16 %v2209
        %v2388 = vunpack.c.h.b16 %v2209
        %v2389 = vunpack.c.l.b16 %v2210
        %v2390 = vunpack.c.h.b16 %v2210
        %v2391 = vunpack.c.l.b16 %v2211
        %v2392 = vunpack.c.h.b16 %v2211
        %v2393 = vunpack.c.l.b16 %v2212
        %v2394 = vunpack.c.h.b16 %v2212
        %v2395 = vunpack.c.l.b16 %v2213
        %v2396 = vunpack.c.h.b16 %v2213
        %v2397 = vunpack.c.l.b16 %v2214
        %v2398 = vunpack.c.h.b16 %v2214
        %v2399 = vunpack.c.l.b16 %v2215
        %v2400 = vunpack.c.h.b16 %v2215
        %v2401 = vunpack.c.l.b16 %v2216
        %v2402 = vunpack.c.h.b16 %v2216
        %v2403 = vunpack.c.l.b16 %v2217
        %v2404 = vunpack.c.h.b16 %v2217
        %v2405 = vunpack.c.l.b16 %v2218
        %v2406 = vunpack.c.h.b16 %v2218
        %v2407 = vunpack.c.l.b16 %v2219
        %v2408 = vunpack.c.h.b16 %v2219
        %v2409 = vunpack.c.l.b16 %v2220
        %v2410 = vunpack.c.h.b16 %v2220
        %v2411 = vunpack.c.l.b16 %v2221
        %v2412 = vunpack.c.h.b16 %v2221
        %v2413 = vunpack.c.l.b16 %v2222
        %v2414 = vunpack.c.h.b16 %v2222
        %v2415 = vunpack.c.l.b16 %v2223
        %v2416 = vunpack.c.h.b16 %v2223
        %v2417 = vunpack.c.l.b16 %v2224
        %v2418 = vunpack.c.h.b16 %v2224
        %v2419 = vunpack.c.l.b16 %v2225
        %v2420 = vunpack.c.h.b16 %v2225
        %v2421 = vunpack.c.l.b16 %v2226
        %v2422 = vunpack.c.h.b16 %v2226
        %v2423 = vunpack.c.l.b16 %v2227
        %v2424 = vunpack.c.h.b16 %v2227
        %v2425 = vunpack.c.l.b16 %v2228
        %v2426 = vunpack.c.h.b16 %v2228
        %v2427 = vunpack.c.l.b16 %v2229
        %v2428 = vunpack.c.h.b16 %v2229
        %v2429 = vunpack.c.l.b16 %v2230
        %v2430 = vunpack.c.h.b16 %v2230
        %v2431 = vunpack.c.l.b16 %v2231
        %v2432 = vunpack.c.h.b16 %v2231
        %v2433 = vunpack.c.l.b16 %v2232
        %v2434 = vunpack.c.h.b16 %v2232
        %v2435 = vunpack.c.l.b16 %v2233
        %v2436 = vunpack.c.h.b16 %v2233
        %v2437 = vunpack.c.l.b16 %v2234
        %v2438 = vunpack.c.h.b16 %v2234
        %v2439 = vpack.c.b16 %v2313, %v2311
        %v2440 = vpack.c.b16 %v2314, %v2312
        %v2441 = vpack.c.b16 %v2317, %v2315
        %v2442 = vpack.c.b16 %v2318, %v2316
        %v2443 = vpack.c.b16 %v2321, %v2319
        %v2444 = vpack.c.b16 %v2322, %v2320
        %v2445 = vpack.c.b16 %v2325, %v2323
        %v2446 = vpack.c.b16 %v2326, %v2324
        %v2447 = vpack.c.b16 %v2329, %v2327
        %v2448 = vpack.c.b16 %v2330, %v2328
        %v2449 = vpack.c.b16 %v2333, %v2331
        %v2450 = vpack.c.b16 %v2334, %v2332
        %v2451 = vpack.c.b16 %v2337, %v2335
        %v2452 = vpack.c.b16 %v2338, %v2336
        %v2453 = vpack.c.b16 %v2341, %v2339
        %v2454 = vpack.c.b16 %v2342, %v2340
        %v2455 = vpack.c.b16 %v2345, %v2343
        %v2456 = vpack.c.b16 %v2346, %v2344
        %v2457 = vpack.c.b16 %v2349, %v2347
        %v2458 = vpack.c.b16 %v2350, %v2348
        %v2459 = vpack.c.b16 %v2353, %v2351
        %v2460 = vpack.c.b16 %v2354, %v2352
        %v2461 = vpack.c.b16 %v2357, %v2355
        %v2462 = vpack.c.b16 %v2358, %v2356
        %v2463 = vpack.c.b16 %v2361, %v2359
        %v2464 = vpack.c.b16 %v2362, %v2360
        %v2465 = vpack.c.b16 %v2365, %v2363
        %v2466 = vpack.c.b16 %v2366, %v2364
        %v2467 = vpack.c.b16 %v2369, %v2367
        %v2468 = vpack.c.b16 %v2370, %v2368
        %v2469 = vpack.c.b16 %v2373, %v2371
        %v2470 = vpack.c.b16 %v2374, %v2372
        %v2471 = vpack.c.b16 %v2377, %v2375
        %v2472 = vpack.c.b16 %v2378, %v2376
        %v2473 = vpack.c.b16 %v2381, %v2379
        %v2474 = vpack.c.b16 %v2382, %v2380
        %v2475 = vpack.c.b16 %v2385, %v2383
        %v2476 = vpack.c.b16 %v2386, %v2384
        %v2477 = vpack.c.b16 %v2389, %v2387
        %v2478 = vpack.c.b16 %v2390, %v2388
        %v2479 = vpack.c.b16 %v2393, %v2391
        %v2480 = vpack.c.b16 %v2394, %v2392
        %v2481 = vpack.c.b16 %v2397, %v2395
        %v2482 = vpack.c.b16 %v2398, %v2396
        %v2483 = vpack.c.b16 %v2401, %v2399
        %v2484 = vpack.c.b16 %v2402, %v2400
        %v2485 = vpack.c.b16 %v2405, %v2403
        %v2486 = vpack.c.b16 %v2406, %v2404
        %v2487 = vpack.c.b16 %v2409, %v2407
        %v2488 = vpack.c.b16 %v2410, %v2408
        %v2489 = vpack.c.b16 %v2413, %v2411
        %v2490 = vpack.c.b16 %v2414, %v2412
        %v2491 = vpack.c.b16 %v2417, %v2415
        %v2492 = vpack.c.b16 %v2418, %v2416
        %v2493 = vpack.c.b16 %v2421, %v2419
        %v2494 = vpack.c.b16 %v2422, %v2420
        %v2495 = vpack.c.b16 %v2425, %v2423
        %v2496 = vpack.c.b16 %v2426, %v2424
        %v2497 = vpack.c.b16 %v2429, %v2427
        %v2498 = vpack.c.b16 %v2430, %v2428
        %v2499 = vpack.c.b16 %v2433, %v2431
        %v2500 = vpack.c.b16 %v2434, %v2432
        %v2501 = vpack.c.b16 %v2437, %v2435
        %v2502 = vpack.c.b16 %v2438, %v2436
        %2567 = vmatprep.subr.bf16.mxu0 %v2440
        %2568 = vmatpush1.bf16.msra.mxu0 %v2439
        %2569 = vmatprep.subr.bf16.mxu0 %v2442
        %2570 = vmatpush1.bf16.msra.mxu0 %v2441
        %2571 = vmatprep.subr.bf16.mxu0 %v2444
        %2572 = vmatpush1.bf16.msra.mxu0 %v2443
        %2573 = vmatprep.subr.bf16.mxu0 %v2446
        %2574 = vmatpush1.bf16.msra.mxu0 %v2445
        %2575 = vmatprep.subr.bf16.mxu0 %v2448
        %2576 = vmatpush1.bf16.msra.mxu0 %v2447
        %2577 = vmatprep.subr.bf16.mxu0 %v2450
        %2578 = vmatpush1.bf16.msra.mxu0 %v2449
        %2579 = vmatprep.subr.bf16.mxu0 %v2452
        %2580 = vmatpush1.bf16.msra.mxu0 %v2451
        %2581 = vmatprep.subr.bf16.mxu0 %v2454
        %2582 = vmatpush1.bf16.msra.mxu0 %v2453
        %2583 = vmatprep.subr.bf16.mxu0 %v2456
        %2584 = vmatpush1.bf16.msra.mxu0 %v2455
        %2585 = vmatprep.subr.bf16.mxu0 %v2458
        %2586 = vmatpush1.bf16.msra.mxu0 %v2457
        %2587 = vmatprep.subr.bf16.mxu0 %v2460
        %2588 = vmatpush1.bf16.msra.mxu0 %v2459
        %2589 = vmatprep.subr.bf16.mxu0 %v2462
        %2590 = vmatpush1.bf16.msra.mxu0 %v2461
        %2591 = vmatprep.subr.bf16.mxu0 %v2464
        %2592 = vmatpush1.bf16.msra.mxu0 %v2463
        %2593 = vmatprep.subr.bf16.mxu0 %v2466
        %2594 = vmatpush1.bf16.msra.mxu0 %v2465
        %2595 = vmatprep.subr.bf16.mxu0 %v2468
        %2596 = vmatpush1.bf16.msra.mxu0 %v2467
        %2597 = vmatprep.subr.bf16.mxu0 %v2470
        %2598 = vmatpush1.bf16.msra.mxu0 %v2469
        %2599 = vmatprep.mubr.bf16.mxu0 %v2140
        %2600 = vmatmul.mubr.bf16.gmra.mrb[0].mxu0 %v2139
        %v2601 = vpop.f32.mrb[0].mxu0
        %v2602 = vadd.f32 %v2240, %v2601
        %v2603 = vpop.f32.mrb[0].mxu0
        %v2604 = vadd.f32 %v2244, %v2603
        %v2605 = vpop.f32.mrb[0].mxu0
        %v2606 = vadd.f32 %v2240, %v2605
        %v2607 = vpop.f32.mrb[0].mxu0
        %v2608 = vadd.f32 %v2244, %v2607
        %2609 = vmatprep.mubr.bf16.mxu0 %v2144
        %2610 = vmatmul.mubr.bf16.gmra.mrb[0].mxu0 %v2143
        %v2611 = vpop.f32.mrb[0].mxu0
        %v2612 = vadd.f32 %v2240, %v2611
        %v2613 = vpop.f32.mrb[0].mxu0
        %v2614 = vadd.f32 %v2244, %v2613
        %v2615 = vpop.f32.mrb[0].mxu0
        %v2616 = vadd.f32 %v2240, %v2615
        %v2617 = vpop.f32.mrb[0].mxu0
        %v2618 = vadd.f32 %v2244, %v2617
        %2619 = vmatprep.mubr.bf16.mxu0 %v2148
        %2620 = vmatmul.mubr.bf16.gmra.mrb[0].mxu0 %v2147
        %v2621 = vpop.f32.mrb[0].mxu0
        %v2622 = vadd.f32 %v2240, %v2621
        %v2623 = vpop.f32.mrb[0].mxu0
        %v2624 = vadd.f32 %v2244, %v2623
        %v2625 = vpop.f32.mrb[0].mxu0
        %v2626 = vadd.f32 %v2240, %v2625
        %v2627 = vpop.f32.mrb[0].mxu0
        %v2628 = vadd.f32 %v2244, %v2627
        %2629 = vmatprep.mubr.bf16.mxu0 %v2152
        %2630 = vmatmul.mubr.bf16.gmra.mrb[0].mxu0 %v2151
        %v2631 = vpop.f32.mrb[0].mxu0
        %v2632 = vadd.f32 %v2240, %v2631
        %v2633 = vpop.f32.mrb[0].mxu0
        %v2634 = vadd.f32 %v2244, %v2633
        %v2635 = vpop.f32.mrb[0].mxu0
        %v2636 = vadd.f32 %v2240, %v2635
        %v2637 = vpop.f32.mrb[0].mxu0
        %v2638 = vadd.f32 %v2244, %v2637
        %2639 = vmatprep.mubr.bf16.mxu0 %v2156
        %2640 = vmatmul.mubr.bf16.gmra.mrb[0].mxu0 %v2155
        %v2641 = vpop.f32.mrb[0].mxu0
        %v2642 = vadd.f32 %v2240, %v2641
        %v2643 = vpop.f32.mrb[0].mxu0
        %v2644 = vadd.f32 %v2244, %v2643
        %v2645 = vpop.f32.mrb[0].mxu0
        %v2646 = vadd.f32 %v2240, %v2645
        %v2647 = vpop.f32.mrb[0].mxu0
        %v2648 = vadd.f32 %v2244, %v2647
        %2649 = vmatprep.mubr.bf16.mxu0 %v2160
        %2650 = vmatmul.mubr.bf16.gmra.mrb[0].mxu0 %v2159
        %v2651 = vpop.f32.mrb[0].mxu0
        %v2652 = vadd.f32 %v2240, %v2651
        %v2653 = vpop.f32.mrb[0].mxu0
        %v2654 = vadd.f32 %v2244, %v2653
        %v2655 = vpop.f32.mrb[0].mxu0
        %v2656 = vadd.f32 %v2240, %v2655
        %v2657 = vpop.f32.mrb[0].mxu0
        %v2658 = vadd.f32 %v2244, %v2657
        %2659 = vmatprep.mubr.bf16.mxu0 %v2164
        %2660 = vmatmul.mubr.bf16.gmra.mrb[0].mxu0 %v2163
        %v2661 = vpop.f32.mrb[0].mxu0
        %v2662 = vadd.f32 %v2240, %v2661
        %v2663 = vpop.f32.mrb[0].mxu0
        %v2664 = vadd.f32 %v2244, %v2663
        %v2665 = vpop.f32.mrb[0].mxu0
        %v2666 = vadd.f32 %v2240, %v2665
        %v2667 = vpop.f32.mrb[0].mxu0
        %v2668 = vadd.f32 %v2244, %v2667
        %2669 = vmatprep.mubr.bf16.mxu0 %v2168
        %2670 = vmatmul.mubr.bf16.gmra.mrb[0].mxu0 %v2167
        %v2671 = vpop.f32.mrb[0].mxu0
        %v2672 = vadd.f32 %v2240, %v2671
        %v2673 = vpop.f32.mrb[0].mxu0
        %v2674 = vadd.f32 %v2244, %v2673
        %v2675 = vpop.f32.mrb[0].mxu0
        %v2676 = vadd.f32 %v2240, %v2675
        %v2677 = vpop.f32.mrb[0].mxu0
        %v2678 = vadd.f32 %v2244, %v2677
        %2679 = vdwg.mxu0
        %2680 = vmatprep.subr.bf16.mxu0 %v2472
        %2681 = vmatpush1.bf16.msra.mxu0 %v2471
        %2682 = vmatprep.subr.bf16.mxu0 %v2474
        %2683 = vmatpush1.bf16.msra.mxu0 %v2473
        %2684 = vmatprep.subr.bf16.mxu0 %v2476
        %2685 = vmatpush1.bf16.msra.mxu0 %v2475
        %2686 = vmatprep.subr.bf16.mxu0 %v2478
        %2687 = vmatpush1.bf16.msra.mxu0 %v2477
        %2688 = vmatprep.subr.bf16.mxu0 %v2480
        %2689 = vmatpush1.bf16.msra.mxu0 %v2479
        %2690 = vmatprep.subr.bf16.mxu0 %v2482
        %2691 = vmatpush1.bf16.msra.mxu0 %v2481
        %2692 = vmatprep.subr.bf16.mxu0 %v2484
        %2693 = vmatpush1.bf16.msra.mxu0 %v2483
        %2694 = vmatprep.subr.bf16.mxu0 %v2486
        %2695 = vmatpush1.bf16.msra.mxu0 %v2485
        %2696 = vmatprep.subr.bf16.mxu0 %v2488
        %2697 = vmatpush1.bf16.msra.mxu0 %v2487
        %2698 = vmatprep.subr.bf16.mxu0 %v2490
        %2699 = vmatpush1.bf16.msra.mxu0 %v2489
        %2700 = vmatprep.subr.bf16.mxu0 %v2492
        %2701 = vmatpush1.bf16.msra.mxu0 %v2491
        %2702 = vmatprep.subr.bf16.mxu0 %v2494
        %2703 = vmatpush1.bf16.msra.mxu0 %v2493
        %2704 = vmatprep.subr.bf16.mxu0 %v2496
        %2705 = vmatpush1.bf16.msra.mxu0 %v2495
        %2706 = vmatprep.subr.bf16.mxu0 %v2498
        %2707 = vmatpush1.bf16.msra.mxu0 %v2497
        %2708 = vmatprep.subr.bf16.mxu0 %v2500
        %2709 = vmatpush1.bf16.msra.mxu0 %v2499
        %2710 = vmatprep.subr.bf16.mxu0 %v2502
        %2711 = vmatpush1.bf16.msra.mxu0 %v2501
        %2712 = vmatprep.mubr.bf16.mxu0 %v2142
        %2713 = vmatmul.mubr.bf16.gmra.mrb[0].mxu0 %v2141
        %v2714 = vpop.f32.mrb[0].mxu0
        %v2715 = vadd.f32 %v2602, %v2714
        %v2716 = vpop.f32.mrb[0].mxu0
        %v2717 = vadd.f32 %v2604, %v2716
        %v2718 = vpop.f32.mrb[0].mxu0
        %v2719 = vadd.f32 %v2606, %v2718
        %v2720 = vpop.f32.mrb[0].mxu0
        %v2721 = vadd.f32 %v2608, %v2720
        %2722 = vmatprep.mubr.bf16.mxu0 %v2146
        %2723 = vmatmul.mubr.bf16.gmra.mrb[0].mxu0 %v2145
        %v2724 = vpop.f32.mrb[0].mxu0
        %v2725 = vadd.f32 %v2612, %v2724
        %v2726 = vpop.f32.mrb[0].mxu0
        %v2727 = vadd.f32 %v2614, %v2726
        %v2728 = vpop.f32.mrb[0].mxu0
        %v2729 = vadd.f32 %v2616, %v2728
        %v2730 = vpop.f32.mrb[0].mxu0
        %v2731 = vadd.f32 %v2618, %v2730
        %2732 = vmatprep.mubr.bf16.mxu0 %v2150
        %2733 = vmatmul.mubr.bf16.gmra.mrb[0].mxu0 %v2149
        %v2734 = vpop.f32.mrb[0].mxu0
        %v2735 = vadd.f32 %v2622, %v2734
        %v2736 = vpop.f32.mrb[0].mxu0
        %v2737 = vadd.f32 %v2624, %v2736
        %v2738 = vpop.f32.mrb[0].mxu0
        %v2739 = vadd.f32 %v2626, %v2738
        %v2740 = vpop.f32.mrb[0].mxu0
        %v2741 = vadd.f32 %v2628, %v2740
        %2742 = vmatprep.mubr.bf16.mxu0 %v2154
        %2743 = vmatmul.mubr.bf16.gmra.mrb[0].mxu0 %v2153
        %v2744 = vpop.f32.mrb[0].mxu0
        %v2745 = vadd.f32 %v2632, %v2744
        %v2746 = vpop.f32.mrb[0].mxu0
        %v2747 = vadd.f32 %v2634, %v2746
        %v2748 = vpop.f32.mrb[0].mxu0
        %v2749 = vadd.f32 %v2636, %v2748
        %v2750 = vpop.f32.mrb[0].mxu0
        %v2751 = vadd.f32 %v2638, %v2750
        %2752 = vmatprep.mubr.bf16.mxu0 %v2158
        %2753 = vmatmul.mubr.bf16.gmra.mrb[0].mxu0 %v2157
        %v2754 = vpop.f32.mrb[0].mxu0
        %v2755 = vadd.f32 %v2642, %v2754
        %v2756 = vpop.f32.mrb[0].mxu0
        %v2757 = vadd.f32 %v2644, %v2756
        %v2758 = vpop.f32.mrb[0].mxu0
        %v2759 = vadd.f32 %v2646, %v2758
        %v2760 = vpop.f32.mrb[0].mxu0
        %v2761 = vadd.f32 %v2648, %v2760
        %2762 = vmatprep.mubr.bf16.mxu0 %v2162
        %2763 = vmatmul.mubr.bf16.gmra.mrb[0].mxu0 %v2161
        %v2764 = vpop.f32.mrb[0].mxu0
        %v2765 = vadd.f32 %v2652, %v2764
        %v2766 = vpop.f32.mrb[0].mxu0
        %v2767 = vadd.f32 %v2654, %v2766
        %v2768 = vpop.f32.mrb[0].mxu0
        %v2769 = vadd.f32 %v2656, %v2768
        %v2770 = vpop.f32.mrb[0].mxu0
        %v2771 = vadd.f32 %v2658, %v2770
        %2772 = vmatprep.mubr.bf16.mxu0 %v2166
        %2773 = vmatmul.mubr.bf16.gmra.mrb[0].mxu0 %v2165
        %v2774 = vpop.f32.mrb[0].mxu0
        %v2775 = vadd.f32 %v2662, %v2774
        %v2776 = vpop.f32.mrb[0].mxu0
        %v2777 = vadd.f32 %v2664, %v2776
        %v2778 = vpop.f32.mrb[0].mxu0
        %v2779 = vadd.f32 %v2666, %v2778
        %v2780 = vpop.f32.mrb[0].mxu0
        %v2781 = vadd.f32 %v2668, %v2780
        %2782 = vmatprep.mubr.bf16.mxu0 %v2170
        %2783 = vmatmul.mubr.bf16.gmra.mrb[0].mxu0 %v2169
        %v2784 = vpop.f32.mrb[0].mxu0
        %v2785 = vadd.f32 %v2672, %v2784
        %v2786 = vpop.f32.mrb[0].mxu0
        %v2787 = vadd.f32 %v2674, %v2786
        %v2788 = vpop.f32.mrb[0].mxu0
        %v2789 = vadd.f32 %v2676, %v2788
        %v2790 = vpop.f32.mrb[0].mxu0
        %v2791 = vadd.f32 %v2678, %v2790
        %2792 = vdwg.mxu0
        %v2793 = vmax.f32 %v2715, 0.0
        %v2794 = vmax.f32 %v2717, 0.0
        %v2795 = vmax.f32 %v2719, 0.0
        %v2796 = vmax.f32 %v2721, 0.0
        %v2797 = vmax.f32 %v2725, 0.0
        %v2798 = vmax.f32 %v2727, 0.0
        %v2799 = vmax.f32 %v2729, 0.0
        %v2800 = vmax.f32 %v2731, 0.0
        %v2801 = vmax.f32 %v2735, 0.0
        %v2802 = vmax.f32 %v2737, 0.0
        %v2803 = vmax.f32 %v2739, 0.0
        %v2804 = vmax.f32 %v2741, 0.0
        %v2805 = vmax.f32 %v2745, 0.0
        %v2806 = vmax.f32 %v2747, 0.0
        %v2807 = vmax.f32 %v2749, 0.0
        %v2808 = vmax.f32 %v2751, 0.0
        %v2809 = vmax.f32 %v2755, 0.0
        %v2810 = vmax.f32 %v2757, 0.0
        %v2811 = vmax.f32 %v2759, 0.0
        %v2812 = vmax.f32 %v2761, 0.0
        %v2813 = vmax.f32 %v2765, 0.0
        %v2814 = vmax.f32 %v2767, 0.0
        %v2815 = vmax.f32 %v2769, 0.0
        %v2816 = vmax.f32 %v2771, 0.0
        %v2817 = vmax.f32 %v2775, 0.0
        %v2818 = vmax.f32 %v2777, 0.0
        %v2819 = vmax.f32 %v2779, 0.0
        %v2820 = vmax.f32 %v2781, 0.0
        %v2821 = vmax.f32 %v2785, 0.0
        %v2822 = vmax.f32 %v2787, 0.0
        %v2823 = vmax.f32 %v2789, 0.0
        %v2824 = vmax.f32 %v2791, 0.0
        %v2825 = vmax.f32 %v2793, %v2797
        %v2826 = vmax.f32 %v2795, %v2799
        %v2827 = vmax.f32 %v2825, %v2801
        %v2828 = vmax.f32 %v2826, %v2803
        %v2829 = vmax.f32 %v2827, %v2805
        %v2830 = vmax.f32 %v2828, %v2807
        %v2831 = vmax.f32 %v2829, %v2809
        %v2832 = vmax.f32 %v2830, %v2811
        %v2833 = vmax.f32 %v2831, %v2813
        %v2834 = vmax.f32 %v2832, %v2815
        %v2835 = vmax.f32 %v2833, %v2817
        %v2836 = vmax.f32 %v2834, %v2819
        %v2837 = vmax.f32 %v2835, %v2821
        %v2838 = vmax.f32 %v2836, %v2823
        %v2839 = vmax.f32 %v2837, %v2838
        %v2840 = vrot.slane %v2839, 4
        %v2841 = vmax.f32 %v2839, %v2840
        %v2842 = vrot.slane %v2841, 2
        %v2843 = vmax.f32 %v2841, %v2842
        %v2844 = vrot.slane %v2843, 1
        %v2845 = vmax.f32 %v2843, %v2844
        %v2846 = vmax.f32 %v2794, %v2798
        %v2847 = vmax.f32 %v2796, %v2800
        %v2848 = vmax.f32 %v2846, %v2802
        %v2849 = vmax.f32 %v2847, %v2804
        %v2850 = vmax.f32 %v2848, %v2806
        %v2851 = vmax.f32 %v2849, %v2808
        %v2852 = vmax.f32 %v2850, %v2810
        %v2853 = vmax.f32 %v2851, %v2812
        %v2854 = vmax.f32 %v2852, %v2814
        %v2855 = vmax.f32 %v2853, %v2816
        %v2856 = vmax.f32 %v2854, %v2818
        %v2857 = vmax.f32 %v2855, %v2820
        %v2858 = vmax.f32 %v2856, %v2822
        %v2859 = vmax.f32 %v2857, %v2824
        %v2860 = vmax.f32 %v2858, %v2859
        %v2861 = vrot.slane %v2860, 4
        %v2862 = vmax.f32 %v2860, %v2861
        %v2863 = vrot.slane %v2862, 2
        %v2864 = vmax.f32 %v2862, %v2863
        %v2865 = vrot.slane %v2864, 1
        %v2866 = vmax.f32 %v2864, %v2865
        %v2867 = vld [vmem:[#allocation2 + $0x8] sm:$0xff]
        %v2868 = vld [vmem:[#allocation2 + $0x28] sm:$0xff]
        %v2869 = vld [vmem:[#allocation2 + $0x48] sm:$0xff]
        %v2870 = vld [vmem:[#allocation2 + $0x68] sm:$0xff]
        %v2871 = vld [vmem:[#allocation2 + $0x88] sm:$0xff]
        %v2872 = vld [vmem:[#allocation2 + $0xa8] sm:$0xff]
        %v2873 = vld [vmem:[#allocation2 + $0xc8] sm:$0xff]
        %v2874 = vld [vmem:[#allocation2 + $0xe8] sm:$0xff]
        %v2875 = vld [vmem:[#allocation2 + $0x108] sm:$0xff]
        %v2876 = vld [vmem:[#allocation2 + $0x128] sm:$0xff]
        %v2877 = vld [vmem:[#allocation2 + $0x148] sm:$0xff]
        %v2878 = vld [vmem:[#allocation2 + $0x168] sm:$0xff]
        %v2879 = vld [vmem:[#allocation2 + $0x188] sm:$0xff]
        %v2880 = vld [vmem:[#allocation2 + $0x1a8] sm:$0xff]
        %v2881 = vld [vmem:[#allocation2 + $0x1c8] sm:$0xff]
        %v2882 = vld [vmem:[#allocation2 + $0x1e8] sm:$0xff]
        %v2883 = vld [vmem:[#allocation2 + $0x208] sm:$0xff]
        %v2884 = vld [vmem:[#allocation2 + $0x228] sm:$0xff]
        %v2885 = vld [vmem:[#allocation2 + $0x248] sm:$0xff]
        %v2886 = vld [vmem:[#allocation2 + $0x268] sm:$0xff]
        %v2887 = vld [vmem:[#allocation2 + $0x288] sm:$0xff]
        %v2888 = vld [vmem:[#allocation2 + $0x2a8] sm:$0xff]
        %v2889 = vld [vmem:[#allocation2 + $0x2c8] sm:$0xff]
        %v2890 = vld [vmem:[#allocation2 + $0x2e8] sm:$0xff]
        %v2891 = vld [vmem:[#allocation2 + $0x308] sm:$0xff]
        %v2892 = vld [vmem:[#allocation2 + $0x328] sm:$0xff]
        %v2893 = vld [vmem:[#allocation2 + $0x348] sm:$0xff]
        %v2894 = vld [vmem:[#allocation2 + $0x368] sm:$0xff]
        %v2895 = vld [vmem:[#allocation2 + $0x388] sm:$0xff]
        %v2896 = vld [vmem:[#allocation2 + $0x3a8] sm:$0xff]
        %v2897 = vld [vmem:[#allocation2 + $0x3c8] sm:$0xff]
        %v2898 = vld [vmem:[#allocation2 + $0x3e8] sm:$0xff]
        %v2899 = vld [vmem:[#allocation2 + $0x408] sm:$0xff]
        %v2900 = vld [vmem:[#allocation2 + $0x428] sm:$0xff]
        %v2901 = vld [vmem:[#allocation2 + $0x448] sm:$0xff]
        %v2902 = vld [vmem:[#allocation2 + $0x468] sm:$0xff]
        %v2903 = vld [vmem:[#allocation2 + $0x488] sm:$0xff]
        %v2904 = vld [vmem:[#allocation2 + $0x4a8] sm:$0xff]
        %v2905 = vld [vmem:[#allocation2 + $0x4c8] sm:$0xff]
        %v2906 = vld [vmem:[#allocation2 + $0x4e8] sm:$0xff]
        %v2907 = vld [vmem:[#allocation2 + $0x508] sm:$0xff]
        %v2908 = vld [vmem:[#allocation2 + $0x528] sm:$0xff]
        %v2909 = vld [vmem:[#allocation2 + $0x548] sm:$0xff]
        %v2910 = vld [vmem:[#allocation2 + $0x568] sm:$0xff]
        %v2911 = vld [vmem:[#allocation2 + $0x588] sm:$0xff]
        %v2912 = vld [vmem:[#allocation2 + $0x5a8] sm:$0xff]
        %v2913 = vld [vmem:[#allocation2 + $0x5c8] sm:$0xff]
        %v2914 = vld [vmem:[#allocation2 + $0x5e8] sm:$0xff]
        %v2915 = vld [vmem:[#allocation2 + $0x608] sm:$0xff]
        %v2916 = vld [vmem:[#allocation2 + $0x628] sm:$0xff]
        %v2917 = vld [vmem:[#allocation2 + $0x648] sm:$0xff]
        %v2918 = vld [vmem:[#allocation2 + $0x668] sm:$0xff]
        %v2919 = vld [vmem:[#allocation2 + $0x688] sm:$0xff]
        %v2920 = vld [vmem:[#allocation2 + $0x6a8] sm:$0xff]
        %v2921 = vld [vmem:[#allocation2 + $0x6c8] sm:$0xff]
        %v2922 = vld [vmem:[#allocation2 + $0x6e8] sm:$0xff]
        %v2923 = vld [vmem:[#allocation2 + $0x708] sm:$0xff]
        %v2924 = vld [vmem:[#allocation2 + $0x728] sm:$0xff]
        %v2925 = vld [vmem:[#allocation2 + $0x748] sm:$0xff]
        %v2926 = vld [vmem:[#allocation2 + $0x768] sm:$0xff]
        %v2927 = vld [vmem:[#allocation2 + $0x788] sm:$0xff]
        %v2928 = vld [vmem:[#allocation2 + $0x7a8] sm:$0xff]
        %v2929 = vld [vmem:[#allocation2 + $0x7c8] sm:$0xff]
        %v2930 = vld [vmem:[#allocation2 + $0x7e8] sm:$0xff]
        %v2931 = vld [vmem:[%s12 + $0x2] sm:$0x3]
        %v2933 = vlaneseq
        %v2934 = vshrl.u32 %v2933, 7
        %v2935 = vsub.s32 0, %v2934
        %v2936 = vrot.slane %v2931, %v2935
        %v2937 = vlaneseq
        %v2938 = vshrl.u32 %v2937, 7
        %v2939 = vsub.s32 1, %v2938
        %v2940 = vrot.slane %v2931, %v2939
        %v3007 = vunpack.c.l.b16 %v2867
        %v3008 = vunpack.c.h.b16 %v2867
        %v3009 = vunpack.c.l.b16 %v2868
        %v3010 = vunpack.c.h.b16 %v2868
        %v3011 = vunpack.c.l.b16 %v2869
        %v3012 = vunpack.c.h.b16 %v2869
        %v3013 = vunpack.c.l.b16 %v2870
        %v3014 = vunpack.c.h.b16 %v2870
        %v3015 = vunpack.c.l.b16 %v2871
        %v3016 = vunpack.c.h.b16 %v2871
        %v3017 = vunpack.c.l.b16 %v2872
        %v3018 = vunpack.c.h.b16 %v2872
        %v3019 = vunpack.c.l.b16 %v2873
        %v3020 = vunpack.c.h.b16 %v2873
        %v3021 = vunpack.c.l.b16 %v2874
        %v3022 = vunpack.c.h.b16 %v2874
        %v3023 = vunpack.c.l.b16 %v2875
        %v3024 = vunpack.c.h.b16 %v2875
        %v3025 = vunpack.c.l.b16 %v2876
        %v3026 = vunpack.c.h.b16 %v2876
        %v3027 = vunpack.c.l.b16 %v2877
        %v3028 = vunpack.c.h.b16 %v2877
        %v3029 = vunpack.c.l.b16 %v2878
        %v3030 = vunpack.c.h.b16 %v2878
        %v3031 = vunpack.c.l.b16 %v2879
        %v3032 = vunpack.c.h.b16 %v2879
        %v3033 = vunpack.c.l.b16 %v2880
        %v3034 = vunpack.c.h.b16 %v2880
        %v3035 = vunpack.c.l.b16 %v2881
        %v3036 = vunpack.c.h.b16 %v2881
        %v3037 = vunpack.c.l.b16 %v2882
        %v3038 = vunpack.c.h.b16 %v2882
        %v3039 = vunpack.c.l.b16 %v2883
        %v3040 = vunpack.c.h.b16 %v2883
        %v3041 = vunpack.c.l.b16 %v2884
        %v3042 = vunpack.c.h.b16 %v2884
        %v3043 = vunpack.c.l.b16 %v2885
        %v3044 = vunpack.c.h.b16 %v2885
        %v3045 = vunpack.c.l.b16 %v2886
        %v3046 = vunpack.c.h.b16 %v2886
        %v3047 = vunpack.c.l.b16 %v2887
        %v3048 = vunpack.c.h.b16 %v2887
        %v3049 = vunpack.c.l.b16 %v2888
        %v3050 = vunpack.c.h.b16 %v2888
        %v3051 = vunpack.c.l.b16 %v2889
        %v3052 = vunpack.c.h.b16 %v2889
        %v3053 = vunpack.c.l.b16 %v2890
        %v3054 = vunpack.c.h.b16 %v2890
        %v3055 = vunpack.c.l.b16 %v2891
        %v3056 = vunpack.c.h.b16 %v2891
        %v3057 = vunpack.c.l.b16 %v2892
        %v3058 = vunpack.c.h.b16 %v2892
        %v3059 = vunpack.c.l.b16 %v2893
        %v3060 = vunpack.c.h.b16 %v2893
        %v3061 = vunpack.c.l.b16 %v2894
        %v3062 = vunpack.c.h.b16 %v2894
        %v3063 = vunpack.c.l.b16 %v2895
        %v3064 = vunpack.c.h.b16 %v2895
        %v3065 = vunpack.c.l.b16 %v2896
        %v3066 = vunpack.c.h.b16 %v2896
        %v3067 = vunpack.c.l.b16 %v2897
        %v3068 = vunpack.c.h.b16 %v2897
        %v3069 = vunpack.c.l.b16 %v2898
        %v3070 = vunpack.c.h.b16 %v2898
        %v3071 = vunpack.c.l.b16 %v2899
        %v3072 = vunpack.c.h.b16 %v2899
        %v3073 = vunpack.c.l.b16 %v2900
        %v3074 = vunpack.c.h.b16 %v2900
        %v3075 = vunpack.c.l.b16 %v2901
        %v3076 = vunpack.c.h.b16 %v2901
        %v3077 = vunpack.c.l.b16 %v2902
        %v3078 = vunpack.c.h.b16 %v2902
        %v3079 = vunpack.c.l.b16 %v2903
        %v3080 = vunpack.c.h.b16 %v2903
        %v3081 = vunpack.c.l.b16 %v2904
        %v3082 = vunpack.c.h.b16 %v2904
        %v3083 = vunpack.c.l.b16 %v2905
        %v3084 = vunpack.c.h.b16 %v2905
        %v3085 = vunpack.c.l.b16 %v2906
        %v3086 = vunpack.c.h.b16 %v2906
        %v3087 = vunpack.c.l.b16 %v2907
        %v3088 = vunpack.c.h.b16 %v2907
        %v3089 = vunpack.c.l.b16 %v2908
        %v3090 = vunpack.c.h.b16 %v2908
        %v3091 = vunpack.c.l.b16 %v2909
        %v3092 = vunpack.c.h.b16 %v2909
        %v3093 = vunpack.c.l.b16 %v2910
        %v3094 = vunpack.c.h.b16 %v2910
        %v3095 = vunpack.c.l.b16 %v2911
        %v3096 = vunpack.c.h.b16 %v2911
        %v3097 = vunpack.c.l.b16 %v2912
        %v3098 = vunpack.c.h.b16 %v2912
        %v3099 = vunpack.c.l.b16 %v2913
        %v3100 = vunpack.c.h.b16 %v2913
        %v3101 = vunpack.c.l.b16 %v2914
        %v3102 = vunpack.c.h.b16 %v2914
        %v3103 = vunpack.c.l.b16 %v2915
        %v3104 = vunpack.c.h.b16 %v2915
        %v3105 = vunpack.c.l.b16 %v2916
        %v3106 = vunpack.c.h.b16 %v2916
        %v3107 = vunpack.c.l.b16 %v2917
        %v3108 = vunpack.c.h.b16 %v2917
        %v3109 = vunpack.c.l.b16 %v2918
        %v3110 = vunpack.c.h.b16 %v2918
        %v3111 = vunpack.c.l.b16 %v2919
        %v3112 = vunpack.c.h.b16 %v2919
        %v3113 = vunpack.c.l.b16 %v2920
        %v3114 = vunpack.c.h.b16 %v2920
        %v3115 = vunpack.c.l.b16 %v2921
        %v3116 = vunpack.c.h.b16 %v2921
        %v3117 = vunpack.c.l.b16 %v2922
        %v3118 = vunpack.c.h.b16 %v2922
        %v3119 = vunpack.c.l.b16 %v2923
        %v3120 = vunpack.c.h.b16 %v2923
        %v3121 = vunpack.c.l.b16 %v2924
        %v3122 = vunpack.c.h.b16 %v2924
        %v3123 = vunpack.c.l.b16 %v2925
        %v3124 = vunpack.c.h.b16 %v2925
        %v3125 = vunpack.c.l.b16 %v2926
        %v3126 = vunpack.c.h.b16 %v2926
        %v3127 = vunpack.c.l.b16 %v2927
        %v3128 = vunpack.c.h.b16 %v2927
        %v3129 = vunpack.c.l.b16 %v2928
        %v3130 = vunpack.c.h.b16 %v2928
        %v3131 = vunpack.c.l.b16 %v2929
        %v3132 = vunpack.c.h.b16 %v2929
        %v3133 = vunpack.c.l.b16 %v2930
        %v3134 = vunpack.c.h.b16 %v2930
        %v3135 = vpack.c.b16 %v3009, %v3007
        %v3136 = vpack.c.b16 %v3010, %v3008
        %v3137 = vpack.c.b16 %v3013, %v3011
        %v3138 = vpack.c.b16 %v3014, %v3012
        %v3139 = vpack.c.b16 %v3017, %v3015
        %v3140 = vpack.c.b16 %v3018, %v3016
        %v3141 = vpack.c.b16 %v3021, %v3019
        %v3142 = vpack.c.b16 %v3022, %v3020
        %v3143 = vpack.c.b16 %v3025, %v3023
        %v3144 = vpack.c.b16 %v3026, %v3024
        %v3145 = vpack.c.b16 %v3029, %v3027
        %v3146 = vpack.c.b16 %v3030, %v3028
        %v3147 = vpack.c.b16 %v3033, %v3031
        %v3148 = vpack.c.b16 %v3034, %v3032
        %v3149 = vpack.c.b16 %v3037, %v3035
        %v3150 = vpack.c.b16 %v3038, %v3036
        %v3151 = vpack.c.b16 %v3041, %v3039
        %v3152 = vpack.c.b16 %v3042, %v3040
        %v3153 = vpack.c.b16 %v3045, %v3043
        %v3154 = vpack.c.b16 %v3046, %v3044
        %v3155 = vpack.c.b16 %v3049, %v3047
        %v3156 = vpack.c.b16 %v3050, %v3048
        %v3157 = vpack.c.b16 %v3053, %v3051
        %v3158 = vpack.c.b16 %v3054, %v3052
        %v3159 = vpack.c.b16 %v3057, %v3055
        %v3160 = vpack.c.b16 %v3058, %v3056
        %v3161 = vpack.c.b16 %v3061, %v3059
        %v3162 = vpack.c.b16 %v3062, %v3060
        %v3163 = vpack.c.b16 %v3065, %v3063
        %v3164 = vpack.c.b16 %v3066, %v3064
        %v3165 = vpack.c.b16 %v3069, %v3067
        %v3166 = vpack.c.b16 %v3070, %v3068
        %v3167 = vpack.c.b16 %v3073, %v3071
        %v3168 = vpack.c.b16 %v3074, %v3072
        %v3169 = vpack.c.b16 %v3077, %v3075
        %v3170 = vpack.c.b16 %v3078, %v3076
        %v3171 = vpack.c.b16 %v3081, %v3079
        %v3172 = vpack.c.b16 %v3082, %v3080
        %v3173 = vpack.c.b16 %v3085, %v3083
        %v3174 = vpack.c.b16 %v3086, %v3084
        %v3175 = vpack.c.b16 %v3089, %v3087
        %v3176 = vpack.c.b16 %v3090, %v3088
        %v3177 = vpack.c.b16 %v3093, %v3091
        %v3178 = vpack.c.b16 %v3094, %v3092
        %v3179 = vpack.c.b16 %v3097, %v3095
        %v3180 = vpack.c.b16 %v3098, %v3096
        %v3181 = vpack.c.b16 %v3101, %v3099
        %v3182 = vpack.c.b16 %v3102, %v3100
        %v3183 = vpack.c.b16 %v3105, %v3103
        %v3184 = vpack.c.b16 %v3106, %v3104
        %v3185 = vpack.c.b16 %v3109, %v3107
        %v3186 = vpack.c.b16 %v3110, %v3108
        %v3187 = vpack.c.b16 %v3113, %v3111
        %v3188 = vpack.c.b16 %v3114, %v3112
        %v3189 = vpack.c.b16 %v3117, %v3115
        %v3190 = vpack.c.b16 %v3118, %v3116
        %v3191 = vpack.c.b16 %v3121, %v3119
        %v3192 = vpack.c.b16 %v3122, %v3120
        %v3193 = vpack.c.b16 %v3125, %v3123
        %v3194 = vpack.c.b16 %v3126, %v3124
        %v3195 = vpack.c.b16 %v3129, %v3127
        %v3196 = vpack.c.b16 %v3130, %v3128
        %v3197 = vpack.c.b16 %v3133, %v3131
        %v3198 = vpack.c.b16 %v3134, %v3132
        %3263 = vmatprep.subr.bf16.mxu0 %v3136
        %3264 = vmatpush1.bf16.msra.mxu0 %v3135
        %3265 = vmatprep.subr.bf16.mxu0 %v3138
        %3266 = vmatpush1.bf16.msra.mxu0 %v3137
        %3267 = vmatprep.subr.bf16.mxu0 %v3140
        %3268 = vmatpush1.bf16.msra.mxu0 %v3139
        %3269 = vmatprep.subr.bf16.mxu0 %v3142
        %3270 = vmatpush1.bf16.msra.mxu0 %v3141
        %3271 = vmatprep.subr.bf16.mxu0 %v3144
        %3272 = vmatpush1.bf16.msra.mxu0 %v3143
        %3273 = vmatprep.subr.bf16.mxu0 %v3146
        %3274 = vmatpush1.bf16.msra.mxu0 %v3145
        %3275 = vmatprep.subr.bf16.mxu0 %v3148
        %3276 = vmatpush1.bf16.msra.mxu0 %v3147
        %3277 = vmatprep.subr.bf16.mxu0 %v3150
        %3278 = vmatpush1.bf16.msra.mxu0 %v3149
        %3279 = vmatprep.subr.bf16.mxu0 %v3152
        %3280 = vmatpush1.bf16.msra.mxu0 %v3151
        %3281 = vmatprep.subr.bf16.mxu0 %v3154
        %3282 = vmatpush1.bf16.msra.mxu0 %v3153
        %3283 = vmatprep.subr.bf16.mxu0 %v3156
        %3284 = vmatpush1.bf16.msra.mxu0 %v3155
        %3285 = vmatprep.subr.bf16.mxu0 %v3158
        %3286 = vmatpush1.bf16.msra.mxu0 %v3157
        %3287 = vmatprep.subr.bf16.mxu0 %v3160
        %3288 = vmatpush1.bf16.msra.mxu0 %v3159
        %3289 = vmatprep.subr.bf16.mxu0 %v3162
        %3290 = vmatpush1.bf16.msra.mxu0 %v3161
        %3291 = vmatprep.subr.bf16.mxu0 %v3164
        %3292 = vmatpush1.bf16.msra.mxu0 %v3163
        %3293 = vmatprep.subr.bf16.mxu0 %v3166
        %3294 = vmatpush1.bf16.msra.mxu0 %v3165
        %3295 = vmatprep.mubr.bf16.mxu0 %v2140
        %3296 = vmatmul.mubr.bf16.gmra.mrb[0].mxu0 %v2139
        %v3297 = vpop.f32.mrb[0].mxu0
        %v3298 = vadd.f32 %v2936, %v3297
        %v3299 = vpop.f32.mrb[0].mxu0
        %v3300 = vadd.f32 %v2940, %v3299
        %v3301 = vpop.f32.mrb[0].mxu0
        %v3302 = vadd.f32 %v2936, %v3301
        %v3303 = vpop.f32.mrb[0].mxu0
        %v3304 = vadd.f32 %v2940, %v3303
        %3305 = vmatprep.mubr.bf16.mxu0 %v2144
        %3306 = vmatmul.mubr.bf16.gmra.mrb[0].mxu0 %v2143
        %v3307 = vpop.f32.mrb[0].mxu0
        %v3308 = vadd.f32 %v2936, %v3307
        %v3309 = vpop.f32.mrb[0].mxu0
        %v3310 = vadd.f32 %v2940, %v3309
        %v3311 = vpop.f32.mrb[0].mxu0
        %v3312 = vadd.f32 %v2936, %v3311
        %v3313 = vpop.f32.mrb[0].mxu0
        %v3314 = vadd.f32 %v2940, %v3313
        %3315 = vmatprep.mubr.bf16.mxu0 %v2148
        %3316 = vmatmul.mubr.bf16.gmra.mrb[0].mxu0 %v2147
        %v3317 = vpop.f32.mrb[0].mxu0
        %v3318 = vadd.f32 %v2936, %v3317
        %v3319 = vpop.f32.mrb[0].mxu0
        %v3320 = vadd.f32 %v2940, %v3319
        %v3321 = vpop.f32.mrb[0].mxu0
        %v3322 = vadd.f32 %v2936, %v3321
        %v3323 = vpop.f32.mrb[0].mxu0
        %v3324 = vadd.f32 %v2940, %v3323
        %3325 = vmatprep.mubr.bf16.mxu0 %v2152
        %3326 = vmatmul.mubr.bf16.gmra.mrb[0].mxu0 %v2151
        %v3327 = vpop.f32.mrb[0].mxu0
        %v3328 = vadd.f32 %v2936, %v3327
        %v3329 = vpop.f32.mrb[0].mxu0
        %v3330 = vadd.f32 %v2940, %v3329
        %v3331 = vpop.f32.mrb[0].mxu0
        %v3332 = vadd.f32 %v2936, %v3331
        %v3333 = vpop.f32.mrb[0].mxu0
        %v3334 = vadd.f32 %v2940, %v3333
        %3335 = vmatprep.mubr.bf16.mxu0 %v2156
        %3336 = vmatmul.mubr.bf16.gmra.mrb[0].mxu0 %v2155
        %v3337 = vpop.f32.mrb[0].mxu0
        %v3338 = vadd.f32 %v2936, %v3337
        %v3339 = vpop.f32.mrb[0].mxu0
        %v3340 = vadd.f32 %v2940, %v3339
        %v3341 = vpop.f32.mrb[0].mxu0
        %v3342 = vadd.f32 %v2936, %v3341
        %v3343 = vpop.f32.mrb[0].mxu0
        %v3344 = vadd.f32 %v2940, %v3343
        %3345 = vmatprep.mubr.bf16.mxu0 %v2160
        %3346 = vmatmul.mubr.bf16.gmra.mrb[0].mxu0 %v2159
        %v3347 = vpop.f32.mrb[0].mxu0
        %v3348 = vadd.f32 %v2936, %v3347
        %v3349 = vpop.f32.mrb[0].mxu0
        %v3350 = vadd.f32 %v2940, %v3349
        %v3351 = vpop.f32.mrb[0].mxu0
        %v3352 = vadd.f32 %v2936, %v3351
        %v3353 = vpop.f32.mrb[0].mxu0
        %v3354 = vadd.f32 %v2940, %v3353
        %3355 = vmatprep.mubr.bf16.mxu0 %v2164
        %3356 = vmatmul.mubr.bf16.gmra.mrb[0].mxu0 %v2163
        %v3357 = vpop.f32.mrb[0].mxu0
        %v3358 = vadd.f32 %v2936, %v3357
        %v3359 = vpop.f32.mrb[0].mxu0
        %v3360 = vadd.f32 %v2940, %v3359
        %v3361 = vpop.f32.mrb[0].mxu0
        %v3362 = vadd.f32 %v2936, %v3361
        %v3363 = vpop.f32.mrb[0].mxu0
        %v3364 = vadd.f32 %v2940, %v3363
        %3365 = vmatprep.mubr.bf16.mxu0 %v2168
        %3366 = vmatmul.mubr.bf16.gmra.mrb[0].mxu0 %v2167
        %v3367 = vpop.f32.mrb[0].mxu0
        %v3368 = vadd.f32 %v2936, %v3367
        %v3369 = vpop.f32.mrb[0].mxu0
        %v3370 = vadd.f32 %v2940, %v3369
        %v3371 = vpop.f32.mrb[0].mxu0
        %v3372 = vadd.f32 %v2936, %v3371
        %v3373 = vpop.f32.mrb[0].mxu0
        %v3374 = vadd.f32 %v2940, %v3373
        %3375 = vdwg.mxu0
        %3376 = vmatprep.subr.bf16.mxu0 %v3168
        %3377 = vmatpush1.bf16.msra.mxu0 %v3167
        %3378 = vmatprep.subr.bf16.mxu0 %v3170
        %3379 = vmatpush1.bf16.msra.mxu0 %v3169
        %3380 = vmatprep.subr.bf16.mxu0 %v3172
        %3381 = vmatpush1.bf16.msra.mxu0 %v3171
        %3382 = vmatprep.subr.bf16.mxu0 %v3174
        %3383 = vmatpush1.bf16.msra.mxu0 %v3173
        %3384 = vmatprep.subr.bf16.mxu0 %v3176
        %3385 = vmatpush1.bf16.msra.mxu0 %v3175
        %3386 = vmatprep.subr.bf16.mxu0 %v3178
        %3387 = vmatpush1.bf16.msra.mxu0 %v3177
        %3388 = vmatprep.subr.bf16.mxu0 %v3180
        %3389 = vmatpush1.bf16.msra.mxu0 %v3179
        %3390 = vmatprep.subr.bf16.mxu0 %v3182
        %3391 = vmatpush1.bf16.msra.mxu0 %v3181
        %3392 = vmatprep.subr.bf16.mxu0 %v3184
        %3393 = vmatpush1.bf16.msra.mxu0 %v3183
        %3394 = vmatprep.subr.bf16.mxu0 %v3186
        %3395 = vmatpush1.bf16.msra.mxu0 %v3185
        %3396 = vmatprep.subr.bf16.mxu0 %v3188
        %3397 = vmatpush1.bf16.msra.mxu0 %v3187
        %3398 = vmatprep.subr.bf16.mxu0 %v3190
        %3399 = vmatpush1.bf16.msra.mxu0 %v3189
        %3400 = vmatprep.subr.bf16.mxu0 %v3192
        %3401 = vmatpush1.bf16.msra.mxu0 %v3191
        %3402 = vmatprep.subr.bf16.mxu0 %v3194
        %3403 = vmatpush1.bf16.msra.mxu0 %v3193
        %3404 = vmatprep.subr.bf16.mxu0 %v3196
        %3405 = vmatpush1.bf16.msra.mxu0 %v3195
        %3406 = vmatprep.subr.bf16.mxu0 %v3198
        %3407 = vmatpush1.bf16.msra.mxu0 %v3197
        %3408 = vmatprep.mubr.bf16.mxu0 %v2142
        %3409 = vmatmul.mubr.bf16.gmra.mrb[0].mxu0 %v2141
        %v3410 = vpop.f32.mrb[0].mxu0
        %v3411 = vadd.f32 %v3298, %v3410
        %v3412 = vpop.f32.mrb[0].mxu0
        %v3413 = vadd.f32 %v3300, %v3412
        %v3414 = vpop.f32.mrb[0].mxu0
        %v3415 = vadd.f32 %v3302, %v3414
        %v3416 = vpop.f32.mrb[0].mxu0
        %v3417 = vadd.f32 %v3304, %v3416
        %3418 = vmatprep.mubr.bf16.mxu0 %v2146
        %3419 = vmatmul.mubr.bf16.gmra.mrb[0].mxu0 %v2145
        %v3420 = vpop.f32.mrb[0].mxu0
        %v3421 = vadd.f32 %v3308, %v3420
        %v3422 = vpop.f32.mrb[0].mxu0
        %v3423 = vadd.f32 %v3310, %v3422
        %v3424 = vpop.f32.mrb[0].mxu0
        %v3425 = vadd.f32 %v3312, %v3424
        %v3426 = vpop.f32.mrb[0].mxu0
        %v3427 = vadd.f32 %v3314, %v3426
        %3428 = vmatprep.mubr.bf16.mxu0 %v2150
        %3429 = vmatmul.mubr.bf16.gmra.mrb[0].mxu0 %v2149
        %v3430 = vpop.f32.mrb[0].mxu0
        %v3431 = vadd.f32 %v3318, %v3430
        %v3432 = vpop.f32.mrb[0].mxu0
        %v3433 = vadd.f32 %v3320, %v3432
        %v3434 = vpop.f32.mrb[0].mxu0
        %v3435 = vadd.f32 %v3322, %v3434
        %v3436 = vpop.f32.mrb[0].mxu0
        %v3437 = vadd.f32 %v3324, %v3436
        %3438 = vmatprep.mubr.bf16.mxu0 %v2154
        %3439 = vmatmul.mubr.bf16.gmra.mrb[0].mxu0 %v2153
        %v3440 = vpop.f32.mrb[0].mxu0
        %v3441 = vadd.f32 %v3328, %v3440
        %v3442 = vpop.f32.mrb[0].mxu0
        %v3443 = vadd.f32 %v3330, %v3442
        %v3444 = vpop.f32.mrb[0].mxu0
        %v3445 = vadd.f32 %v3332, %v3444
        %v3446 = vpop.f32.mrb[0].mxu0
        %v3447 = vadd.f32 %v3334, %v3446
        %3448 = vmatprep.mubr.bf16.mxu0 %v2158
        %3449 = vmatmul.mubr.bf16.gmra.mrb[0].mxu0 %v2157
        %v3450 = vpop.f32.mrb[0].mxu0
        %v3451 = vadd.f32 %v3338, %v3450
        %v3452 = vpop.f32.mrb[0].mxu0
        %v3453 = vadd.f32 %v3340, %v3452
        %v3454 = vpop.f32.mrb[0].mxu0
        %v3455 = vadd.f32 %v3342, %v3454
        %v3456 = vpop.f32.mrb[0].mxu0
        %v3457 = vadd.f32 %v3344, %v3456
        %3458 = vmatprep.mubr.bf16.mxu0 %v2162
        %3459 = vmatmul.mubr.bf16.gmra.mrb[0].mxu0 %v2161
        %v3460 = vpop.f32.mrb[0].mxu0
        %v3461 = vadd.f32 %v3348, %v3460
        %v3462 = vpop.f32.mrb[0].mxu0
        %v3463 = vadd.f32 %v3350, %v3462
        %v3464 = vpop.f32.mrb[0].mxu0
        %v3465 = vadd.f32 %v3352, %v3464
        %v3466 = vpop.f32.mrb[0].mxu0
        %v3467 = vadd.f32 %v3354, %v3466
        %3468 = vmatprep.mubr.bf16.mxu0 %v2166
        %3469 = vmatmul.mubr.bf16.gmra.mrb[0].mxu0 %v2165
        %v3470 = vpop.f32.mrb[0].mxu0
        %v3471 = vadd.f32 %v3358, %v3470
        %v3472 = vpop.f32.mrb[0].mxu0
        %v3473 = vadd.f32 %v3360, %v3472
        %v3474 = vpop.f32.mrb[0].mxu0
        %v3475 = vadd.f32 %v3362, %v3474
        %v3476 = vpop.f32.mrb[0].mxu0
        %v3477 = vadd.f32 %v3364, %v3476
        %3478 = vmatprep.mubr.bf16.mxu0 %v2170
        %3479 = vmatmul.mubr.bf16.gmra.mrb[0].mxu0 %v2169
        %v3480 = vpop.f32.mrb[0].mxu0
        %v3481 = vadd.f32 %v3368, %v3480
        %v3482 = vpop.f32.mrb[0].mxu0
        %v3483 = vadd.f32 %v3370, %v3482
        %v3484 = vpop.f32.mrb[0].mxu0
        %v3485 = vadd.f32 %v3372, %v3484
        %v3486 = vpop.f32.mrb[0].mxu0
        %v3487 = vadd.f32 %v3374, %v3486
        %3488 = vdwg.mxu0
        %v3489 = vmax.f32 %v3411, 0.0
        %v3490 = vmax.f32 %v3413, 0.0
        %v3491 = vmax.f32 %v3415, 0.0
        %v3492 = vmax.f32 %v3417, 0.0
        %v3493 = vmax.f32 %v3421, 0.0
        %v3494 = vmax.f32 %v3423, 0.0
        %v3495 = vmax.f32 %v3425, 0.0
        %v3496 = vmax.f32 %v3427, 0.0
        %v3497 = vmax.f32 %v3431, 0.0
        %v3498 = vmax.f32 %v3433, 0.0
        %v3499 = vmax.f32 %v3435, 0.0
        %v3500 = vmax.f32 %v3437, 0.0
        %v3501 = vmax.f32 %v3441, 0.0
        %v3502 = vmax.f32 %v3443, 0.0
        %v3503 = vmax.f32 %v3445, 0.0
        %v3504 = vmax.f32 %v3447, 0.0
        %v3505 = vmax.f32 %v3451, 0.0
        %v3506 = vmax.f32 %v3453, 0.0
        %v3507 = vmax.f32 %v3455, 0.0
        %v3508 = vmax.f32 %v3457, 0.0
        %v3509 = vmax.f32 %v3461, 0.0
        %v3510 = vmax.f32 %v3463, 0.0
        %v3511 = vmax.f32 %v3465, 0.0
        %v3512 = vmax.f32 %v3467, 0.0
        %v3513 = vmax.f32 %v3471, 0.0
        %v3514 = vmax.f32 %v3473, 0.0
        %v3515 = vmax.f32 %v3475, 0.0
        %v3516 = vmax.f32 %v3477, 0.0
        %v3517 = vmax.f32 %v3481, 0.0
        %v3518 = vmax.f32 %v3483, 0.0
        %v3519 = vmax.f32 %v3485, 0.0
        %v3520 = vmax.f32 %v3487, 0.0
        %v3521 = vmax.f32 %v3489, %v3493
        %v3522 = vmax.f32 %v3491, %v3495
        %v3523 = vmax.f32 %v3521, %v3497
        %v3524 = vmax.f32 %v3522, %v3499
        %v3525 = vmax.f32 %v3523, %v3501
        %v3526 = vmax.f32 %v3524, %v3503
        %v3527 = vmax.f32 %v3525, %v3505
        %v3528 = vmax.f32 %v3526, %v3507
        %v3529 = vmax.f32 %v3527, %v3509
        %v3530 = vmax.f32 %v3528, %v3511
        %v3531 = vmax.f32 %v3529, %v3513
        %v3532 = vmax.f32 %v3530, %v3515
        %v3533 = vmax.f32 %v3531, %v3517
        %v3534 = vmax.f32 %v3532, %v3519
        %v3535 = vmax.f32 %v3533, %v3534
        %v3536 = vrot.slane %v3535, 4
        %v3537 = vmax.f32 %v3535, %v3536
        %v3538 = vrot.slane %v3537, 2
        %v3539 = vmax.f32 %v3537, %v3538
        %v3540 = vrot.slane %v3539, 1
        %v3541 = vmax.f32 %v3539, %v3540
        %v3542 = vmax.f32 %v3490, %v3494
        %v3543 = vmax.f32 %v3492, %v3496
        %v3544 = vmax.f32 %v3542, %v3498
        %v3545 = vmax.f32 %v3543, %v3500
        %v3546 = vmax.f32 %v3544, %v3502
        %v3547 = vmax.f32 %v3545, %v3504
        %v3548 = vmax.f32 %v3546, %v3506
        %v3549 = vmax.f32 %v3547, %v3508
        %v3550 = vmax.f32 %v3548, %v3510
        %v3551 = vmax.f32 %v3549, %v3512
        %v3552 = vmax.f32 %v3550, %v3514
        %v3553 = vmax.f32 %v3551, %v3516
        %v3554 = vmax.f32 %v3552, %v3518
        %v3555 = vmax.f32 %v3553, %v3520
        %v3556 = vmax.f32 %v3554, %v3555
        %v3557 = vrot.slane %v3556, 4
        %v3558 = vmax.f32 %v3556, %v3557
        %v3559 = vrot.slane %v3558, 2
        %v3560 = vmax.f32 %v3558, %v3559
        %v3561 = vrot.slane %v3560, 1
        %v3562 = vmax.f32 %v3560, %v3561
        %v3563 = vld [vmem:[#allocation2 + $0x10] sm:$0xff]
        %v3564 = vld [vmem:[#allocation2 + $0x30] sm:$0xff]
        %v3565 = vld [vmem:[#allocation2 + $0x50] sm:$0xff]
        %v3566 = vld [vmem:[#allocation2 + $0x70] sm:$0xff]
        %v3567 = vld [vmem:[#allocation2 + $0x90] sm:$0xff]
        %v3568 = vld [vmem:[#allocation2 + $0xb0] sm:$0xff]
        %v3569 = vld [vmem:[#allocation2 + $0xd0] sm:$0xff]
        %v3570 = vld [vmem:[#allocation2 + $0xf0] sm:$0xff]
        %v3571 = vld [vmem:[#allocation2 + $0x110] sm:$0xff]
        %v3572 = vld [vmem:[#allocation2 + $0x130] sm:$0xff]
        %v3573 = vld [vmem:[#allocation2 + $0x150] sm:$0xff]
        %v3574 = vld [vmem:[#allocation2 + $0x170] sm:$0xff]
        %v3575 = vld [vmem:[#allocation2 + $0x190] sm:$0xff]
        %v3576 = vld [vmem:[#allocation2 + $0x1b0] sm:$0xff]
        %v3577 = vld [vmem:[#allocation2 + $0x1d0] sm:$0xff]
        %v3578 = vld [vmem:[#allocation2 + $0x1f0] sm:$0xff]
        %v3579 = vld [vmem:[#allocation2 + $0x210] sm:$0xff]
        %v3580 = vld [vmem:[#allocation2 + $0x230] sm:$0xff]
        %v3581 = vld [vmem:[#allocation2 + $0x250] sm:$0xff]
        %v3582 = vld [vmem:[#allocation2 + $0x270] sm:$0xff]
        %v3583 = vld [vmem:[#allocation2 + $0x290] sm:$0xff]
        %v3584 = vld [vmem:[#allocation2 + $0x2b0] sm:$0xff]
        %v3585 = vld [vmem:[#allocation2 + $0x2d0] sm:$0xff]
        %v3586 = vld [vmem:[#allocation2 + $0x2f0] sm:$0xff]
        %v3587 = vld [vmem:[#allocation2 + $0x310] sm:$0xff]
        %v3588 = vld [vmem:[#allocation2 + $0x330] sm:$0xff]
        %v3589 = vld [vmem:[#allocation2 + $0x350] sm:$0xff]
        %v3590 = vld [vmem:[#allocation2 + $0x370] sm:$0xff]
        %v3591 = vld [vmem:[#allocation2 + $0x390] sm:$0xff]
        %v3592 = vld [vmem:[#allocation2 + $0x3b0] sm:$0xff]
        %v3593 = vld [vmem:[#allocation2 + $0x3d0] sm:$0xff]
        %v3594 = vld [vmem:[#allocation2 + $0x3f0] sm:$0xff]
        %v3595 = vld [vmem:[#allocation2 + $0x410] sm:$0xff]
        %v3596 = vld [vmem:[#allocation2 + $0x430] sm:$0xff]
        %v3597 = vld [vmem:[#allocation2 + $0x450] sm:$0xff]
        %v3598 = vld [vmem:[#allocation2 + $0x470] sm:$0xff]
        %v3599 = vld [vmem:[#allocation2 + $0x490] sm:$0xff]
        %v3600 = vld [vmem:[#allocation2 + $0x4b0] sm:$0xff]
        %v3601 = vld [vmem:[#allocation2 + $0x4d0] sm:$0xff]
        %v3602 = vld [vmem:[#allocation2 + $0x4f0] sm:$0xff]
        %v3603 = vld [vmem:[#allocation2 + $0x510] sm:$0xff]
        %v3604 = vld [vmem:[#allocation2 + $0x530] sm:$0xff]
        %v3605 = vld [vmem:[#allocation2 + $0x550] sm:$0xff]
        %v3606 = vld [vmem:[#allocation2 + $0x570] sm:$0xff]
        %v3607 = vld [vmem:[#allocation2 + $0x590] sm:$0xff]
        %v3608 = vld [vmem:[#allocation2 + $0x5b0] sm:$0xff]
        %v3609 = vld [vmem:[#allocation2 + $0x5d0] sm:$0xff]
        %v3610 = vld [vmem:[#allocation2 + $0x5f0] sm:$0xff]
        %v3611 = vld [vmem:[#allocation2 + $0x610] sm:$0xff]
        %v3612 = vld [vmem:[#allocation2 + $0x630] sm:$0xff]
        %v3613 = vld [vmem:[#allocation2 + $0x650] sm:$0xff]
        %v3614 = vld [vmem:[#allocation2 + $0x670] sm:$0xff]
        %v3615 = vld [vmem:[#allocation2 + $0x690] sm:$0xff]
        %v3616 = vld [vmem:[#allocation2 + $0x6b0] sm:$0xff]
        %v3617 = vld [vmem:[#allocation2 + $0x6d0] sm:$0xff]
        %v3618 = vld [vmem:[#allocation2 + $0x6f0] sm:$0xff]
        %v3619 = vld [vmem:[#allocation2 + $0x710] sm:$0xff]
        %v3620 = vld [vmem:[#allocation2 + $0x730] sm:$0xff]
        %v3621 = vld [vmem:[#allocation2 + $0x750] sm:$0xff]
        %v3622 = vld [vmem:[#allocation2 + $0x770] sm:$0xff]
        %v3623 = vld [vmem:[#allocation2 + $0x790] sm:$0xff]
        %v3624 = vld [vmem:[#allocation2 + $0x7b0] sm:$0xff]
        %v3625 = vld [vmem:[#allocation2 + $0x7d0] sm:$0xff]
        %v3626 = vld [vmem:[#allocation2 + $0x7f0] sm:$0xff]
        %v3627 = vld [vmem:[%s12 + $0x4] sm:$0x3]
        %v3629 = vlaneseq
        %v3630 = vshrl.u32 %v3629, 7
        %v3631 = vsub.s32 0, %v3630
        %v3632 = vrot.slane %v3627, %v3631
        %v3633 = vlaneseq
        %v3634 = vshrl.u32 %v3633, 7
        %v3635 = vsub.s32 1, %v3634
        %v3636 = vrot.slane %v3627, %v3635
        %v3703 = vunpack.c.l.b16 %v3563
        %v3704 = vunpack.c.h.b16 %v3563
        %v3705 = vunpack.c.l.b16 %v3564
        %v3706 = vunpack.c.h.b16 %v3564
        %v3707 = vunpack.c.l.b16 %v3565
        %v3708 = vunpack.c.h.b16 %v3565
        %v3709 = vunpack.c.l.b16 %v3566
        %v3710 = vunpack.c.h.b16 %v3566
        %v3711 = vunpack.c.l.b16 %v3567
        %v3712 = vunpack.c.h.b16 %v3567
        %v3713 = vunpack.c.l.b16 %v3568
        %v3714 = vunpack.c.h.b16 %v3568
        %v3715 = vunpack.c.l.b16 %v3569
        %v3716 = vunpack.c.h.b16 %v3569
        %v3717 = vunpack.c.l.b16 %v3570
        %v3718 = vunpack.c.h.b16 %v3570
        %v3719 = vunpack.c.l.b16 %v3571
        %v3720 = vunpack.c.h.b16 %v3571
        %v3721 = vunpack.c.l.b16 %v3572
        %v3722 = vunpack.c.h.b16 %v3572
        %v3723 = vunpack.c.l.b16 %v3573
        %v3724 = vunpack.c.h.b16 %v3573
        %v3725 = vunpack.c.l.b16 %v3574
        %v3726 = vunpack.c.h.b16 %v3574
        %v3727 = vunpack.c.l.b16 %v3575
        %v3728 = vunpack.c.h.b16 %v3575
        %v3729 = vunpack.c.l.b16 %v3576
        %v3730 = vunpack.c.h.b16 %v3576
        %v3731 = vunpack.c.l.b16 %v3577
        %v3732 = vunpack.c.h.b16 %v3577
        %v3733 = vunpack.c.l.b16 %v3578
        %v3734 = vunpack.c.h.b16 %v3578
        %v3735 = vunpack.c.l.b16 %v3579
        %v3736 = vunpack.c.h.b16 %v3579
        %v3737 = vunpack.c.l.b16 %v3580
        %v3738 = vunpack.c.h.b16 %v3580
        %v3739 = vunpack.c.l.b16 %v3581
        %v3740 = vunpack.c.h.b16 %v3581
        %v3741 = vunpack.c.l.b16 %v3582
        %v3742 = vunpack.c.h.b16 %v3582
        %v3743 = vunpack.c.l.b16 %v3583
        %v3744 = vunpack.c.h.b16 %v3583
        %v3745 = vunpack.c.l.b16 %v3584
        %v3746 = vunpack.c.h.b16 %v3584
        %v3747 = vunpack.c.l.b16 %v3585
        %v3748 = vunpack.c.h.b16 %v3585
        %v3749 = vunpack.c.l.b16 %v3586
        %v3750 = vunpack.c.h.b16 %v3586
        %v3751 = vunpack.c.l.b16 %v3587
        %v3752 = vunpack.c.h.b16 %v3587
        %v3753 = vunpack.c.l.b16 %v3588
        %v3754 = vunpack.c.h.b16 %v3588
        %v3755 = vunpack.c.l.b16 %v3589
        %v3756 = vunpack.c.h.b16 %v3589
        %v3757 = vunpack.c.l.b16 %v3590
        %v3758 = vunpack.c.h.b16 %v3590
        %v3759 = vunpack.c.l.b16 %v3591
        %v3760 = vunpack.c.h.b16 %v3591
        %v3761 = vunpack.c.l.b16 %v3592
        %v3762 = vunpack.c.h.b16 %v3592
        %v3763 = vunpack.c.l.b16 %v3593
        %v3764 = vunpack.c.h.b16 %v3593
        %v3765 = vunpack.c.l.b16 %v3594
        %v3766 = vunpack.c.h.b16 %v3594
        %v3767 = vunpack.c.l.b16 %v3595
        %v3768 = vunpack.c.h.b16 %v3595
        %v3769 = vunpack.c.l.b16 %v3596
        %v3770 = vunpack.c.h.b16 %v3596
        %v3771 = vunpack.c.l.b16 %v3597
        %v3772 = vunpack.c.h.b16 %v3597
        %v3773 = vunpack.c.l.b16 %v3598
        %v3774 = vunpack.c.h.b16 %v3598
        %v3775 = vunpack.c.l.b16 %v3599
        %v3776 = vunpack.c.h.b16 %v3599
        %v3777 = vunpack.c.l.b16 %v3600
        %v3778 = vunpack.c.h.b16 %v3600
        %v3779 = vunpack.c.l.b16 %v3601
        %v3780 = vunpack.c.h.b16 %v3601
        %v3781 = vunpack.c.l.b16 %v3602
        %v3782 = vunpack.c.h.b16 %v3602
        %v3783 = vunpack.c.l.b16 %v3603
        %v3784 = vunpack.c.h.b16 %v3603
        %v3785 = vunpack.c.l.b16 %v3604
        %v3786 = vunpack.c.h.b16 %v3604
        %v3787 = vunpack.c.l.b16 %v3605
        %v3788 = vunpack.c.h.b16 %v3605
        %v3789 = vunpack.c.l.b16 %v3606
        %v3790 = vunpack.c.h.b16 %v3606
        %v3791 = vunpack.c.l.b16 %v3607
        %v3792 = vunpack.c.h.b16 %v3607
        %v3793 = vunpack.c.l.b16 %v3608
        %v3794 = vunpack.c.h.b16 %v3608
        %v3795 = vunpack.c.l.b16 %v3609
        %v3796 = vunpack.c.h.b16 %v3609
        %v3797 = vunpack.c.l.b16 %v3610
        %v3798 = vunpack.c.h.b16 %v3610
        %v3799 = vunpack.c.l.b16 %v3611
        %v3800 = vunpack.c.h.b16 %v3611
        %v3801 = vunpack.c.l.b16 %v3612
        %v3802 = vunpack.c.h.b16 %v3612
        %v3803 = vunpack.c.l.b16 %v3613
        %v3804 = vunpack.c.h.b16 %v3613
        %v3805 = vunpack.c.l.b16 %v3614
        %v3806 = vunpack.c.h.b16 %v3614
        %v3807 = vunpack.c.l.b16 %v3615
        %v3808 = vunpack.c.h.b16 %v3615
        %v3809 = vunpack.c.l.b16 %v3616
        %v3810 = vunpack.c.h.b16 %v3616
        %v3811 = vunpack.c.l.b16 %v3617
        %v3812 = vunpack.c.h.b16 %v3617
        %v3813 = vunpack.c.l.b16 %v3618
        %v3814 = vunpack.c.h.b16 %v3618
        %v3815 = vunpack.c.l.b16 %v3619
        %v3816 = vunpack.c.h.b16 %v3619
        %v3817 = vunpack.c.l.b16 %v3620
        %v3818 = vunpack.c.h.b16 %v3620
        %v3819 = vunpack.c.l.b16 %v3621
        %v3820 = vunpack.c.h.b16 %v3621
        %v3821 = vunpack.c.l.b16 %v3622
        %v3822 = vunpack.c.h.b16 %v3622
        %v3823 = vunpack.c.l.b16 %v3623
        %v3824 = vunpack.c.h.b16 %v3623
        %v3825 = vunpack.c.l.b16 %v3624
        %v3826 = vunpack.c.h.b16 %v3624
        %v3827 = vunpack.c.l.b16 %v3625
        %v3828 = vunpack.c.h.b16 %v3625
        %v3829 = vunpack.c.l.b16 %v3626
        %v3830 = vunpack.c.h.b16 %v3626
        %v3831 = vpack.c.b16 %v3705, %v3703
        %v3832 = vpack.c.b16 %v3706, %v3704
        %v3833 = vpack.c.b16 %v3709, %v3707
        %v3834 = vpack.c.b16 %v3710, %v3708
        %v3835 = vpack.c.b16 %v3713, %v3711
        %v3836 = vpack.c.b16 %v3714, %v3712
        %v3837 = vpack.c.b16 %v3717, %v3715
        %v3838 = vpack.c.b16 %v3718, %v3716
        %v3839 = vpack.c.b16 %v3721, %v3719
        %v3840 = vpack.c.b16 %v3722, %v3720
        %v3841 = vpack.c.b16 %v3725, %v3723
        %v3842 = vpack.c.b16 %v3726, %v3724
        %v3843 = vpack.c.b16 %v3729, %v3727
        %v3844 = vpack.c.b16 %v3730, %v3728
        %v3845 = vpack.c.b16 %v3733, %v3731
        %v3846 = vpack.c.b16 %v3734, %v3732
        %v3847 = vpack.c.b16 %v3737, %v3735
        %v3848 = vpack.c.b16 %v3738, %v3736
        %v3849 = vpack.c.b16 %v3741, %v3739
        %v3850 = vpack.c.b16 %v3742, %v3740
        %v3851 = vpack.c.b16 %v3745, %v3743
        %v3852 = vpack.c.b16 %v3746, %v3744
        %v3853 = vpack.c.b16 %v3749, %v3747
        %v3854 = vpack.c.b16 %v3750, %v3748
        %v3855 = vpack.c.b16 %v3753, %v3751
        %v3856 = vpack.c.b16 %v3754, %v3752
        %v3857 = vpack.c.b16 %v3757, %v3755
        %v3858 = vpack.c.b16 %v3758, %v3756
        %v3859 = vpack.c.b16 %v3761, %v3759
        %v3860 = vpack.c.b16 %v3762, %v3760
        %v3861 = vpack.c.b16 %v3765, %v3763
        %v3862 = vpack.c.b16 %v3766, %v3764
        %v3863 = vpack.c.b16 %v3769, %v3767
        %v3864 = vpack.c.b16 %v3770, %v3768
        %v3865 = vpack.c.b16 %v3773, %v3771
        %v3866 = vpack.c.b16 %v3774, %v3772
        %v3867 = vpack.c.b16 %v3777, %v3775
        %v3868 = vpack.c.b16 %v3778, %v3776
        %v3869 = vpack.c.b16 %v3781, %v3779
        %v3870 = vpack.c.b16 %v3782, %v3780
        %v3871 = vpack.c.b16 %v3785, %v3783
        %v3872 = vpack.c.b16 %v3786, %v3784
        %v3873 = vpack.c.b16 %v3789, %v3787
        %v3874 = vpack.c.b16 %v3790, %v3788
        %v3875 = vpack.c.b16 %v3793, %v3791
        %v3876 = vpack.c.b16 %v3794, %v3792
        %v3877 = vpack.c.b16 %v3797, %v3795
        %v3878 = vpack.c.b16 %v3798, %v3796
        %v3879 = vpack.c.b16 %v3801, %v3799
        %v3880 = vpack.c.b16 %v3802, %v3800
        %v3881 = vpack.c.b16 %v3805, %v3803
        %v3882 = vpack.c.b16 %v3806, %v3804
        %v3883 = vpack.c.b16 %v3809, %v3807
        %v3884 = vpack.c.b16 %v3810, %v3808
        %v3885 = vpack.c.b16 %v3813, %v3811
        %v3886 = vpack.c.b16 %v3814, %v3812
        %v3887 = vpack.c.b16 %v3817, %v3815
        %v3888 = vpack.c.b16 %v3818, %v3816
        %v3889 = vpack.c.b16 %v3821, %v3819
        %v3890 = vpack.c.b16 %v3822, %v3820
        %v3891 = vpack.c.b16 %v3825, %v3823
        %v3892 = vpack.c.b16 %v3826, %v3824
        %v3893 = vpack.c.b16 %v3829, %v3827
        %v3894 = vpack.c.b16 %v3830, %v3828
        %3959 = vmatprep.subr.bf16.mxu0 %v3832
        %3960 = vmatpush1.bf16.msra.mxu0 %v3831
        %3961 = vmatprep.subr.bf16.mxu0 %v3834
        %3962 = vmatpush1.bf16.msra.mxu0 %v3833
        %3963 = vmatprep.subr.bf16.mxu0 %v3836
        %3964 = vmatpush1.bf16.msra.mxu0 %v3835
        %3965 = vmatprep.subr.bf16.mxu0 %v3838
        %3966 = vmatpush1.bf16.msra.mxu0 %v3837
        %3967 = vmatprep.subr.bf16.mxu0 %v3840
        %3968 = vmatpush1.bf16.msra.mxu0 %v3839
        %3969 = vmatprep.subr.bf16.mxu0 %v3842
        %3970 = vmatpush1.bf16.msra.mxu0 %v3841
        %3971 = vmatprep.subr.bf16.mxu0 %v3844
        %3972 = vmatpush1.bf16.msra.mxu0 %v3843
        %3973 = vmatprep.subr.bf16.mxu0 %v3846
        %3974 = vmatpush1.bf16.msra.mxu0 %v3845
        %3975 = vmatprep.subr.bf16.mxu0 %v3848
        %3976 = vmatpush1.bf16.msra.mxu0 %v3847
        %3977 = vmatprep.subr.bf16.mxu0 %v3850
        %3978 = vmatpush1.bf16.msra.mxu0 %v3849
        %3979 = vmatprep.subr.bf16.mxu0 %v3852
        %3980 = vmatpush1.bf16.msra.mxu0 %v3851
        %3981 = vmatprep.subr.bf16.mxu0 %v3854
        %3982 = vmatpush1.bf16.msra.mxu0 %v3853
        %3983 = vmatprep.subr.bf16.mxu0 %v3856
        %3984 = vmatpush1.bf16.msra.mxu0 %v3855
        %3985 = vmatprep.subr.bf16.mxu0 %v3858
        %3986 = vmatpush1.bf16.msra.mxu0 %v3857
        %3987 = vmatprep.subr.bf16.mxu0 %v3860
        %3988 = vmatpush1.bf16.msra.mxu0 %v3859
        %3989 = vmatprep.subr.bf16.mxu0 %v3862
        %3990 = vmatpush1.bf16.msra.mxu0 %v3861
        %3991 = vmatprep.mubr.bf16.mxu0 %v2140
        %3992 = vmatmul.mubr.bf16.gmra.mrb[0].mxu0 %v2139
        %v3993 = vpop.f32.mrb[0].mxu0
        %v3994 = vadd.f32 %v3632, %v3993
        %v3995 = vpop.f32.mrb[0].mxu0
        %v3996 = vadd.f32 %v3636, %v3995
        %v3997 = vpop.f32.mrb[0].mxu0
        %v3998 = vadd.f32 %v3632, %v3997
        %v3999 = vpop.f32.mrb[0].mxu0
        %v4000 = vadd.f32 %v3636, %v3999
        %4001 = vmatprep.mubr.bf16.mxu0 %v2144
        %4002 = vmatmul.mubr.bf16.gmra.mrb[0].mxu0 %v2143
        %v4003 = vpop.f32.mrb[0].mxu0
        %v4004 = vadd.f32 %v3632, %v4003
        %v4005 = vpop.f32.mrb[0].mxu0
        %v4006 = vadd.f32 %v3636, %v4005
        %v4007 = vpop.f32.mrb[0].mxu0
        %v4008 = vadd.f32 %v3632, %v4007
        %v4009 = vpop.f32.mrb[0].mxu0
        %v4010 = vadd.f32 %v3636, %v4009
        %4011 = vmatprep.mubr.bf16.mxu0 %v2148
        %4012 = vmatmul.mubr.bf16.gmra.mrb[0].mxu0 %v2147
        %v4013 = vpop.f32.mrb[0].mxu0
        %v4014 = vadd.f32 %v3632, %v4013
        %v4015 = vpop.f32.mrb[0].mxu0
        %v4016 = vadd.f32 %v3636, %v4015
        %v4017 = vpop.f32.mrb[0].mxu0
        %v4018 = vadd.f32 %v3632, %v4017
        %v4019 = vpop.f32.mrb[0].mxu0
        %v4020 = vadd.f32 %v3636, %v4019
        %4021 = vmatprep.mubr.bf16.mxu0 %v2152
        %4022 = vmatmul.mubr.bf16.gmra.mrb[0].mxu0 %v2151
        %v4023 = vpop.f32.mrb[0].mxu0
        %v4024 = vadd.f32 %v3632, %v4023
        %v4025 = vpop.f32.mrb[0].mxu0
        %v4026 = vadd.f32 %v3636, %v4025
        %v4027 = vpop.f32.mrb[0].mxu0
        %v4028 = vadd.f32 %v3632, %v4027
        %v4029 = vpop.f32.mrb[0].mxu0
        %v4030 = vadd.f32 %v3636, %v4029
        %4031 = vmatprep.mubr.bf16.mxu0 %v2156
        %4032 = vmatmul.mubr.bf16.gmra.mrb[0].mxu0 %v2155
        %v4033 = vpop.f32.mrb[0].mxu0
        %v4034 = vadd.f32 %v3632, %v4033
        %v4035 = vpop.f32.mrb[0].mxu0
        %v4036 = vadd.f32 %v3636, %v4035
        %v4037 = vpop.f32.mrb[0].mxu0
        %v4038 = vadd.f32 %v3632, %v4037
        %v4039 = vpop.f32.mrb[0].mxu0
        %v4040 = vadd.f32 %v3636, %v4039
        %4041 = vmatprep.mubr.bf16.mxu0 %v2160
        %4042 = vmatmul.mubr.bf16.gmra.mrb[0].mxu0 %v2159
        %v4043 = vpop.f32.mrb[0].mxu0
        %v4044 = vadd.f32 %v3632, %v4043
        %v4045 = vpop.f32.mrb[0].mxu0
        %v4046 = vadd.f32 %v3636, %v4045
        %v4047 = vpop.f32.mrb[0].mxu0
        %v4048 = vadd.f32 %v3632, %v4047
        %v4049 = vpop.f32.mrb[0].mxu0
        %v4050 = vadd.f32 %v3636, %v4049
        %4051 = vmatprep.mubr.bf16.mxu0 %v2164
        %4052 = vmatmul.mubr.bf16.gmra.mrb[0].mxu0 %v2163
        %v4053 = vpop.f32.mrb[0].mxu0
        %v4054 = vadd.f32 %v3632, %v4053
        %v4055 = vpop.f32.mrb[0].mxu0
        %v4056 = vadd.f32 %v3636, %v4055
        %v4057 = vpop.f32.mrb[0].mxu0
        %v4058 = vadd.f32 %v3632, %v4057
        %v4059 = vpop.f32.mrb[0].mxu0
        %v4060 = vadd.f32 %v3636, %v4059
        %4061 = vmatprep.mubr.bf16.mxu0 %v2168
        %4062 = vmatmul.mubr.bf16.gmra.mrb[0].mxu0 %v2167
        %v4063 = vpop.f32.mrb[0].mxu0
        %v4064 = vadd.f32 %v3632, %v4063
        %v4065 = vpop.f32.mrb[0].mxu0
        %v4066 = vadd.f32 %v3636, %v4065
        %v4067 = vpop.f32.mrb[0].mxu0
        %v4068 = vadd.f32 %v3632, %v4067
        %v4069 = vpop.f32.mrb[0].mxu0
        %v4070 = vadd.f32 %v3636, %v4069
        %4071 = vdwg.mxu0
        %4072 = vmatprep.subr.bf16.mxu0 %v3864
        %4073 = vmatpush1.bf16.msra.mxu0 %v3863
        %4074 = vmatprep.subr.bf16.mxu0 %v3866
        %4075 = vmatpush1.bf16.msra.mxu0 %v3865
        %4076 = vmatprep.subr.bf16.mxu0 %v3868
        %4077 = vmatpush1.bf16.msra.mxu0 %v3867
        %4078 = vmatprep.subr.bf16.mxu0 %v3870
        %4079 = vmatpush1.bf16.msra.mxu0 %v3869
        %4080 = vmatprep.subr.bf16.mxu0 %v3872
        %4081 = vmatpush1.bf16.msra.mxu0 %v3871
        %4082 = vmatprep.subr.bf16.mxu0 %v3874
        %4083 = vmatpush1.bf16.msra.mxu0 %v3873
        %4084 = vmatprep.subr.bf16.mxu0 %v3876
        %4085 = vmatpush1.bf16.msra.mxu0 %v3875
        %4086 = vmatprep.subr.bf16.mxu0 %v3878
        %4087 = vmatpush1.bf16.msra.mxu0 %v3877
        %4088 = vmatprep.subr.bf16.mxu0 %v3880
        %4089 = vmatpush1.bf16.msra.mxu0 %v3879
        %4090 = vmatprep.subr.bf16.mxu0 %v3882
        %4091 = vmatpush1.bf16.msra.mxu0 %v3881
        %4092 = vmatprep.subr.bf16.mxu0 %v3884
        %4093 = vmatpush1.bf16.msra.mxu0 %v3883
        %4094 = vmatprep.subr.bf16.mxu0 %v3886
        %4095 = vmatpush1.bf16.msra.mxu0 %v3885
        %4096 = vmatprep.subr.bf16.mxu0 %v3888
        %4097 = vmatpush1.bf16.msra.mxu0 %v3887
        %4098 = vmatprep.subr.bf16.mxu0 %v3890
        %4099 = vmatpush1.bf16.msra.mxu0 %v3889
        %4100 = vmatprep.subr.bf16.mxu0 %v3892
        %4101 = vmatpush1.bf16.msra.mxu0 %v3891
        %4102 = vmatprep.subr.bf16.mxu0 %v3894
        %4103 = vmatpush1.bf16.msra.mxu0 %v3893
        %4104 = vmatprep.mubr.bf16.mxu0 %v2142
        %4105 = vmatmul.mubr.bf16.gmra.mrb[0].mxu0 %v2141
        %v4106 = vpop.f32.mrb[0].mxu0
        %v4107 = vadd.f32 %v3994, %v4106
        %v4108 = vpop.f32.mrb[0].mxu0
        %v4109 = vadd.f32 %v3996, %v4108
        %v4110 = vpop.f32.mrb[0].mxu0
        %v4111 = vadd.f32 %v3998, %v4110
        %v4112 = vpop.f32.mrb[0].mxu0
        %v4113 = vadd.f32 %v4000, %v4112
        %4114 = vmatprep.mubr.bf16.mxu0 %v2146
        %4115 = vmatmul.mubr.bf16.gmra.mrb[0].mxu0 %v2145
        %v4116 = vpop.f32.mrb[0].mxu0
        %v4117 = vadd.f32 %v4004, %v4116
        %v4118 = vpop.f32.mrb[0].mxu0
        %v4119 = vadd.f32 %v4006, %v4118
        %v4120 = vpop.f32.mrb[0].mxu0
        %v4121 = vadd.f32 %v4008, %v4120
        %v4122 = vpop.f32.mrb[0].mxu0
        %v4123 = vadd.f32 %v4010, %v4122
        %4124 = vmatprep.mubr.bf16.mxu0 %v2150
        %4125 = vmatmul.mubr.bf16.gmra.mrb[0].mxu0 %v2149
        %v4126 = vpop.f32.mrb[0].mxu0
        %v4127 = vadd.f32 %v4014, %v4126
        %v4128 = vpop.f32.mrb[0].mxu0
        %v4129 = vadd.f32 %v4016, %v4128
        %v4130 = vpop.f32.mrb[0].mxu0
        %v4131 = vadd.f32 %v4018, %v4130
        %v4132 = vpop.f32.mrb[0].mxu0
        %v4133 = vadd.f32 %v4020, %v4132
        %4134 = vmatprep.mubr.bf16.mxu0 %v2154
        %4135 = vmatmul.mubr.bf16.gmra.mrb[0].mxu0 %v2153
        %v4136 = vpop.f32.mrb[0].mxu0
        %v4137 = vadd.f32 %v4024, %v4136
        %v4138 = vpop.f32.mrb[0].mxu0
        %v4139 = vadd.f32 %v4026, %v4138
        %v4140 = vpop.f32.mrb[0].mxu0
        %v4141 = vadd.f32 %v4028, %v4140
        %v4142 = vpop.f32.mrb[0].mxu0
        %v4143 = vadd.f32 %v4030, %v4142
        %4144 = vmatprep.mubr.bf16.mxu0 %v2158
        %4145 = vmatmul.mubr.bf16.gmra.mrb[0].mxu0 %v2157
        %v4146 = vpop.f32.mrb[0].mxu0
        %v4147 = vadd.f32 %v4034, %v4146
        %v4148 = vpop.f32.mrb[0].mxu0
        %v4149 = vadd.f32 %v4036, %v4148
        %v4150 = vpop.f32.mrb[0].mxu0
        %v4151 = vadd.f32 %v4038, %v4150
        %v4152 = vpop.f32.mrb[0].mxu0
        %v4153 = vadd.f32 %v4040, %v4152
        %4154 = vmatprep.mubr.bf16.mxu0 %v2162
        %4155 = vmatmul.mubr.bf16.gmra.mrb[0].mxu0 %v2161
        %v4156 = vpop.f32.mrb[0].mxu0
        %v4157 = vadd.f32 %v4044, %v4156
        %v4158 = vpop.f32.mrb[0].mxu0
        %v4159 = vadd.f32 %v4046, %v4158
        %v4160 = vpop.f32.mrb[0].mxu0
        %v4161 = vadd.f32 %v4048, %v4160
        %v4162 = vpop.f32.mrb[0].mxu0
        %v4163 = vadd.f32 %v4050, %v4162
        %4164 = vmatprep.mubr.bf16.mxu0 %v2166
        %4165 = vmatmul.mubr.bf16.gmra.mrb[0].mxu0 %v2165
        %v4166 = vpop.f32.mrb[0].mxu0
        %v4167 = vadd.f32 %v4054, %v4166
        %v4168 = vpop.f32.mrb[0].mxu0
        %v4169 = vadd.f32 %v4056, %v4168
        %v4170 = vpop.f32.mrb[0].mxu0
        %v4171 = vadd.f32 %v4058, %v4170
        %v4172 = vpop.f32.mrb[0].mxu0
        %v4173 = vadd.f32 %v4060, %v4172
        %4174 = vmatprep.mubr.bf16.mxu0 %v2170
        %4175 = vmatmul.mubr.bf16.gmra.mrb[0].mxu0 %v2169
        %v4176 = vpop.f32.mrb[0].mxu0
        %v4177 = vadd.f32 %v4064, %v4176
        %v4178 = vpop.f32.mrb[0].mxu0
        %v4179 = vadd.f32 %v4066, %v4178
        %v4180 = vpop.f32.mrb[0].mxu0
        %v4181 = vadd.f32 %v4068, %v4180
        %v4182 = vpop.f32.mrb[0].mxu0
        %v4183 = vadd.f32 %v4070, %v4182
        %4184 = vdwg.mxu0
        %v4185 = vmax.f32 %v4107, 0.0
        %v4186 = vmax.f32 %v4109, 0.0
        %v4187 = vmax.f32 %v4111, 0.0
        %v4188 = vmax.f32 %v4113, 0.0
        %v4189 = vmax.f32 %v4117, 0.0
        %v4190 = vmax.f32 %v4119, 0.0
        %v4191 = vmax.f32 %v4121, 0.0
        %v4192 = vmax.f32 %v4123, 0.0
        %v4193 = vmax.f32 %v4127, 0.0
        %v4194 = vmax.f32 %v4129, 0.0
        %v4195 = vmax.f32 %v4131, 0.0
        %v4196 = vmax.f32 %v4133, 0.0
        %v4197 = vmax.f32 %v4137, 0.0
        %v4198 = vmax.f32 %v4139, 0.0
        %v4199 = vmax.f32 %v4141, 0.0
        %v4200 = vmax.f32 %v4143, 0.0
        %v4201 = vmax.f32 %v4147, 0.0
        %v4202 = vmax.f32 %v4149, 0.0
        %v4203 = vmax.f32 %v4151, 0.0
        %v4204 = vmax.f32 %v4153, 0.0
        %v4205 = vmax.f32 %v4157, 0.0
        %v4206 = vmax.f32 %v4159, 0.0
        %v4207 = vmax.f32 %v4161, 0.0
        %v4208 = vmax.f32 %v4163, 0.0
        %v4209 = vmax.f32 %v4167, 0.0
        %v4210 = vmax.f32 %v4169, 0.0
        %v4211 = vmax.f32 %v4171, 0.0
        %v4212 = vmax.f32 %v4173, 0.0
        %v4213 = vmax.f32 %v4177, 0.0
        %v4214 = vmax.f32 %v4179, 0.0
        %v4215 = vmax.f32 %v4181, 0.0
        %v4216 = vmax.f32 %v4183, 0.0
        %v4217 = vmax.f32 %v4185, %v4189
        %v4218 = vmax.f32 %v4187, %v4191
        %v4219 = vmax.f32 %v4217, %v4193
        %v4220 = vmax.f32 %v4218, %v4195
        %v4221 = vmax.f32 %v4219, %v4197
        %v4222 = vmax.f32 %v4220, %v4199
        %v4223 = vmax.f32 %v4221, %v4201
        %v4224 = vmax.f32 %v4222, %v4203
        %v4225 = vmax.f32 %v4223, %v4205
        %v4226 = vmax.f32 %v4224, %v4207
        %v4227 = vmax.f32 %v4225, %v4209
        %v4228 = vmax.f32 %v4226, %v4211
        %v4229 = vmax.f32 %v4227, %v4213
        %v4230 = vmax.f32 %v4228, %v4215
        %v4231 = vmax.f32 %v4229, %v4230
        %v4232 = vrot.slane %v4231, 4
        %v4233 = vmax.f32 %v4231, %v4232
        %v4234 = vrot.slane %v4233, 2
        %v4235 = vmax.f32 %v4233, %v4234
        %v4236 = vrot.slane %v4235, 1
        %v4237 = vmax.f32 %v4235, %v4236
        %v4238 = vmax.f32 %v4186, %v4190
        %v4239 = vmax.f32 %v4188, %v4192
        %v4240 = vmax.f32 %v4238, %v4194
        %v4241 = vmax.f32 %v4239, %v4196
        %v4242 = vmax.f32 %v4240, %v4198
        %v4243 = vmax.f32 %v4241, %v4200
        %v4244 = vmax.f32 %v4242, %v4202
        %v4245 = vmax.f32 %v4243, %v4204
        %v4246 = vmax.f32 %v4244, %v4206
        %v4247 = vmax.f32 %v4245, %v4208
        %v4248 = vmax.f32 %v4246, %v4210
        %v4249 = vmax.f32 %v4247, %v4212
        %v4250 = vmax.f32 %v4248, %v4214
        %v4251 = vmax.f32 %v4249, %v4216
        %v4252 = vmax.f32 %v4250, %v4251
        %v4253 = vrot.slane %v4252, 4
        %v4254 = vmax.f32 %v4252, %v4253
        %v4255 = vrot.slane %v4254, 2
        %v4256 = vmax.f32 %v4254, %v4255
        %v4257 = vrot.slane %v4256, 1
        %v4258 = vmax.f32 %v4256, %v4257
        %v4259 = vld [vmem:[#allocation2 + $0x18] sm:$0xff]
        %v4260 = vld [vmem:[#allocation2 + $0x38] sm:$0xff]
        %v4261 = vld [vmem:[#allocation2 + $0x58] sm:$0xff]
        %v4262 = vld [vmem:[#allocation2 + $0x78] sm:$0xff]
        %v4263 = vld [vmem:[#allocation2 + $0x98] sm:$0xff]
        %v4264 = vld [vmem:[#allocation2 + $0xb8] sm:$0xff]
        %v4265 = vld [vmem:[#allocation2 + $0xd8] sm:$0xff]
        %v4266 = vld [vmem:[#allocation2 + $0xf8] sm:$0xff]
        %v4267 = vld [vmem:[#allocation2 + $0x118] sm:$0xff]
        %v4268 = vld [vmem:[#allocation2 + $0x138] sm:$0xff]
        %v4269 = vld [vmem:[#allocation2 + $0x158] sm:$0xff]
        %v4270 = vld [vmem:[#allocation2 + $0x178] sm:$0xff]
        %v4271 = vld [vmem:[#allocation2 + $0x198] sm:$0xff]
        %v4272 = vld [vmem:[#allocation2 + $0x1b8] sm:$0xff]
        %v4273 = vld [vmem:[#allocation2 + $0x1d8] sm:$0xff]
        %v4274 = vld [vmem:[#allocation2 + $0x1f8] sm:$0xff]
        %v4275 = vld [vmem:[#allocation2 + $0x218] sm:$0xff]
        %v4276 = vld [vmem:[#allocation2 + $0x238] sm:$0xff]
        %v4277 = vld [vmem:[#allocation2 + $0x258] sm:$0xff]
        %v4278 = vld [vmem:[#allocation2 + $0x278] sm:$0xff]
        %v4279 = vld [vmem:[#allocation2 + $0x298] sm:$0xff]
        %v4280 = vld [vmem:[#allocation2 + $0x2b8] sm:$0xff]
        %v4281 = vld [vmem:[#allocation2 + $0x2d8] sm:$0xff]
        %v4282 = vld [vmem:[#allocation2 + $0x2f8] sm:$0xff]
        %v4283 = vld [vmem:[#allocation2 + $0x318] sm:$0xff]
        %v4284 = vld [vmem:[#allocation2 + $0x338] sm:$0xff]
        %v4285 = vld [vmem:[#allocation2 + $0x358] sm:$0xff]
        %v4286 = vld [vmem:[#allocation2 + $0x378] sm:$0xff]
        %v4287 = vld [vmem:[#allocation2 + $0x398] sm:$0xff]
        %v4288 = vld [vmem:[#allocation2 + $0x3b8] sm:$0xff]
        %v4289 = vld [vmem:[#allocation2 + $0x3d8] sm:$0xff]
        %v4290 = vld [vmem:[#allocation2 + $0x3f8] sm:$0xff]
        %v4291 = vld [vmem:[#allocation2 + $0x418] sm:$0xff]
        %v4292 = vld [vmem:[#allocation2 + $0x438] sm:$0xff]
        %v4293 = vld [vmem:[#allocation2 + $0x458] sm:$0xff]
        %v4294 = vld [vmem:[#allocation2 + $0x478] sm:$0xff]
        %v4295 = vld [vmem:[#allocation2 + $0x498] sm:$0xff]
        %v4296 = vld [vmem:[#allocation2 + $0x4b8] sm:$0xff]
        %v4297 = vld [vmem:[#allocation2 + $0x4d8] sm:$0xff]
        %v4298 = vld [vmem:[#allocation2 + $0x4f8] sm:$0xff]
        %v4299 = vld [vmem:[#allocation2 + $0x518] sm:$0xff]
        %v4300 = vld [vmem:[#allocation2 + $0x538] sm:$0xff]
        %v4301 = vld [vmem:[#allocation2 + $0x558] sm:$0xff]
        %v4302 = vld [vmem:[#allocation2 + $0x578] sm:$0xff]
        %v4303 = vld [vmem:[#allocation2 + $0x598] sm:$0xff]
        %v4304 = vld [vmem:[#allocation2 + $0x5b8] sm:$0xff]
        %v4305 = vld [vmem:[#allocation2 + $0x5d8] sm:$0xff]
        %v4306 = vld [vmem:[#allocation2 + $0x5f8] sm:$0xff]
        %v4307 = vld [vmem:[#allocation2 + $0x618] sm:$0xff]
        %v4308 = vld [vmem:[#allocation2 + $0x638] sm:$0xff]
        %v4309 = vld [vmem:[#allocation2 + $0x658] sm:$0xff]
        %v4310 = vld [vmem:[#allocation2 + $0x678] sm:$0xff]
        %v4311 = vld [vmem:[#allocation2 + $0x698] sm:$0xff]
        %v4312 = vld [vmem:[#allocation2 + $0x6b8] sm:$0xff]
        %v4313 = vld [vmem:[#allocation2 + $0x6d8] sm:$0xff]
        %v4314 = vld [vmem:[#allocation2 + $0x6f8] sm:$0xff]
        %v4315 = vld [vmem:[#allocation2 + $0x718] sm:$0xff]
        %v4316 = vld [vmem:[#allocation2 + $0x738] sm:$0xff]
        %v4317 = vld [vmem:[#allocation2 + $0x758] sm:$0xff]
        %v4318 = vld [vmem:[#allocation2 + $0x778] sm:$0xff]
        %v4319 = vld [vmem:[#allocation2 + $0x798] sm:$0xff]
        %v4320 = vld [vmem:[#allocation2 + $0x7b8] sm:$0xff]
        %v4321 = vld [vmem:[#allocation2 + $0x7d8] sm:$0xff]
        %v4322 = vld [vmem:[#allocation2 + $0x7f8] sm:$0xff]
        %v4323 = vld [vmem:[%s12 + $0x6] sm:$0x3]
        %v4325 = vlaneseq
        %v4326 = vshrl.u32 %v4325, 7
        %v4327 = vsub.s32 0, %v4326
        %v4328 = vrot.slane %v4323, %v4327
        %v4329 = vlaneseq
        %v4330 = vshrl.u32 %v4329, 7
        %v4331 = vsub.s32 1, %v4330
        %v4332 = vrot.slane %v4323, %v4331
        %v4399 = vunpack.c.l.b16 %v4259
        %v4400 = vunpack.c.h.b16 %v4259
        %v4401 = vunpack.c.l.b16 %v4260
        %v4402 = vunpack.c.h.b16 %v4260
        %v4403 = vunpack.c.l.b16 %v4261
        %v4404 = vunpack.c.h.b16 %v4261
        %v4405 = vunpack.c.l.b16 %v4262
        %v4406 = vunpack.c.h.b16 %v4262
        %v4407 = vunpack.c.l.b16 %v4263
        %v4408 = vunpack.c.h.b16 %v4263
        %v4409 = vunpack.c.l.b16 %v4264
        %v4410 = vunpack.c.h.b16 %v4264
        %v4411 = vunpack.c.l.b16 %v4265
        %v4412 = vunpack.c.h.b16 %v4265
        %v4413 = vunpack.c.l.b16 %v4266
        %v4414 = vunpack.c.h.b16 %v4266
        %v4415 = vunpack.c.l.b16 %v4267
        %v4416 = vunpack.c.h.b16 %v4267
        %v4417 = vunpack.c.l.b16 %v4268
        %v4418 = vunpack.c.h.b16 %v4268
        %v4419 = vunpack.c.l.b16 %v4269
        %v4420 = vunpack.c.h.b16 %v4269
        %v4421 = vunpack.c.l.b16 %v4270
        %v4422 = vunpack.c.h.b16 %v4270
        %v4423 = vunpack.c.l.b16 %v4271
        %v4424 = vunpack.c.h.b16 %v4271
        %v4425 = vunpack.c.l.b16 %v4272
        %v4426 = vunpack.c.h.b16 %v4272
        %v4427 = vunpack.c.l.b16 %v4273
        %v4428 = vunpack.c.h.b16 %v4273
        %v4429 = vunpack.c.l.b16 %v4274
        %v4430 = vunpack.c.h.b16 %v4274
        %v4431 = vunpack.c.l.b16 %v4275
        %v4432 = vunpack.c.h.b16 %v4275
        %v4433 = vunpack.c.l.b16 %v4276
        %v4434 = vunpack.c.h.b16 %v4276
        %v4435 = vunpack.c.l.b16 %v4277
        %v4436 = vunpack.c.h.b16 %v4277
        %v4437 = vunpack.c.l.b16 %v4278
        %v4438 = vunpack.c.h.b16 %v4278
        %v4439 = vunpack.c.l.b16 %v4279
        %v4440 = vunpack.c.h.b16 %v4279
        %v4441 = vunpack.c.l.b16 %v4280
        %v4442 = vunpack.c.h.b16 %v4280
        %v4443 = vunpack.c.l.b16 %v4281
        %v4444 = vunpack.c.h.b16 %v4281
        %v4445 = vunpack.c.l.b16 %v4282
        %v4446 = vunpack.c.h.b16 %v4282
        %v4447 = vunpack.c.l.b16 %v4283
        %v4448 = vunpack.c.h.b16 %v4283
        %v4449 = vunpack.c.l.b16 %v4284
        %v4450 = vunpack.c.h.b16 %v4284
        %v4451 = vunpack.c.l.b16 %v4285
        %v4452 = vunpack.c.h.b16 %v4285
        %v4453 = vunpack.c.l.b16 %v4286
        %v4454 = vunpack.c.h.b16 %v4286
        %v4455 = vunpack.c.l.b16 %v4287
        %v4456 = vunpack.c.h.b16 %v4287
        %v4457 = vunpack.c.l.b16 %v4288
        %v4458 = vunpack.c.h.b16 %v4288
        %v4459 = vunpack.c.l.b16 %v4289
        %v4460 = vunpack.c.h.b16 %v4289
        %v4461 = vunpack.c.l.b16 %v4290
        %v4462 = vunpack.c.h.b16 %v4290
        %v4463 = vunpack.c.l.b16 %v4291
        %v4464 = vunpack.c.h.b16 %v4291
        %v4465 = vunpack.c.l.b16 %v4292
        %v4466 = vunpack.c.h.b16 %v4292
        %v4467 = vunpack.c.l.b16 %v4293
        %v4468 = vunpack.c.h.b16 %v4293
        %v4469 = vunpack.c.l.b16 %v4294
        %v4470 = vunpack.c.h.b16 %v4294
        %v4471 = vunpack.c.l.b16 %v4295
        %v4472 = vunpack.c.h.b16 %v4295
        %v4473 = vunpack.c.l.b16 %v4296
        %v4474 = vunpack.c.h.b16 %v4296
        %v4475 = vunpack.c.l.b16 %v4297
        %v4476 = vunpack.c.h.b16 %v4297
        %v4477 = vunpack.c.l.b16 %v4298
        %v4478 = vunpack.c.h.b16 %v4298
        %v4479 = vunpack.c.l.b16 %v4299
        %v4480 = vunpack.c.h.b16 %v4299
        %v4481 = vunpack.c.l.b16 %v4300
        %v4482 = vunpack.c.h.b16 %v4300
        %v4483 = vunpack.c.l.b16 %v4301
        %v4484 = vunpack.c.h.b16 %v4301
        %v4485 = vunpack.c.l.b16 %v4302
        %v4486 = vunpack.c.h.b16 %v4302
        %v4487 = vunpack.c.l.b16 %v4303
        %v4488 = vunpack.c.h.b16 %v4303
        %v4489 = vunpack.c.l.b16 %v4304
        %v4490 = vunpack.c.h.b16 %v4304
        %v4491 = vunpack.c.l.b16 %v4305
        %v4492 = vunpack.c.h.b16 %v4305
        %v4493 = vunpack.c.l.b16 %v4306
        %v4494 = vunpack.c.h.b16 %v4306
        %v4495 = vunpack.c.l.b16 %v4307
        %v4496 = vunpack.c.h.b16 %v4307
        %v4497 = vunpack.c.l.b16 %v4308
        %v4498 = vunpack.c.h.b16 %v4308
        %v4499 = vunpack.c.l.b16 %v4309
        %v4500 = vunpack.c.h.b16 %v4309
        %v4501 = vunpack.c.l.b16 %v4310
        %v4502 = vunpack.c.h.b16 %v4310
        %v4503 = vunpack.c.l.b16 %v4311
        %v4504 = vunpack.c.h.b16 %v4311
        %v4505 = vunpack.c.l.b16 %v4312
        %v4506 = vunpack.c.h.b16 %v4312
        %v4507 = vunpack.c.l.b16 %v4313
        %v4508 = vunpack.c.h.b16 %v4313
        %v4509 = vunpack.c.l.b16 %v4314
        %v4510 = vunpack.c.h.b16 %v4314
        %v4511 = vunpack.c.l.b16 %v4315
        %v4512 = vunpack.c.h.b16 %v4315
        %v4513 = vunpack.c.l.b16 %v4316
        %v4514 = vunpack.c.h.b16 %v4316
        %v4515 = vunpack.c.l.b16 %v4317
        %v4516 = vunpack.c.h.b16 %v4317
        %v4517 = vunpack.c.l.b16 %v4318
        %v4518 = vunpack.c.h.b16 %v4318
        %v4519 = vunpack.c.l.b16 %v4319
        %v4520 = vunpack.c.h.b16 %v4319
        %v4521 = vunpack.c.l.b16 %v4320
        %v4522 = vunpack.c.h.b16 %v4320
        %v4523 = vunpack.c.l.b16 %v4321
        %v4524 = vunpack.c.h.b16 %v4321
        %v4525 = vunpack.c.l.b16 %v4322
        %v4526 = vunpack.c.h.b16 %v4322
        %v4527 = vpack.c.b16 %v4401, %v4399
        %v4528 = vpack.c.b16 %v4402, %v4400
        %v4529 = vpack.c.b16 %v4405, %v4403
        %v4530 = vpack.c.b16 %v4406, %v4404
        %v4531 = vpack.c.b16 %v4409, %v4407
        %v4532 = vpack.c.b16 %v4410, %v4408
        %v4533 = vpack.c.b16 %v4413, %v4411
        %v4534 = vpack.c.b16 %v4414, %v4412
        %v4535 = vpack.c.b16 %v4417, %v4415
        %v4536 = vpack.c.b16 %v4418, %v4416
        %v4537 = vpack.c.b16 %v4421, %v4419
        %v4538 = vpack.c.b16 %v4422, %v4420
        %v4539 = vpack.c.b16 %v4425, %v4423
        %v4540 = vpack.c.b16 %v4426, %v4424
        %v4541 = vpack.c.b16 %v4429, %v4427
        %v4542 = vpack.c.b16 %v4430, %v4428
        %v4543 = vpack.c.b16 %v4433, %v4431
        %v4544 = vpack.c.b16 %v4434, %v4432
        %v4545 = vpack.c.b16 %v4437, %v4435
        %v4546 = vpack.c.b16 %v4438, %v4436
        %v4547 = vpack.c.b16 %v4441, %v4439
        %v4548 = vpack.c.b16 %v4442, %v4440
        %v4549 = vpack.c.b16 %v4445, %v4443
        %v4550 = vpack.c.b16 %v4446, %v4444
        %v4551 = vpack.c.b16 %v4449, %v4447
        %v4552 = vpack.c.b16 %v4450, %v4448
        %v4553 = vpack.c.b16 %v4453, %v4451
        %v4554 = vpack.c.b16 %v4454, %v4452
        %v4555 = vpack.c.b16 %v4457, %v4455
        %v4556 = vpack.c.b16 %v4458, %v4456
        %v4557 = vpack.c.b16 %v4461, %v4459
        %v4558 = vpack.c.b16 %v4462, %v4460
        %v4559 = vpack.c.b16 %v4465, %v4463
        %v4560 = vpack.c.b16 %v4466, %v4464
        %v4561 = vpack.c.b16 %v4469, %v4467
        %v4562 = vpack.c.b16 %v4470, %v4468
        %v4563 = vpack.c.b16 %v4473, %v4471
        %v4564 = vpack.c.b16 %v4474, %v4472
        %v4565 = vpack.c.b16 %v4477, %v4475
        %v4566 = vpack.c.b16 %v4478, %v4476
        %v4567 = vpack.c.b16 %v4481, %v4479
        %v4568 = vpack.c.b16 %v4482, %v4480
        %v4569 = vpack.c.b16 %v4485, %v4483
        %v4570 = vpack.c.b16 %v4486, %v4484
        %v4571 = vpack.c.b16 %v4489, %v4487
        %v4572 = vpack.c.b16 %v4490, %v4488
        %v4573 = vpack.c.b16 %v4493, %v4491
        %v4574 = vpack.c.b16 %v4494, %v4492
        %v4575 = vpack.c.b16 %v4497, %v4495
        %v4576 = vpack.c.b16 %v4498, %v4496
        %v4577 = vpack.c.b16 %v4501, %v4499
        %v4578 = vpack.c.b16 %v4502, %v4500
        %v4579 = vpack.c.b16 %v4505, %v4503
        %v4580 = vpack.c.b16 %v4506, %v4504
        %v4581 = vpack.c.b16 %v4509, %v4507
        %v4582 = vpack.c.b16 %v4510, %v4508
        %v4583 = vpack.c.b16 %v4513, %v4511
        %v4584 = vpack.c.b16 %v4514, %v4512
        %v4585 = vpack.c.b16 %v4517, %v4515
        %v4586 = vpack.c.b16 %v4518, %v4516
        %v4587 = vpack.c.b16 %v4521, %v4519
        %v4588 = vpack.c.b16 %v4522, %v4520
        %v4589 = vpack.c.b16 %v4525, %v4523
        %v4590 = vpack.c.b16 %v4526, %v4524
        %4655 = vmatprep.subr.bf16.mxu0 %v4528
        %4656 = vmatpush1.bf16.msra.mxu0 %v4527
        %4657 = vmatprep.subr.bf16.mxu0 %v4530
        %4658 = vmatpush1.bf16.msra.mxu0 %v4529
        %4659 = vmatprep.subr.bf16.mxu0 %v4532
        %4660 = vmatpush1.bf16.msra.mxu0 %v4531
        %4661 = vmatprep.subr.bf16.mxu0 %v4534
        %4662 = vmatpush1.bf16.msra.mxu0 %v4533
        %4663 = vmatprep.subr.bf16.mxu0 %v4536
        %4664 = vmatpush1.bf16.msra.mxu0 %v4535
        %4665 = vmatprep.subr.bf16.mxu0 %v4538
        %4666 = vmatpush1.bf16.msra.mxu0 %v4537
        %4667 = vmatprep.subr.bf16.mxu0 %v4540
        %4668 = vmatpush1.bf16.msra.mxu0 %v4539
        %4669 = vmatprep.subr.bf16.mxu0 %v4542
        %4670 = vmatpush1.bf16.msra.mxu0 %v4541
        %4671 = vmatprep.subr.bf16.mxu0 %v4544
        %4672 = vmatpush1.bf16.msra.mxu0 %v4543
        %4673 = vmatprep.subr.bf16.mxu0 %v4546
        %4674 = vmatpush1.bf16.msra.mxu0 %v4545
        %4675 = vmatprep.subr.bf16.mxu0 %v4548
        %4676 = vmatpush1.bf16.msra.mxu0 %v4547
        %4677 = vmatprep.subr.bf16.mxu0 %v4550
        %4678 = vmatpush1.bf16.msra.mxu0 %v4549
        %4679 = vmatprep.subr.bf16.mxu0 %v4552
        %4680 = vmatpush1.bf16.msra.mxu0 %v4551
        %4681 = vmatprep.subr.bf16.mxu0 %v4554
        %4682 = vmatpush1.bf16.msra.mxu0 %v4553
        %4683 = vmatprep.subr.bf16.mxu0 %v4556
        %4684 = vmatpush1.bf16.msra.mxu0 %v4555
        %4685 = vmatprep.subr.bf16.mxu0 %v4558
        %4686 = vmatpush1.bf16.msra.mxu0 %v4557
        %4687 = vmatprep.mubr.bf16.mxu0 %v2140
        %4688 = vmatmul.mubr.bf16.gmra.mrb[0].mxu0 %v2139
        %v4689 = vpop.f32.mrb[0].mxu0
        %v4690 = vadd.f32 %v4328, %v4689
        %v4691 = vpop.f32.mrb[0].mxu0
        %v4692 = vadd.f32 %v4332, %v4691
        %v4693 = vpop.f32.mrb[0].mxu0
        %v4694 = vadd.f32 %v4328, %v4693
        %v4695 = vpop.f32.mrb[0].mxu0
        %v4696 = vadd.f32 %v4332, %v4695
        %4697 = vmatprep.mubr.bf16.mxu0 %v2144
        %4698 = vmatmul.mubr.bf16.gmra.mrb[0].mxu0 %v2143
        %v4699 = vpop.f32.mrb[0].mxu0
        %v4700 = vadd.f32 %v4328, %v4699
        %v4701 = vpop.f32.mrb[0].mxu0
        %v4702 = vadd.f32 %v4332, %v4701
        %v4703 = vpop.f32.mrb[0].mxu0
        %v4704 = vadd.f32 %v4328, %v4703
        %v4705 = vpop.f32.mrb[0].mxu0
        %v4706 = vadd.f32 %v4332, %v4705
        %4707 = vmatprep.mubr.bf16.mxu0 %v2148
        %4708 = vmatmul.mubr.bf16.gmra.mrb[0].mxu0 %v2147
        %v4709 = vpop.f32.mrb[0].mxu0
        %v4710 = vadd.f32 %v4328, %v4709
        %v4711 = vpop.f32.mrb[0].mxu0
        %v4712 = vadd.f32 %v4332, %v4711
        %v4713 = vpop.f32.mrb[0].mxu0
        %v4714 = vadd.f32 %v4328, %v4713
        %v4715 = vpop.f32.mrb[0].mxu0
        %v4716 = vadd.f32 %v4332, %v4715
        %4717 = vmatprep.mubr.bf16.mxu0 %v2152
        %4718 = vmatmul.mubr.bf16.gmra.mrb[0].mxu0 %v2151
        %v4719 = vpop.f32.mrb[0].mxu0
        %v4720 = vadd.f32 %v4328, %v4719
        %v4721 = vpop.f32.mrb[0].mxu0
        %v4722 = vadd.f32 %v4332, %v4721
        %v4723 = vpop.f32.mrb[0].mxu0
        %v4724 = vadd.f32 %v4328, %v4723
        %v4725 = vpop.f32.mrb[0].mxu0
        %v4726 = vadd.f32 %v4332, %v4725
        %4727 = vmatprep.mubr.bf16.mxu0 %v2156
        %4728 = vmatmul.mubr.bf16.gmra.mrb[0].mxu0 %v2155
        %v4729 = vpop.f32.mrb[0].mxu0
        %v4730 = vadd.f32 %v4328, %v4729
        %v4731 = vpop.f32.mrb[0].mxu0
        %v4732 = vadd.f32 %v4332, %v4731
        %v4733 = vpop.f32.mrb[0].mxu0
        %v4734 = vadd.f32 %v4328, %v4733
        %v4735 = vpop.f32.mrb[0].mxu0
        %v4736 = vadd.f32 %v4332, %v4735
        %4737 = vmatprep.mubr.bf16.mxu0 %v2160
        %4738 = vmatmul.mubr.bf16.gmra.mrb[0].mxu0 %v2159
        %v4739 = vpop.f32.mrb[0].mxu0
        %v4740 = vadd.f32 %v4328, %v4739
        %v4741 = vpop.f32.mrb[0].mxu0
        %v4742 = vadd.f32 %v4332, %v4741
        %v4743 = vpop.f32.mrb[0].mxu0
        %v4744 = vadd.f32 %v4328, %v4743
        %v4745 = vpop.f32.mrb[0].mxu0
        %v4746 = vadd.f32 %v4332, %v4745
        %4747 = vmatprep.mubr.bf16.mxu0 %v2164
        %4748 = vmatmul.mubr.bf16.gmra.mrb[0].mxu0 %v2163
        %v4749 = vpop.f32.mrb[0].mxu0
        %v4750 = vadd.f32 %v4328, %v4749
        %v4751 = vpop.f32.mrb[0].mxu0
        %v4752 = vadd.f32 %v4332, %v4751
        %v4753 = vpop.f32.mrb[0].mxu0
        %v4754 = vadd.f32 %v4328, %v4753
        %v4755 = vpop.f32.mrb[0].mxu0
        %v4756 = vadd.f32 %v4332, %v4755
        %4757 = vmatprep.mubr.bf16.mxu0 %v2168
        %4758 = vmatmul.mubr.bf16.gmra.mrb[0].mxu0 %v2167
        %v4759 = vpop.f32.mrb[0].mxu0
        %v4760 = vadd.f32 %v4328, %v4759
        %v4761 = vpop.f32.mrb[0].mxu0
        %v4762 = vadd.f32 %v4332, %v4761
        %v4763 = vpop.f32.mrb[0].mxu0
        %v4764 = vadd.f32 %v4328, %v4763
        %v4765 = vpop.f32.mrb[0].mxu0
        %v4766 = vadd.f32 %v4332, %v4765
        %4767 = vdwg.mxu0
        %4768 = vmatprep.subr.bf16.mxu0 %v4560
        %4769 = vmatpush1.bf16.msra.mxu0 %v4559
        %4770 = vmatprep.subr.bf16.mxu0 %v4562
        %4771 = vmatpush1.bf16.msra.mxu0 %v4561
        %4772 = vmatprep.subr.bf16.mxu0 %v4564
        %4773 = vmatpush1.bf16.msra.mxu0 %v4563
        %4774 = vmatprep.subr.bf16.mxu0 %v4566
        %4775 = vmatpush1.bf16.msra.mxu0 %v4565
        %4776 = vmatprep.subr.bf16.mxu0 %v4568
        %4777 = vmatpush1.bf16.msra.mxu0 %v4567
        %4778 = vmatprep.subr.bf16.mxu0 %v4570
        %4779 = vmatpush1.bf16.msra.mxu0 %v4569
        %4780 = vmatprep.subr.bf16.mxu0 %v4572
        %4781 = vmatpush1.bf16.msra.mxu0 %v4571
        %4782 = vmatprep.subr.bf16.mxu0 %v4574
        %4783 = vmatpush1.bf16.msra.mxu0 %v4573
        %4784 = vmatprep.subr.bf16.mxu0 %v4576
        %4785 = vmatpush1.bf16.msra.mxu0 %v4575
        %4786 = vmatprep.subr.bf16.mxu0 %v4578
        %4787 = vmatpush1.bf16.msra.mxu0 %v4577
        %4788 = vmatprep.subr.bf16.mxu0 %v4580
        %4789 = vmatpush1.bf16.msra.mxu0 %v4579
        %4790 = vmatprep.subr.bf16.mxu0 %v4582
        %4791 = vmatpush1.bf16.msra.mxu0 %v4581
        %4792 = vmatprep.subr.bf16.mxu0 %v4584
        %4793 = vmatpush1.bf16.msra.mxu0 %v4583
        %4794 = vmatprep.subr.bf16.mxu0 %v4586
        %4795 = vmatpush1.bf16.msra.mxu0 %v4585
        %4796 = vmatprep.subr.bf16.mxu0 %v4588
        %4797 = vmatpush1.bf16.msra.mxu0 %v4587
        %4798 = vmatprep.subr.bf16.mxu0 %v4590
        %4799 = vmatpush1.bf16.msra.mxu0 %v4589
        %4800 = vmatprep.mubr.bf16.mxu0 %v2142
        %4801 = vmatmul.mubr.bf16.gmra.mrb[0].mxu0 %v2141
        %v4802 = vpop.f32.mrb[0].mxu0
        %v4803 = vadd.f32 %v4690, %v4802
        %v4804 = vpop.f32.mrb[0].mxu0
        %v4805 = vadd.f32 %v4692, %v4804
        %v4806 = vpop.f32.mrb[0].mxu0
        %v4807 = vadd.f32 %v4694, %v4806
        %v4808 = vpop.f32.mrb[0].mxu0
        %v4809 = vadd.f32 %v4696, %v4808
        %4810 = vmatprep.mubr.bf16.mxu0 %v2146
        %4811 = vmatmul.mubr.bf16.gmra.mrb[0].mxu0 %v2145
        %v4812 = vpop.f32.mrb[0].mxu0
        %v4813 = vadd.f32 %v4700, %v4812
        %v4814 = vpop.f32.mrb[0].mxu0
        %v4815 = vadd.f32 %v4702, %v4814
        %v4816 = vpop.f32.mrb[0].mxu0
        %v4817 = vadd.f32 %v4704, %v4816
        %v4818 = vpop.f32.mrb[0].mxu0
        %v4819 = vadd.f32 %v4706, %v4818
        %4820 = vmatprep.mubr.bf16.mxu0 %v2150
        %4821 = vmatmul.mubr.bf16.gmra.mrb[0].mxu0 %v2149
        %v4822 = vpop.f32.mrb[0].mxu0
        %v4823 = vadd.f32 %v4710, %v4822
        %v4824 = vpop.f32.mrb[0].mxu0
        %v4825 = vadd.f32 %v4712, %v4824
        %v4826 = vpop.f32.mrb[0].mxu0
        %v4827 = vadd.f32 %v4714, %v4826
        %v4828 = vpop.f32.mrb[0].mxu0
        %v4829 = vadd.f32 %v4716, %v4828
        %4830 = vmatprep.mubr.bf16.mxu0 %v2154
        %4831 = vmatmul.mubr.bf16.gmra.mrb[0].mxu0 %v2153
        %v4832 = vpop.f32.mrb[0].mxu0
        %v4833 = vadd.f32 %v4720, %v4832
        %v4834 = vpop.f32.mrb[0].mxu0
        %v4835 = vadd.f32 %v4722, %v4834
        %v4836 = vpop.f32.mrb[0].mxu0
        %v4837 = vadd.f32 %v4724, %v4836
        %v4838 = vpop.f32.mrb[0].mxu0
        %v4839 = vadd.f32 %v4726, %v4838
        %4840 = vmatprep.mubr.bf16.mxu0 %v2158
        %4841 = vmatmul.mubr.bf16.gmra.mrb[0].mxu0 %v2157
        %v4842 = vpop.f32.mrb[0].mxu0
        %v4843 = vadd.f32 %v4730, %v4842
        %v4844 = vpop.f32.mrb[0].mxu0
        %v4845 = vadd.f32 %v4732, %v4844
        %v4846 = vpop.f32.mrb[0].mxu0
        %v4847 = vadd.f32 %v4734, %v4846
        %v4848 = vpop.f32.mrb[0].mxu0
        %v4849 = vadd.f32 %v4736, %v4848
        %4850 = vmatprep.mubr.bf16.mxu0 %v2162
        %4851 = vmatmul.mubr.bf16.gmra.mrb[0].mxu0 %v2161
        %v4852 = vpop.f32.mrb[0].mxu0
        %v4853 = vadd.f32 %v4740, %v4852
        %v4854 = vpop.f32.mrb[0].mxu0
        %v4855 = vadd.f32 %v4742, %v4854
        %v4856 = vpop.f32.mrb[0].mxu0
        %v4857 = vadd.f32 %v4744, %v4856
        %v4858 = vpop.f32.mrb[0].mxu0
        %v4859 = vadd.f32 %v4746, %v4858
        %4860 = vmatprep.mubr.bf16.mxu0 %v2166
        %4861 = vmatmul.mubr.bf16.gmra.mrb[0].mxu0 %v2165
        %v4862 = vpop.f32.mrb[0].mxu0
        %v4863 = vadd.f32 %v4750, %v4862
        %v4864 = vpop.f32.mrb[0].mxu0
        %v4865 = vadd.f32 %v4752, %v4864
        %v4866 = vpop.f32.mrb[0].mxu0
        %v4867 = vadd.f32 %v4754, %v4866
        %v4868 = vpop.f32.mrb[0].mxu0
        %v4869 = vadd.f32 %v4756, %v4868
        %4870 = vmatprep.mubr.bf16.mxu0 %v2170
        %4871 = vmatmul.mubr.bf16.gmra.mrb[0].mxu0 %v2169
        %v4872 = vpop.f32.mrb[0].mxu0
        %v4873 = vadd.f32 %v4760, %v4872
        %v4874 = vpop.f32.mrb[0].mxu0
        %v4875 = vadd.f32 %v4762, %v4874
        %v4876 = vpop.f32.mrb[0].mxu0
        %v4877 = vadd.f32 %v4764, %v4876
        %v4878 = vpop.f32.mrb[0].mxu0
        %v4879 = vadd.f32 %v4766, %v4878
        %4880 = vdwg.mxu0
        %v4881 = vmax.f32 %v4803, 0.0
        %v4882 = vmax.f32 %v4805, 0.0
        %v4883 = vmax.f32 %v4807, 0.0
        %v4884 = vmax.f32 %v4809, 0.0
        %v4885 = vmax.f32 %v4813, 0.0
        %v4886 = vmax.f32 %v4815, 0.0
        %v4887 = vmax.f32 %v4817, 0.0
        %v4888 = vmax.f32 %v4819, 0.0
        %v4889 = vmax.f32 %v4823, 0.0
        %v4890 = vmax.f32 %v4825, 0.0
        %v4891 = vmax.f32 %v4827, 0.0
        %v4892 = vmax.f32 %v4829, 0.0
        %v4893 = vmax.f32 %v4833, 0.0
        %v4894 = vmax.f32 %v4835, 0.0
        %v4895 = vmax.f32 %v4837, 0.0
        %v4896 = vmax.f32 %v4839, 0.0
        %v4897 = vmax.f32 %v4843, 0.0
        %v4898 = vmax.f32 %v4845, 0.0
        %v4899 = vmax.f32 %v4847, 0.0
        %v4900 = vmax.f32 %v4849, 0.0
        %v4901 = vmax.f32 %v4853, 0.0
        %v4902 = vmax.f32 %v4855, 0.0
        %v4903 = vmax.f32 %v4857, 0.0
        %v4904 = vmax.f32 %v4859, 0.0
        %v4905 = vmax.f32 %v4863, 0.0
        %v4906 = vmax.f32 %v4865, 0.0
        %v4907 = vmax.f32 %v4867, 0.0
        %v4908 = vmax.f32 %v4869, 0.0
        %v4909 = vmax.f32 %v4873, 0.0
        %v4910 = vmax.f32 %v4875, 0.0
        %v4911 = vmax.f32 %v4877, 0.0
        %v4912 = vmax.f32 %v4879, 0.0
        %v4913 = vmax.f32 %v4881, %v4885
        %v4914 = vmax.f32 %v4883, %v4887
        %v4915 = vmax.f32 %v4913, %v4889
        %v4916 = vmax.f32 %v4914, %v4891
        %v4917 = vmax.f32 %v4915, %v4893
        %v4918 = vmax.f32 %v4916, %v4895
        %v4919 = vmax.f32 %v4917, %v4897
        %v4920 = vmax.f32 %v4918, %v4899
        %v4921 = vmax.f32 %v4919, %v4901
        %v4922 = vmax.f32 %v4920, %v4903
        %v4923 = vmax.f32 %v4921, %v4905
        %v4924 = vmax.f32 %v4922, %v4907
        %v4925 = vmax.f32 %v4923, %v4909
        %v4926 = vmax.f32 %v4924, %v4911
        %v4927 = vmax.f32 %v4925, %v4926
        %v4928 = vrot.slane %v4927, 4
        %v4929 = vmax.f32 %v4927, %v4928
        %v4930 = vrot.slane %v4929, 2
        %v4931 = vmax.f32 %v4929, %v4930
        %v4932 = vrot.slane %v4931, 1
        %v4933 = vmax.f32 %v4931, %v4932
        %v4934 = vmax.f32 %v4882, %v4886
        %v4935 = vmax.f32 %v4884, %v4888
        %v4936 = vmax.f32 %v4934, %v4890
        %v4937 = vmax.f32 %v4935, %v4892
        %v4938 = vmax.f32 %v4936, %v4894
        %v4939 = vmax.f32 %v4937, %v4896
        %v4940 = vmax.f32 %v4938, %v4898
        %v4941 = vmax.f32 %v4939, %v4900
        %v4942 = vmax.f32 %v4940, %v4902
        %v4943 = vmax.f32 %v4941, %v4904
        %v4944 = vmax.f32 %v4942, %v4906
        %v4945 = vmax.f32 %v4943, %v4908
        %v4946 = vmax.f32 %v4944, %v4910
        %v4947 = vmax.f32 %v4945, %v4912
        %v4948 = vmax.f32 %v4946, %v4947
        %v4949 = vrot.slane %v4948, 4
        %v4950 = vmax.f32 %v4948, %v4949
        %v4951 = vrot.slane %v4950, 2
        %v4952 = vmax.f32 %v4950, %v4951
        %v4953 = vrot.slane %v4952, 1
        %v4954 = vmax.f32 %v4952, %v4953
        %v4957 = vcombine.low %v2845, %v2866
        %v4959 = vunpack.c.l.s4 1966171168
        %v4960 = vunpack.c.0.s8 %v4959
        %v4961 = vlaneseq
        %v4962 = vshrl.u32 %v4961, 7
        %v4963 = vsub.s32 %v4960, %v4962
        %v4964 = vrot.slane %v4957, %v4963
        %v4966 = vunpack.c.l.s4 1966171168
        %v4967 = vunpack.c.0.s8 %v4966
        %v4968 = vlaneseq
        %v4969 = vshrl.u32 %v4968, 7
        %v4970 = vsub.s32 %v4967, %v4969
        %v4971 = vrot.slane %v4964, %v4970
        %v4973 = vlaneseq
        %vm4974 = vcmp.ge.s32.totalorder %v4973, 0
        %vm4975 = vcmp.lt.s32.totalorder %v4973, 256
        %vm4976 = vmand %vm4974, %vm4975
        %4977 = vst.msk [vmem:[%s474] sm:$0x3] %vm4976, %v4971
        %v4980 = vcombine.low %v3541, %v3562
        %v4982 = vunpack.c.l.s4 1966171168
        %v4983 = vunpack.c.0.s8 %v4982
        %v4984 = vlaneseq
        %v4985 = vshrl.u32 %v4984, 7
        %v4986 = vsub.s32 %v4983, %v4985
        %v4987 = vrot.slane %v4980, %v4986
        %v4989 = vunpack.c.l.s4 1966171168
        %v4990 = vunpack.c.0.s8 %v4989
        %v4991 = vlaneseq
        %v4992 = vshrl.u32 %v4991, 7
        %v4993 = vsub.s32 %v4990, %v4992
        %v4994 = vrot.slane %v4987, %v4993
        %4996 = vst.msk [vmem:[%s474 + $0x2] sm:$0x3] %vm4976, %v4994
        %v4999 = vcombine.low %v4237, %v4258
        %v5001 = vunpack.c.l.s4 1966171168
        %v5002 = vunpack.c.0.s8 %v5001
        %v5003 = vlaneseq
        %v5004 = vshrl.u32 %v5003, 7
        %v5005 = vsub.s32 %v5002, %v5004
        %v5006 = vrot.slane %v4999, %v5005
        %v5008 = vunpack.c.l.s4 1966171168
        %v5009 = vunpack.c.0.s8 %v5008
        %v5010 = vlaneseq
        %v5011 = vshrl.u32 %v5010, 7
        %v5012 = vsub.s32 %v5009, %v5011
        %v5013 = vrot.slane %v5006, %v5012
        %5015 = vst.msk [vmem:[%s474 + $0x4] sm:$0x3] %vm4976, %v5013
        %v5018 = vcombine.low %v4933, %v4954
        %v5020 = vunpack.c.l.s4 1966171168
        %v5021 = vunpack.c.0.s8 %v5020
        %v5022 = vlaneseq
        %v5023 = vshrl.u32 %v5022, 7
        %v5024 = vsub.s32 %v5021, %v5023
        %v5025 = vrot.slane %v5018, %v5024
        %v5027 = vunpack.c.l.s4 1966171168
        %v5028 = vunpack.c.0.s8 %v5027
        %v5029 = vlaneseq
        %v5030 = vshrl.u32 %v5029, 7
        %v5031 = vsub.s32 %v5028, %v5030
        %v5032 = vrot.slane %v5025, %v5031
        %5034 = vst.msk [vmem:[%s474 + $0x6] sm:$0x3] %vm4976, %v5032
        %v5039 = vcombine.low %v2075, %v2096
        %v5040 = vcombine.low %v2117, %v2138
        %v5042 = vunpack.c.l.s4 1966171168
        %v5043 = vunpack.c.0.s8 %v5042
        %v5044 = vlaneseq
        %v5045 = vshrl.u32 %v5044, 7
        %v5046 = vsub.s32 %v5043, %v5045
        %v5047 = vrot.slane %v5039, %v5046
        %v5049 = vunpack.c.l.s4 1966171168
        %v5050 = vunpack.c.0.s8 %v5049
        %v5051 = vlaneseq
        %v5052 = vshrl.u32 %v5051, 7
        %v5053 = vsub.s32 %v5050, %v5052
        %v5054 = vrot.slane %v5040, %v5053
        %v5055 = vcombine.low %v5047, %v5054
        %v5057 = vunpack.c.l.s4 1966171168
        %v5058 = vunpack.c.0.s8 %v5057
        %v5059 = vlaneseq
        %v5060 = vshrl.u32 %v5059, 7
        %v5061 = vsub.s32 %v5058, %v5060
        %v5062 = vrot.slane %v5055, %v5061
        %vm5064 = vcmp.lt.s32.totalorder %v4973, 512
        %vm5065 = vmand %vm4974, %vm5064
        %5066 = vst.msk [vmem:[%s474 + $0x8] sm:$0xf] %vm5065, %v5062
        %v5069 = vcombine.low %v1321, %v1342
        %v5071 = vunpack.c.l.s4 1966171168
        %v5072 = vunpack.c.0.s8 %v5071
        %v5073 = vlaneseq
        %v5074 = vshrl.u32 %v5073, 7
        %v5075 = vsub.s32 %v5072, %v5074
        %v5076 = vrot.slane %v5069, %v5075
        %v5078 = vunpack.c.l.s4 1966171168
        %v5079 = vunpack.c.0.s8 %v5078
        %v5080 = vlaneseq
        %v5081 = vshrl.u32 %v5080, 7
        %v5082 = vsub.s32 %v5079, %v5081
        %v5083 = vrot.slane %v5076, %v5082
        %5085 = vst.msk [vmem:[%s474 + $0xc] sm:$0x3] %vm4976, %v5083
        %vm5086 = vcmp.lt.s32.totalorder %v4973, 128
        %vm5087 = vmand %vm4974, %vm5086
        %5088 = vst.msk [vmem:[%s474 + $0xe] sm:$0x1] %vm5087, %v1039
        %p5089 = scmp.lt.s32.totalorder %s29, 1
        %s5090 = scalar_select %p5089, %s29, 1
        %s5091 = smul.addr %s5090, 15
        %s5092 = scalar_lea.vmem %s13, %s5091
        // Predicated region
        $region77: #{convlayer.1} parent=71 // pred_check
          %p5093 = pneg %p335
        $region78: #{convlayer.1} parent=71 // pred_check_branch
          %5095 = sbr.rel (%p5093) target = $region80
        $region79: #{convlayer.1} parent=71 // pred_region
          _
        $region80: #{convlayer.1} parent=71 // pred_fallthru
          _
      $region72: #{convlayer.1} parent=5 // pred_fallthru
        _
      %p5096 = scmp.le.s32.totalorder 2, %s20
      // Predicated region
      $region81: #{convlayer.1} parent=5 // pred_check
        %p5097 = pneg %p5096
      $region82: #{convlayer.1} parent=5 // pred_check_branch
        %5099 = sbr.rel (%p5097) target = $region84
      $region83: #{convlayer.1} parent=5 // pred_region
        %s5100 = ssub.s32 %s20, 2
        // Predicated region
        $region85: #{convlayer.1} parent=83 // pred_check
          %p5101 = pneg %p341
        $region86: #{convlayer.1} parent=83 // pred_check_branch
          %5103 = sbr.rel (%p5101) target = $region88
        $region87: #{convlayer.1} parent=83 // pred_region
          %p5104 = scmp.lt.s32.totalorder %s31, 1
          %s5105 = scalar_select %p5104, %s31, 1
          %s5106 = smul.addr %s5105, 15
          %s5107 = scalar_lea.vmem %s13, %s5106
        $region88: #{convlayer.1} parent=83 // pred_fallthru
          _
      $region84: #{convlayer.1} parent=5 // pred_fallthru
        _
    $region6: #{convlayer.1} parent=1 // loop_footer
      %s24 = sadd.s32 1, %s20
    $region7: #{convlayer.1} parent=1 // loop_footer_branch
      %19 = sbr.rel target = $region3
    $region8: #{convlayer.1} parent=1 // loop_exit
      _
    %5108 = vsyncpa [#allocation3], 1
    %s5109 = scalar_lea.sflag [#allocation3], 1
    %5110 = vsyncpa %s5109, 1

</llo_original>
